<compile_context>
chip_gen: v7x
topology: tpu7x:2x2x1
jax: 0.10.0
libtpu: 0.0.40
codegen_flags: <defaults>
</compile_context>

<pallas_src>
import functools
import math

import numpy as np
import jax
import jax.numpy as jnp
from jax.experimental import pallas as pl
from jax.experimental.pallas import tpu as pltpu


# -----------------------------------------------------------------------------
# small glue helpers (plain JAX)
# -----------------------------------------------------------------------------
def quat_to_rotmat(q):
    """(..., 4) quaternion (w, x, y, z) -> (..., 3, 3) rotation matrix."""
    q = q / jnp.linalg.norm(q, axis=-1, keepdims=True)
    w, x, y, z = q[..., 0], q[..., 1], q[..., 2], q[..., 3]
    r0 = jnp.stack([1 - 2 * (y * y + z * z), 2 * (x * y - w * z), 2 * (x * z + w * y)], -1)
    r1 = jnp.stack([2 * (x * y + w * z), 1 - 2 * (x * x + z * z), 2 * (y * z - w * x)], -1)
    r2 = jnp.stack([2 * (x * z - w * y), 2 * (y * z + w * x), 1 - 2 * (x * x + y * y)], -1)
    return jnp.stack([r0, r1, r2], axis=-2)


def get_covariance(scales, rotmats):
    """Sigma = (R S)(R S)^T with S = diag(scales)."""
    L = rotmats * scales[..., None, :]
    return L @ jnp.swapaxes(L, -1, -2)


def _ceil_to(x, m):
    return -(-x // m) * m


def _is_newer_tpu():
    """True on v6e / v7x (bf16 EUP + 2x256 MXU); False on v5e/older/unknown."""
    try:
        kind = jax.devices()[0].device_kind.lower()
    except Exception:
        return False
    return any(t in kind for t in ("v6", "v7", "7x"))


# -----------------------------------------------------------------------------
# Pallas kernel: dense masked gaussian splat (MXU quadratic form + MXU splat)
# -----------------------------------------------------------------------------
def _voxelize_kernel(tids_ref, cnts_ref, vox_ref, prm_ref, feat_ref, out_ref,
                     *, eps, feat_dim, normalize, matmul_dtype, exp_dtype):
    b = pl.program_id(0)
    vi = pl.program_id(1)
    j = pl.program_id(2)
    nvt = pl.num_programs(1)
    mt = pl.num_programs(2)

    @pl.when(j == 0)
    def _init():
        out_ref[...] = jnp.zeros_like(out_ref)

    # compacted schedule: only the first cnts[b, vi] slots reference real
    # overlapping gaussian tiles; the tail repeats the last valid tile id so
    # its DMAs are skipped and the compute is gated off here.
    @pl.when(j < cnts_ref[b * nvt + vi])
    def _splat():
        vox = vox_ref[...]                                   # (24, TN)
        mono = vox[0:16, :]                                  # (16, TN) monomials (+zero pad)
        ix, iy, iz = vox[16:17, :], vox[17:18, :], vox[18:19, :]

        prm = prm_ref[0]                                     # (TG, 16)

        # log2-density exponent on the MXU; coefficients already carry the
        # -0.5*log2(e) factor and log2(opacity):
        #   lmaha = -log2(e)/2 * (c-mu)^T A (c-mu) + log2(opacity)
        lmaha = jnp.dot(prm, mono, preferred_element_type=jnp.float32)   # (TG, TN)
        dens = jnp.exp2(lmaha.astype(exp_dtype))             # = opac * exp(-0.5*maha)

        # exact axis-aligned box test on integer voxel indices (matches the
        # reference footprint; also zeroes padded / filtered gaussians).
        lox, loy, loz = prm[:, 10:11], prm[:, 11:12], prm[:, 12:13]
        hix, hiy, hiz = prm[:, 13:14], prm[:, 14:15], prm[:, 15:16]
        inside = ((ix >= lox) & (ix <= hix)
                  & (iy >= loy) & (iy <= hiy)
                  & (iz >= loz) & (iz <= hiz))
        dens = jnp.where(inside, dens, 0.0).astype(matmul_dtype)        # (TG, TN)

        # Features + density (ones row) splat in one MXU matmul, f32 accumulation.
        out_ref[0, :, :] = out_ref[0, :, :] + jnp.dot(
            feat_ref[0], dens, preferred_element_type=jnp.float32)      # (F+1, TN)

    if normalize and feat_dim > 0:
        @pl.when(j == mt - 1)
        def _finalize():
            d = jnp.maximum(out_ref[0, feat_dim:feat_dim + 1, :], eps)   # (1, TN)
            inv = pl.reciprocal(d, approx=True)
            inv = inv * (2.0 - d * inv)          # one Newton step, off critical path
            out_ref[0, :feat_dim, :] = out_ref[0, :feat_dim, :] * inv


# -----------------------------------------------------------------------------
# Module wrapper
# -----------------------------------------------------------------------------
class GaussianVoxelizerPallas:
    """Forward-only port of gausstr/models/gaussian_voxelizer.GaussianVoxelizer."""

    _NEG_HALF_LOG2E = -0.5 / math.log(2.0)     # -0.5 * log2(e)

    def __init__(self, vol_range, voxel_size, filter_gaussians=False,
                 opacity_thresh=0.0, covariance_thresh=0.0,
                 voxel_tile=2048, gaussian_tile=None,
                 splat_matmul_dtype=jnp.bfloat16, exp_dtype=None, eps=1e-6):
        self.voxel_size = float(voxel_size)
        self.vol_range = np.asarray(vol_range, np.float32)
        self.filter_gaussians = filter_gaussians
        self.opacity_thresh = float(opacity_thresh)
        self.covariance_thresh = float(covariance_thresh)
        self.splat_matmul_dtype = splat_matmul_dtype
        self.eps = float(eps)

        newer = _is_newer_tpu()
        # TG=256 matches the v6e/v7x 2x256 MXU and halves the gaussian-tile count;
        # keep 128 on v5e (4x128 MXU).  bf16 exponent only where the EUP is bf16.
        self.max_gaussian_tile = int(gaussian_tile) if gaussian_tile else (256 if newer else 128)
        self.exp_dtype = exp_dtype if exp_dtype is not None else (
            jnp.bfloat16 if newer else jnp.float32)

        gs = (self.vol_range[3:] - self.vol_range[:3]) / self.voxel_size
        self.grid_shape = [int(v) for v in gs]                 # matches torch .int()
        X, Y, Z = self.grid_shape
        ii, jj, kk = np.meshgrid(np.arange(X), np.arange(Y), np.arange(Z),
                                 indexing="ij")
        idx = np.stack([ii, jj, kk], axis=-1).astype(np.float32)         # (X,Y,Z,3)
        coords = (idx + 0.5) * self.voxel_size + self.vol_range[:3]      # generate_grid(., 0.5)
        self.grid_coords = jnp.asarray(coords)

        N = X * Y * Z
        self.N = N
        # voxel tile: as close to `voxel_tile` as possible while minimizing padding
        nvt_target = max(1, -(-N // max(128, int(voxel_tile))))
        self.TN = max(128, _ceil_to(-(-N // nvt_target), 128))
        self.Npad = _ceil_to(N, self.TN)
        self.nvt = self.Npad // self.TN
        # NOTE(v7x): with B==1 and nvt==1 only one TensorCore gets work; pass a
        # smaller voxel_tile there so the "parallel" grid axes stay balanced.

        # Static per-voxel monomials + integer indices; coordinates centered on
        # the volume center to avoid f32 cancellation in the expanded form.
        self.vol_center = 0.5 * (self.vol_range[:3] + self.vol_range[3:])
        c = (coords.reshape(-1, 3) - self.vol_center).T                  # (3, N) centered
        ind = idx.reshape(-1, 3).T                                       # (3, N)
        x, y, z = c[0], c[1], c[2]
        vox = np.zeros((24, self.Npad), np.float32)
        vox[0, :N] = x * x
        vox[1, :N] = y * y
        vox[2, :N] = z * z
        vox[3, :N] = x * y
        vox[4, :N] = x * z
        vox[5, :N] = y * z
        vox[6, :N] = x
        vox[7, :N] = y
        vox[8, :N] = z
        vox[9, :] = 1.0
        # rows 10..15 stay zero: they multiply the box-bound columns of params.
        vox[16:19, :] = -1.0                    # padded voxels: never inside any box
        vox[16:19, :N] = ind
        self.voxinfo = jnp.asarray(vox)

        # Per voxel-tile index bounding box (tile-level culling / compaction).
        vox_lo = np.full((self.nvt, 3), 1e9, np.float32)
        vox_hi = np.full((self.nvt, 3), -1.0, np.float32)
        ind_t = ind.T                                                     # (N, 3)
        for t in range(self.nvt):
            s, e = t * self.TN, min((t + 1) * self.TN, N)
            if s < e:
                vox_lo[t] = ind_t[s:e].min(0)
                vox_hi[t] = ind_t[s:e].max(0)
        self.vox_tile_lo = jnp.asarray(vox_lo)
        self.vox_tile_hi = jnp.asarray(vox_hi)

    # ---- gaussian preprocessing (glue) --------------------------------------
    def _pack_params(self, means3d, opacities, covariances, vol_min, vol_max,
                     extra_valid):
        """Pack per-gaussian log2-density quadratic coefficients + clamped voxel box."""
        inv_cov = jnp.linalg.inv(covariances)                             # (...,3,3)
        inv_cov = 0.5 * (inv_cov + jnp.swapaxes(inv_cov, -1, -2))         # symmetrize
        sigma = jnp.sqrt(jnp.diagonal(covariances, axis1=-2, axis2=-1))   # (...,3)
        lo_b = means3d - 3.0 * sigma
        hi_b = means3d + 3.0 * sigma
        # same intersection test as the reference (strict inequalities)
        valid = jnp.all(hi_b > vol_min, axis=-1) & jnp.all(lo_b < vol_max, axis=-1)
        if extra_valid is not None:
            valid = valid & extra_valid
        lo_c = jnp.clip(lo_b, vol_min, vol_max)
        hi_c = jnp.clip(hi_b, vol_min, vol_max)
        lo_i = ((lo_c - vol_min) / self.voxel_size).astype(jnp.int32).astype(jnp.float32)
        hi_i = ((hi_c - vol_min) / self.voxel_size).astype(jnp.int32).astype(jnp.float32)
        lo_i = jnp.where(valid[..., None], lo_i, 1e9)        # invalid -> empty box
        hi_i = jnp.where(valid[..., None], hi_i, -1.0)
        opac = jnp.where(valid, opacities[..., 0], 0.0)

        a00 = inv_cov[..., 0, 0]
        a11 = inv_cov[..., 1, 1]
        a22 = inv_cov[..., 2, 2]
        a01 = inv_cov[..., 0, 1]
        a02 = inv_cov[..., 0, 2]
        a12 = inv_cov[..., 1, 2]
        mu = means3d - jnp.asarray(self.vol_center)           # centered means
        mux, muy, muz = mu[..., 0], mu[..., 1], mu[..., 2]

        # dens = opac * exp(-0.5 * (c-mu)^T A (c-mu)) = 2 ** (s*quad + log2(opac))
        # with s = -0.5*log2(e) folded into every coefficient (kernel uses exp2).
        s = self._NEG_HALF_LOG2E
        c6 = s * (-2.0) * (a00 * mux + a01 * muy + a02 * muz)
        c7 = s * (-2.0) * (a01 * mux + a11 * muy + a12 * muz)
        c8 = s * (-2.0) * (a02 * mux + a12 * muy + a22 * muz)
        c9 = (s * (a00 * mux * mux + a11 * muy * muy + a22 * muz * muz
                   + 2.0 * (a01 * mux * muy + a02 * mux * muz + a12 * muy * muz))
              + jnp.log2(jnp.maximum(opac, 1e-30)))

        params = jnp.stack(
            [s * a00, s * a11, s * a22,
             s * 2.0 * a01, s * 2.0 * a02, s * 2.0 * a12, c6, c7, c8, c9,
             lo_i[..., 0], lo_i[..., 1], lo_i[..., 2],
             hi_i[..., 0], hi_i[..., 1], hi_i[..., 2]], axis=-1)
        return params.astype(jnp.float32), lo_i, hi_i

    # ---- forward -------------------------------------------------------------
    def __call__(self, means3d, opacities, covariances=None, scales=None,
                 rotations=None, features=None):
        means3d = jnp.asarray(means3d, jnp.float32)
        opacities = jnp.asarray(opacities, jnp.float32)
        if covariances is None:
            covariances = get_covariance(
                jnp.asarray(scales, jnp.float32),
                quat_to_rotmat(jnp.asarray(rotations, jnp.float32)))
        covariances = jnp.asarray(covariances, jnp.float32)
        if features is not None:
            features = jnp.asarray(features, jnp.float32)

        # mimic @unbatched_forward: batch folded into the Pallas grid.
        squeeze = means3d.ndim == 2
        if squeeze:
            means3d = means3d[None]
            opacities = opacities[None]
            covariances = covariances[None]
            if features is not None:
                features = features[None]

        B, G = means3d.shape[:2]
        vol_min = jnp.asarray(self.vol_range[:3])
        vol_max = jnp.asarray(self.vol_range[3:])

        extra_valid = None
        if self.filter_gaussians:
            # folded into a validity mask (equivalent to dropping the gaussians)
            extra_valid = opacities[..., 0] > self.opacity_thresh
            extra_valid &= jnp.all((means3d >= vol_min) & (means3d <= vol_max), axis=-1)
            if self.covariance_thresh > 0:
                cov_diag = jnp.diagonal(covariances, axis1=-2, axis2=-1)
                extra_valid &= cov_diag.min(axis=-1) * 6 > self.covariance_thresh

        # ---- pad gaussians to a multiple of the (capped) gaussian tile -------
        TG = min(self.max_gaussian_tile, _ceil_to(G, 8))
        Gpad = _ceil_to(G, TG)
        pad = Gpad - G
        if pad:
            far = vol_min - 1.0e4                     # far outside -> invalid box
            means3d = jnp.concatenate(
                [means3d, jnp.broadcast_to(far, (B, pad, 3))], axis=1)
            opacities = jnp.concatenate(
                [opacities, jnp.zeros((B, pad, 1), jnp.float32)], axis=1)
            eye = jnp.broadcast_to(jnp.eye(3, dtype=jnp.float32), (B, pad, 3, 3))
            covariances = jnp.concatenate([covariances, eye], axis=1)
            if extra_valid is not None:
                extra_valid = jnp.concatenate(
                    [extra_valid, jnp.zeros((B, pad), dtype=bool)], axis=1)
            if features is not None:
                features = jnp.concatenate(
                    [features, jnp.zeros((B, pad, features.shape[-1]), jnp.float32)],
                    axis=1)

        params, lo_i, hi_i = self._pack_params(
            means3d, opacities, covariances, vol_min, vol_max, extra_valid)   # (B,Gpad,16)

        feat_dim = 0 if features is None else features.shape[-1]
        Fp1 = feat_dim + 1
        ones_row = jnp.ones((B, 1, Gpad), jnp.float32)
        if features is None:
            featsT = ones_row                                                 # (B,1,Gpad)
        else:
            featsT = jnp.concatenate([jnp.swapaxes(features, 1, 2), ones_row],
                                     axis=1)                                  # (B,F+1,Gpad)
        # host-side cast: halves the featsT DMA and removes the per-step VPU cast
        featsT = featsT.astype(self.splat_matmul_dtype)

        ngt = Gpad // TG
        nvt = self.nvt

        # ---- compacted (batch, voxel-tile) -> gaussian-tile schedule ----------
        g_lo = lo_i.reshape(B, ngt, TG, 3).min(axis=2)                        # (B,ngt,3)
        g_hi = hi_i.reshape(B, ngt, TG, 3).max(axis=2)
        overlap = jnp.all(
            (self.vox_tile_lo[None, :, None, :] <= g_hi[:, None, :, :]) &
            (self.vox_tile_hi[None, :, None, :] >= g_lo[:, None, :, :]),
            axis=-1)                                                          # (B,nvt,ngt)
        counts = overlap.sum(axis=-1).astype(jnp.int32)                       # (B,nvt)
        # stable argsort puts overlapping gaussian-tile indices first, in order
        order = jnp.argsort(jnp.logical_not(overlap), axis=-1,
                            stable=True).astype(jnp.int32)                    # (B,nvt,ngt)
        # tail slots repeat the last valid tile id -> their DMAs are skipped
        slot = jnp.minimum(jnp.arange(ngt, dtype=jnp.int32)[None, None, :],
                           jnp.maximum(counts - 1, 0)[..., None])
        tile_ids = jnp.take_along_axis(order, slot, axis=-1)                  # (B,nvt,ngt)
        try:        # static bound on visited tiles (needs a concrete value)
            mt = max(1, int(np.asarray(jax.device_get(counts)).max()))
        except Exception:   # traced under jit: fall back to all gaussian tiles
            mt = ngt
        tile_ids = tile_ids[:, :, :mt].reshape(-1)                            # (B*nvt*mt,)
        counts = counts.reshape(-1)                                           # (B*nvt,)

        kernel = functools.partial(
            _voxelize_kernel, eps=self.eps, feat_dim=feat_dim,
            normalize=features is not None,
            matmul_dtype=self.splat_matmul_dtype, exp_dtype=self.exp_dtype)

        def vox_map(b, i, j, tids, cnts):
            return (0, i)

        def prm_map(b, i, j, tids, cnts):
            return (b, tids[(b * nvt + i) * mt + j], 0)

        def feat_map(b, i, j, tids, cnts):
            return (b, 0, tids[(b * nvt + i) * mt + j])

        def out_map(b, i, j, tids, cnts):
            return (b, 0, i)

        steps = B * nvt * mt
        cost = pl.CostEstimate(
            flops=int(2 * steps * TG * self.TN * (16 + Fp1)),
            transcendentals=int(steps * TG * self.TN),
            bytes_accessed=int(4 * (self.voxinfo.size + params.size
                                    + B * Fp1 * self.Npad)
                               + featsT.size * featsT.dtype.itemsize))

        # VMEM budget: double-buffered blocks + elementwise intermediates + margin,
        # capped well below the v7x 64 MiB physical ceiling.
        mm_bytes = jnp.dtype(self.splat_matmul_dtype).itemsize
        block_bytes = 2 * (24 * self.TN * 4 + TG * 16 * 4
                           + Fp1 * TG * mm_bytes + Fp1 * self.TN * 4)
        interm_bytes = 4 * TG * self.TN * 4        # lmaha / dens / mask temporaries
        vmem_limit = int(min(max(block_bytes + interm_bytes + (6 << 20), 16 << 20),
                             48 << 20))

        out = pl.pallas_call(
            kernel,
            out_shape=jax.ShapeDtypeStruct((B, Fp1, self.Npad), jnp.float32),
            grid_spec=pltpu.PrefetchScalarGridSpec(
                num_scalar_prefetch=2,
                grid=(B, nvt, mt),
                in_specs=[pl.BlockSpec((24, self.TN), vox_map),
                          pl.BlockSpec((1, TG, 16), prm_map),
                          pl.BlockSpec((1, Fp1, TG), feat_map)],
                out_specs=pl.BlockSpec((1, Fp1, self.TN), out_map)),
            compiler_params=pltpu.CompilerParams(
                dimension_semantics=("parallel", "parallel", "arbitrary"),
                vmem_limit_bytes=vmem_limit),
            cost_estimate=cost,
        )(tile_ids, counts, self.voxinfo, params, featsT)

        X, Y, Z = self.grid_shape
        N = self.N
        grid_density = out[:, feat_dim, :N].reshape(B, X, Y, Z, 1)
        if features is None:
            return grid_density[0] if squeeze else grid_density
        grid_feats = jnp.swapaxes(out[:, :feat_dim, :N], 1, 2).reshape(
            B, X, Y, Z, feat_dim)
        if squeeze:
            return grid_density[0], grid_feats[0]
        return grid_density, grid_feats


# -----------------------------------------------------------------------------
# NumPy port of the reference splat_into_3d (for correctness check only)
# -----------------------------------------------------------------------------
def _splat_into_3d_reference(grid_coords, means3d, opacities, covariances,
                             vol_range, voxel_size, features, eps=1e-6):
    gc = np.asarray(grid_coords, np.float32)
    vol_min, vol_max = vol_range[:3], vol_range[3:]
    dens = np.zeros(gc.shape[:-1] + (1,), np.float32)
    feats = np.zeros(gc.shape[:-1] + (features.shape[-1],), np.float32)
    for g in range(means3d.shape[0]):
        sigma = np.sqrt(np.diag(covariances[g])).astype(np.float32)
        lo = means3d[g] - 3.0 * sigma
        hi = means3d[g] + 3.0 * sigma
        if not (np.all(hi > vol_min) and np.all(lo < vol_max)):
            continue
        lo_c = np.clip(lo, vol_min, vol_max)
        hi_c = np.clip(hi, vol_min, vol_max)
        lo_i = ((lo_c - vol_min) / voxel_size).astype(np.int32)
        hi_i = ((hi_c - vol_min) / voxel_size).astype(np.int32)
        sl = tuple(slice(int(a), int(b) + 1) for a, b in zip(lo_i, hi_i))
        diff = gc[sl] - means3d[g]
        inv = np.linalg.inv(covariances[g].astype(np.float64)).astype(np.float32)
        maha = np.einsum('...i,ij,...j->...', diff, inv, diff)[..., None]
        d = opacities[g] * np.exp(-0.5 * maha)
        dens[sl] += d
        feats[sl] += d * features[g]
    feats = feats / np.maximum(dens, eps)
    return dens, feats


# -----------------------------------------------------------------------------
if __name__ == "__main__":
    key = jax.random.PRNGKey(0)
    k1, k2, k3, k4, k5 = jax.random.split(key, 5)

    vol_range = [-8.0, -8.0, -4.0, 8.0, 8.0, 4.0]
    voxel_size = 1.0
    B, G, F = 2, 64, 8

    means3d = jax.random.uniform(
        k1, (B, G, 3),
        minval=jnp.array([-9.0, -9.0, -5.0]), maxval=jnp.array([9.0, 9.0, 5.0]))
    opacities = jax.random.uniform(k2, (B, G, 1), minval=0.1, maxval=1.0)
    scales = jax.random.uniform(k3, (B, G, 3), minval=0.3, maxval=1.5)
    rotations = jax.random.normal(k4, (B, G, 4))
    features = jax.random.normal(k5, (B, G, F))

    # default config: chip-adaptive (bf16 exponent + TG=256 on v6e/v7x)
    voxelizer = GaussianVoxelizerPallas(vol_range, voxel_size)
    grid_density, grid_feats = voxelizer(means3d, opacities, scales=scales,
                                         rotations=rotations, features=features)
    jax.block_until_ready((grid_density, grid_feats))
    assert grid_density.shape == (B, 16, 16, 8, 1)
    assert grid_feats.shape == (B, 16, 16, 8, F)

    # accuracy config (f32 exponent) for the tight correctness check
    voxelizer_acc = GaussianVoxelizerPallas(vol_range, voxel_size,
                                            exp_dtype=jnp.float32)
    gd_acc, gf_acc = voxelizer_acc(means3d, opacities, scales=scales,
                                   rotations=rotations, features=features)
    jax.block_until_ready((gd_acc, gf_acc))

    for b in range(B):
        covs = get_covariance(scales[b], quat_to_rotmat(rotations[b]))
        ref_d, ref_f = _splat_into_3d_reference(
            np.asarray(voxelizer.grid_coords), np.asarray(means3d[b], np.float32),
            np.asarray(opacities[b], np.float32), np.asarray(covs, np.float32),
            np.asarray(vol_range, np.float32), voxel_size,
            np.asarray(features[b], np.float32))
        # f32-exponent config: 2e-2 tolerance (bf16 splat matmul + Newton recip)
        assert np.allclose(np.asarray(gd_acc[b]), ref_d, rtol=2e-2, atol=2e-2), \
            f"density mismatch (f32 exp) for batch {b}"
        assert np.allclose(np.asarray(gf_acc[b]), ref_f, rtol=2e-2, atol=2e-2), \
            f"feature mismatch (f32 exp) for batch {b}"
        # default config may use a bf16 exponent on v6e/v7x -> looser tolerance
        assert np.allclose(np.asarray(grid_density[b]), ref_d, rtol=6e-2, atol=6e-2), \
            f"density mismatch (default) for batch {b}"
        assert np.allclose(np.asarray(grid_feats[b]), ref_f, rtol=6e-2, atol=6e-2), \
            f"feature mismatch (default) for batch {b}"

    print("KERNEL_OK")
</pallas_src>

<mosaic_0001>
module attributes {stable_mosaic.version = 11 : i64} {
  func.func @_voxelize_kernel(%arg0: i32, %arg1: i32, %arg2: i32, %arg3: memref<2xi32, #tpu.memory_space<smem>>, %arg4: memref<2xi32, #tpu.memory_space<smem>>, %arg5: memref<24x2048xf32, #tpu.memory_space<vmem>>, %arg6: memref<1x64x16xf32, #tpu.memory_space<vmem>>, %arg7: memref<1x9x64xbf16, #tpu.memory_space<vmem>>, %arg8: memref<1x9x2048xf32, #tpu.memory_space<vmem>>) attributes {dimension_semantics = [#tpu.dimension_semantics<parallel>, #tpu.dimension_semantics<parallel>, #tpu.dimension_semantics<arbitrary>], iteration_bounds = array<i64: 2, 1, 1>, scalar_prefetch = 2 : i64, scratch_operands = 0 : i64, tpu.core_type = #tpu.core_type<tc>, window_params = [{transform_indices = @transform_0, window_bounds = array<i64: 24, 2048>}, {transform_indices = @transform_1, window_bounds = array<i64: 1, 64, 16>}, {transform_indices = @transform_2, window_bounds = array<i64: 1, 9, 64>}, {transform_indices = @transform_3, window_bounds = array<i64: 1, 9, 2048>}]} {
    %c0_i32 = arith.constant 0 : i32
    %0 = arith.cmpi eq, %arg2, %c0_i32 : i32
    %1 = arith.extui %0 : i1 to i32
    %c0_i32_0 = arith.constant 0 : i32
    %2 = arith.cmpi ne, %1, %c0_i32_0 : i32
    scf.if %2 {
      %cst = arith.constant 0.000000e+00 : f32
      %13 = vector.broadcast %cst : f32 to vector<1x9x2048xf32>
      %c0 = arith.constant 0 : index
      %c0_4 = arith.constant 0 : index
      %c0_5 = arith.constant 0 : index
      %14 = vector.load %arg8[%c0, %c0_4, %c0_5] : memref<1x9x2048xf32, #tpu.memory_space<vmem>>, vector<1x9x2048xf32>
      tpu.vector_store %arg8[%c0, %c0_4, %c0_5], %13 {strides = array<i32>} : memref<1x9x2048xf32, #tpu.memory_space<vmem>>, vector<1x9x2048xf32>,
    } else {
    }
    %c1_i32 = arith.constant 1 : i32
    %3 = arith.muli %arg0, %c1_i32 : i32
    %4 = arith.addi %3, %arg1 : i32
    %5 = arith.index_cast %4 : i32 to index
    %6 = memref.load %arg4[%5] : memref<2xi32, #tpu.memory_space<smem>>
    %7 = arith.cmpi slt, %arg2, %6 : i32
    %8 = arith.extui %7 : i1 to i32
    %c0_i32_1 = arith.constant 0 : i32
    %9 = arith.cmpi ne, %8, %c0_i32_1 : i32
    scf.if %9 {
      %c0 = arith.constant 0 : index
      %c0_4 = arith.constant 0 : index
      %13 = vector.load %arg5[%c0, %c0_4] : memref<24x2048xf32, #tpu.memory_space<vmem>>, vector<24x2048xf32>
      %14 = vector.extract_strided_slice %13 {offsets = [0, 0], sizes = [16, 2048], strides = [1, 1]} : vector<24x2048xf32> to vector<16x2048xf32>
      %15 = vector.extract_strided_slice %13 {offsets = [16, 0], sizes = [1, 2048], strides = [1, 1]} : vector<24x2048xf32> to vector<1x2048xf32>
      %16 = vector.extract_strided_slice %13 {offsets = [17, 0], sizes = [1, 2048], strides = [1, 1]} : vector<24x2048xf32> to vector<1x2048xf32>
      %17 = vector.extract_strided_slice %13 {offsets = [18, 0], sizes = [1, 2048], strides = [1, 1]} : vector<24x2048xf32> to vector<1x2048xf32>
      %c0_5 = arith.constant 0 : index
      %c0_6 = arith.constant 0 : index
      %c0_7 = arith.constant 0 : index
      %18 = vector.load %arg6[%c0_5, %c0_6, %c0_7] : memref<1x64x16xf32, #tpu.memory_space<vmem>>, vector<1x64x16xf32>
      %19 = vector.shape_cast %18 : vector<1x64x16xf32> to vector<64x16xf32>
      %cst = arith.constant dense<0.000000e+00> : vector<64x2048xf32>
      %20 = tpu.matmul %19, %14, %cst {dimension_numbers = #tpu.dot_dimension_numbers<[1], [0], [0], [1], [0, 0, 1, 1], [], []>} : vector<64x16xf32>, vector<16x2048xf32>, vector<64x2048xf32> -> vector<64x2048xf32>
      %21 = math.exp2 %20 : vector<64x2048xf32>
      %22 = vector.extract_strided_slice %19 {offsets = [0, 10], sizes = [64, 1], strides = [1, 1]} : vector<64x16xf32> to vector<64x1xf32>
      %23 = vector.extract_strided_slice %19 {offsets = [0, 11], sizes = [64, 1], strides = [1, 1]} : vector<64x16xf32> to vector<64x1xf32>
      %24 = vector.extract_strided_slice %19 {offsets = [0, 12], sizes = [64, 1], strides = [1, 1]} : vector<64x16xf32> to vector<64x1xf32>
      %25 = vector.extract_strided_slice %19 {offsets = [0, 13], sizes = [64, 1], strides = [1, 1]} : vector<64x16xf32> to vector<64x1xf32>
      %26 = vector.extract_strided_slice %19 {offsets = [0, 14], sizes = [64, 1], strides = [1, 1]} : vector<64x16xf32> to vector<64x1xf32>
      %27 = vector.extract_strided_slice %19 {offsets = [0, 15], sizes = [64, 1], strides = [1, 1]} : vector<64x16xf32> to vector<64x1xf32>
      %28 = vector.broadcast %15 : vector<1x2048xf32> to vector<64x2048xf32>
      %29 = vector.broadcast %22 : vector<64x1xf32> to vector<64x2048xf32>
      %30 = arith.cmpf oge, %28, %29 : vector<64x2048xf32>
      %31 = vector.broadcast %15 : vector<1x2048xf32> to vector<64x2048xf32>
      %32 = vector.broadcast %25 : vector<64x1xf32> to vector<64x2048xf32>
      %33 = arith.cmpf ole, %31, %32 : vector<64x2048xf32>
      %34 = arith.andi %30, %33 : vector<64x2048xi1>
      %35 = vector.broadcast %16 : vector<1x2048xf32> to vector<64x2048xf32>
      %36 = vector.broadcast %23 : vector<64x1xf32> to vector<64x2048xf32>
      %37 = arith.cmpf oge, %35, %36 : vector<64x2048xf32>
      %38 = arith.andi %34, %37 : vector<64x2048xi1>
      %39 = vector.broadcast %16 : vector<1x2048xf32> to vector<64x2048xf32>
      %40 = vector.broadcast %26 : vector<64x1xf32> to vector<64x2048xf32>
      %41 = arith.cmpf ole, %39, %40 : vector<64x2048xf32>
      %42 = arith.andi %38, %41 : vector<64x2048xi1>
      %43 = vector.broadcast %17 : vector<1x2048xf32> to vector<64x2048xf32>
      %44 = vector.broadcast %24 : vector<64x1xf32> to vector<64x2048xf32>
      %45 = arith.cmpf oge, %43, %44 : vector<64x2048xf32>
      %46 = arith.andi %42, %45 : vector<64x2048xi1>
      %47 = vector.broadcast %17 : vector<1x2048xf32> to vector<64x2048xf32>
      %48 = vector.broadcast %27 : vector<64x1xf32> to vector<64x2048xf32>
      %49 = arith.cmpf ole, %47, %48 : vector<64x2048xf32>
      %50 = arith.andi %46, %49 : vector<64x2048xi1>
      %cst_8 = arith.constant 0.000000e+00 : f32
      %51 = vector.broadcast %cst_8 : f32 to vector<64x2048xf32>
      %52 = arith.select %50, %21, %51 : vector<64x2048xi1>, vector<64x2048xf32>
      %53 = arith.truncf %52 : vector<64x2048xf32> to vector<64x2048xbf16>
      %c0_9 = arith.constant 0 : index
      %c0_10 = arith.constant 0 : index
      %c0_11 = arith.constant 0 : index
      %54 = vector.load %arg8[%c0_9, %c0_10, %c0_11] : memref<1x9x2048xf32, #tpu.memory_space<vmem>>, vector<1x9x2048xf32>
      %55 = vector.shape_cast %54 : vector<1x9x2048xf32> to vector<9x2048xf32>
      %c0_12 = arith.constant 0 : index
      %c0_13 = arith.constant 0 : index
      %c0_14 = arith.constant 0 : index
      %56 = vector.load %arg7[%c0_12, %c0_13, %c0_14] : memref<1x9x64xbf16, #tpu.memory_space<vmem>>, vector<1x9x64xbf16>
      %57 = vector.shape_cast %56 : vector<1x9x64xbf16> to vector<9x64xbf16>
      %cst_15 = arith.constant dense<0.000000e+00> : vector<9x2048xf32>
      %58 = tpu.matmul %57, %53, %cst_15 {dimension_numbers = #tpu.dot_dimension_numbers<[1], [0], [0], [1], [0, 0, 1, 1], [], []>} : vector<9x64xbf16>, vector<64x2048xbf16>, vector<9x2048xf32> -> vector<9x2048xf32>
      %59 = arith.addf %55, %58 : vector<9x2048xf32>
      %c0_16 = arith.constant 0 : index
      %c0_17 = arith.constant 0 : index
      %c0_18 = arith.constant 0 : index
      %60 = vector.load %arg8[%c0_16, %c0_17, %c0_18] : memref<1x9x2048xf32, #tpu.memory_space<vmem>>, vector<1x9x2048xf32>
      %61 = vector.shape_cast %60 : vector<1x9x2048xf32> to vector<9x2048xf32>
      %62 = vector.shape_cast %59 : vector<9x2048xf32> to vector<1x9x2048xf32>
      tpu.vector_store %arg8[%c0_16, %c0_17, %c0_18], %62 {strides = array<i32>} : memref<1x9x2048xf32, #tpu.memory_space<vmem>>, vector<1x9x2048xf32>,
    } else {
    }
    %c0_i32_2 = arith.constant 0 : i32
    %10 = arith.cmpi eq, %arg2, %c0_i32_2 : i32
    %11 = arith.extui %10 : i1 to i32
    %c0_i32_3 = arith.constant 0 : i32
    %12 = arith.cmpi ne, %11, %c0_i32_3 : i32
    scf.if %12 {
      %c0 = arith.constant 0 : index
      %c8 = arith.constant 8 : index
      %c0_4 = arith.constant 0 : index
      %13 = vector.load %arg8[%c0, %c8, %c0_4] : memref<1x9x2048xf32, #tpu.memory_space<vmem>>, vector<1x1x2048xf32>
      %14 = vector.shape_cast %13 : vector<1x1x2048xf32> to vector<1x2048xf32>
      %cst = arith.constant 9.99999997E-7 : f32
      %15 = vector.broadcast %cst : f32 to vector<1x2048xf32>
      %16 = arith.maximumf %14, %15 : vector<1x2048xf32>
      %17 = tpu.reciprocal %16 {approx = true} : vector<1x2048xf32> -> vector<1x2048xf32>
      %18 = arith.mulf %16, %17 : vector<1x2048xf32>
      %cst_5 = arith.constant 2.000000e+00 : f32
      %19 = vector.broadcast %cst_5 : f32 to vector<1x2048xf32>
      %20 = arith.subf %19, %18 : vector<1x2048xf32>
      %21 = arith.mulf %17, %20 : vector<1x2048xf32>
      %c0_6 = arith.constant 0 : index
      %c0_7 = arith.constant 0 : index
      %c0_8 = arith.constant 0 : index
      %22 = vector.load %arg8[%c0_6, %c0_7, %c0_8] : memref<1x9x2048xf32, #tpu.memory_space<vmem>>, vector<1x8x2048xf32>
      %23 = vector.shape_cast %22 : vector<1x8x2048xf32> to vector<8x2048xf32>
      %24 = vector.broadcast %21 : vector<1x2048xf32> to vector<8x2048xf32>
      %25 = arith.mulf %23, %24 : vector<8x2048xf32>
      %c0_9 = arith.constant 0 : index
      %c0_10 = arith.constant 0 : index
      %c0_11 = arith.constant 0 : index
      %26 = vector.load %arg8[%c0_9, %c0_10, %c0_11] : memref<1x9x2048xf32, #tpu.memory_space<vmem>>, vector<1x8x2048xf32>
      %27 = vector.shape_cast %26 : vector<1x8x2048xf32> to vector<8x2048xf32>
      %28 = vector.shape_cast %25 : vector<8x2048xf32> to vector<1x8x2048xf32>
      tpu.vector_store %arg8[%c0_9, %c0_10, %c0_11], %28 {strides = array<i32>} : memref<1x9x2048xf32, #tpu.memory_space<vmem>>, vector<1x8x2048xf32>,
    } else {
    }
    return
  }
  func.func @transform_0(%arg0: i32, %arg1: i32, %arg2: i32, %arg3: memref<2xi32, #tpu.memory_space<smem>>, %arg4: memref<2xi32, #tpu.memory_space<smem>>) -> (i32, i32) {
    %c0_i32 = arith.constant 0 : i32
    %c0_i32_0 = arith.constant 0 : i32
    return %c0_i32, %arg1 : i32, i32
  }
  func.func @transform_1(%arg0: i32, %arg1: i32, %arg2: i32, %arg3: memref<2xi32, #tpu.memory_space<smem>>, %arg4: memref<2xi32, #tpu.memory_space<smem>>) -> (i32, i32, i32) {
    %c1_i32 = arith.constant 1 : i32
    %0 = arith.muli %arg0, %c1_i32 : i32
    %1 = arith.addi %0, %arg1 : i32
    %c1_i32_0 = arith.constant 1 : i32
    %2 = arith.muli %1, %c1_i32_0 : i32
    %3 = arith.addi %2, %arg2 : i32
    %4 = arith.index_cast %3 : i32 to index
    %5 = memref.load %arg3[%4] : memref<2xi32, #tpu.memory_space<smem>>
    %c0_i32 = arith.constant 0 : i32
    %c0_i32_1 = arith.constant 0 : i32
    return %arg0, %5, %c0_i32 : i32, i32, i32
  }
  func.func @transform_2(%arg0: i32, %arg1: i32, %arg2: i32, %arg3: memref<2xi32, #tpu.memory_space<smem>>, %arg4: memref<2xi32, #tpu.memory_space<smem>>) -> (i32, i32, i32) {
    %c1_i32 = arith.constant 1 : i32
    %0 = arith.muli %arg0, %c1_i32 : i32
    %1 = arith.addi %0, %arg1 : i32
    %c1_i32_0 = arith.constant 1 : i32
    %2 = arith.muli %1, %c1_i32_0 : i32
    %3 = arith.addi %2, %arg2 : i32
    %4 = arith.index_cast %3 : i32 to index
    %5 = memref.load %arg3[%4] : memref<2xi32, #tpu.memory_space<smem>>
    %c0_i32 = arith.constant 0 : i32
    %c0_i32_1 = arith.constant 0 : i32
    return %arg0, %c0_i32, %5 : i32, i32, i32
  }
  func.func @transform_3(%arg0: i32, %arg1: i32, %arg2: i32, %arg3: memref<2xi32, #tpu.memory_space<smem>>, %arg4: memref<2xi32, #tpu.memory_space<smem>>) -> (i32, i32, i32) {
    %c0_i32 = arith.constant 0 : i32
    %c0_i32_0 = arith.constant 0 : i32
    return %arg0, %c0_i32, %arg1 : i32, i32, i32
  }
}

</mosaic_0001>

<llo_original>
// kernel: tpu_custom_call.1
$region0: #{tpu_custom_call.1}
  #allocation0 [shape = 'u32[]', space=smem, size = 0x4, offset = 0x4, fixed_abs, tag = 'smem constant byte address 0x4 - core index']
  #allocation1 [shape = 'u32[144,128]{1,0:T(1,128)}', space=vmem, size = 0x12000, scoped, tag = 'internal scratch']
  #allocation2 [shape = 's32[1]{0}', space=sflag, size = 0x4, scoped, tag = 'scoped memory for tpu_custom_call.1']
  #allocation3 [shape = 'u8[512]{0}', space=smem, size = 0x200, scoped, tag = 'prefetched SMEM operand 0']
  #allocation4 [shape = 'u8[512]{0}', space=smem, size = 0x200, scoped, tag = 'prefetched SMEM operand 1']
  %s0 = inlined_call_operand.vmem [shape: s32[2], index: 0, kind: input, shape index: {}]
  %s1 = inlined_call_operand.vmem [shape: s32[2], index: 1, kind: input, shape index: {}]
  %s2 = inlined_call_operand.hbm [shape: f32[24,2048], index: 2, kind: input, shape index: {}]
  %s3 = inlined_call_operand.vmem [shape: f32[2,64,16], index: 3, kind: input, shape index: {}]
  %s4 = inlined_call_operand.vmem [shape: bf16[2,9,64], index: 4, kind: input, shape index: {}]
  %s5 = inlined_call_operand.vmem [shape: f32[2,9,2048], index: 5, kind: output, shape index: {}]
  %s6 = sld [smem:[#allocation0]]
  $region61: #{tpu_custom_call.1} parent=0
    _
  %s8 = ssub.s32 1, %s6
  %s9 = scalar_select 0, %s8, %s6
  %s10 = sshll.u32 %s0, 4
  %s11 = int_to_ptr.vmem [resolvable:$true] %s10
  %13 = dma.vmem_to_smem %s11, 16, [#allocation3], [#allocation2]
  %s14 = sshll.u32 %s1, 4
  %s15 = int_to_ptr.vmem [resolvable:$true] %s14
  %17 = dma.vmem_to_smem %s15, 16, [#allocation4], [#allocation2]
  %18 = dma.done [#allocation2], 32
  %19 = sfence
  $region1: #{tpu_custom_call.1} parent=0
    #allocation5 [shape = 'u8[196608]{0}', space=vmem, size = 0x30000, scoped, tag = 'input window, operand 2, single buffered']
    #allocation6 [shape = 's32[2]{0}', space=sflag, size = 0x8, scoped, tag = 'scoped memory for tpu_custom_call.1']
    %20 = vsyncpa [#allocation6], 0
    loop: start=0, step=1, limit=4
    $region2: #{tpu_custom_call.1} parent=1 // loop_pre_header
      _
    $region3: #{tpu_custom_call.1} parent=1 // loop_header
      %s22 = sphi 0, %s26
      %p23 = scmp.ge.s32.totalorder %s22, 4
      %s29 = sphi 0, %s48
      %s30 = sphi 0, %s44
      %s31 = sphi 0, %s40
      %s32 = sphi 0, %s29
      %s33 = sphi 0, %s30
      %s34 = sphi 0, %s31
      %s35 = sphi 0, %s32
      %s36 = sphi 0, %s33
      %s37 = sphi 0, %s34
      %s51 = sphi 0, %s53
      %s54 = sphi 0, %s51
      %s55 = sphi 0, %s54
      %s71 = sphi 0, %s55
      %s85 = sphi 0, %s87
      %s88 = sphi 0, %s85
      %s89 = sphi 0, %s88
      %s105 = sphi 0, %s89
      %s119 = sphi 0, %s121
      %s122 = sphi 0, %s119
      %s123 = sphi 0, %s122
      %s139 = sphi 0, %s123
      %s147 = sphi 0, %s149
      %s150 = sphi 0, %s147
      %s151 = sphi 0, %s150
      %s167 = sphi 0, %s151
    $region4: #{tpu_custom_call.1} parent=1 // loop_header_branch
      %25 = sbr.rel (%p23) target = $region8
    $region5: #{tpu_custom_call.1} parent=1 // loop_body
      %s27 = ssub.s32 %s22, 1
      %s28 = ssub.s32 %s22, 2
      %s38 = sadd.s32 1, %s31
      %p39 = scmp.ge.s32.totalorder %s38, 1
      %s40 = scalar_select %p39, 0, %s38
      %s41 = sadd.s32 1, %s30
      %s42 = scalar_select %p39, %s41, %s30
      %p43 = scmp.ge.s32.totalorder %s42, 1
      %s44 = scalar_select %p43, 0, %s42
      %s45 = sadd.s32 1, %s29
      %s46 = scalar_select %p43, %s45, %s29
      %p47 = scmp.ge.s32.totalorder %s46, 2
      %s48 = scalar_select %p47, 0, %s46
      %s49 = ssub.s32 %s30, %s44
      %p50 = scmp.eq.s32.totalorder %s49, 0
      %s52 = sadd.s32 %s51, 1
      %s53 = scalar_select %p50, %s51, %s52
      %p56 = pneg %p50
      %p57 = scmp.eq.s32.totalorder %s22, 1
      %p58 = por %p56, %p57
      %p59 = scmp.ne.s32.totalorder %s51, %s54
      %p60 = scmp.eq.s32.totalorder %s22, 0
      %p61 = por %p59, %p60
      %p62 = scmp.ne.s32.totalorder %s51, %s54
      %p63 = scmp.eq.s32.totalorder %s27, 1
      %p64 = por %p62, %p63
      %p65 = scmp.ne.s32.totalorder %s54, %s55
      %p66 = scmp.eq.s32.totalorder %s27, 0
      %p67 = por %p65, %p66
      %p68 = scmp.ne.s32.totalorder %s54, %s55
      %p69 = scmp.eq.s32.totalorder %s28, 1
      %p70 = por %p68, %p69
      %p72 = scmp.ne.s32.totalorder %s55, %s71
      %p73 = scmp.eq.s32.totalorder %s28, 0
      %p74 = por %p72, %p73
      %s75 = sadd.s32 %s29, %s30
      %s76 = sadd.s32 %s75, %s31
      %s77 = sld [smem:[#allocation3 + %s76]]
      %s78 = sadd.s32 %s48, %s44
      %s79 = sadd.s32 %s78, %s40
      %s80 = sld [smem:[#allocation3 + %s79]]
      %s81 = ssub.s32 %s29, %s48
      %s82 = ssub.s32 %s77, %s80
      %s83 = sor.u32 %s81, %s82
      %p84 = scmp.eq.s32.totalorder %s83, 0
      %s86 = sadd.s32 %s85, 1
      %s87 = scalar_select %p84, %s85, %s86
      %p90 = pneg %p84
      %p91 = scmp.eq.s32.totalorder %s22, 1
      %p92 = por %p90, %p91
      %p93 = scmp.ne.s32.totalorder %s85, %s88
      %p94 = scmp.eq.s32.totalorder %s22, 0
      %p95 = por %p93, %p94
      %p96 = scmp.ne.s32.totalorder %s85, %s88
      %p97 = scmp.eq.s32.totalorder %s27, 1
      %p98 = por %p96, %p97
      %p99 = scmp.ne.s32.totalorder %s88, %s89
      %p100 = scmp.eq.s32.totalorder %s27, 0
      %p101 = por %p99, %p100
      %p102 = scmp.ne.s32.totalorder %s88, %s89
      %p103 = scmp.eq.s32.totalorder %s28, 1
      %p104 = por %p102, %p103
      %p106 = scmp.ne.s32.totalorder %s89, %s105
      %p107 = scmp.eq.s32.totalorder %s28, 0
      %p108 = por %p106, %p107
      %s109 = sadd.s32 %s29, %s30
      %s110 = sadd.s32 %s109, %s31
      %s111 = sld [smem:[#allocation3 + %s110]]
      %s112 = sadd.s32 %s48, %s44
      %s113 = sadd.s32 %s112, %s40
      %s114 = sld [smem:[#allocation3 + %s113]]
      %s115 = ssub.s32 %s29, %s48
      %s116 = ssub.s32 %s111, %s114
      %s117 = sor.u32 %s115, %s116
      %p118 = scmp.eq.s32.totalorder %s117, 0
      %s120 = sadd.s32 %s119, 1
      %s121 = scalar_select %p118, %s119, %s120
      %p124 = pneg %p118
      %p125 = scmp.eq.s32.totalorder %s22, 1
      %p126 = por %p124, %p125
      %p127 = scmp.ne.s32.totalorder %s119, %s122
      %p128 = scmp.eq.s32.totalorder %s22, 0
      %p129 = por %p127, %p128
      %p130 = scmp.ne.s32.totalorder %s119, %s122
      %p131 = scmp.eq.s32.totalorder %s27, 1
      %p132 = por %p130, %p131
      %p133 = scmp.ne.s32.totalorder %s122, %s123
      %p134 = scmp.eq.s32.totalorder %s27, 0
      %p135 = por %p133, %p134
      %p136 = scmp.ne.s32.totalorder %s122, %s123
      %p137 = scmp.eq.s32.totalorder %s28, 1
      %p138 = por %p136, %p137
      %p140 = scmp.ne.s32.totalorder %s123, %s139
      %p141 = scmp.eq.s32.totalorder %s28, 0
      %p142 = por %p140, %p141
      %s143 = ssub.s32 %s29, %s48
      %s144 = ssub.s32 %s30, %s44
      %s145 = sor.u32 %s143, %s144
      %p146 = scmp.eq.s32.totalorder %s145, 0
      %s148 = sadd.s32 %s147, 1
      %s149 = scalar_select %p146, %s147, %s148
      %p152 = pneg %p146
      %p153 = scmp.eq.s32.totalorder %s22, 1
      %p154 = por %p152, %p153
      %p155 = scmp.ne.s32.totalorder %s147, %s150
      %p156 = scmp.eq.s32.totalorder %s22, 0
      %p157 = por %p155, %p156
      %p158 = scmp.ne.s32.totalorder %s147, %s150
      %p159 = scmp.eq.s32.totalorder %s27, 1
      %p160 = por %p158, %p159
      %p161 = scmp.ne.s32.totalorder %s150, %s151
      %p162 = scmp.eq.s32.totalorder %s27, 0
      %p163 = por %p161, %p162
      %p164 = scmp.ne.s32.totalorder %s150, %s151
      %p165 = scmp.eq.s32.totalorder %s28, 1
      %p166 = por %p164, %p165
      %p168 = scmp.ne.s32.totalorder %s151, %s167
      %p169 = scmp.eq.s32.totalorder %s28, 0
      %p170 = por %p168, %p169
      %p171 = scmp.le.s32.totalorder 1, %s22
      %p172 = scmp.lt.s32.totalorder %s22, 3
      %p173 = pnand %p171, %p172
      %p174 = pneg %p173
      // Predicated region
      $region9: #{tpu_custom_call.1} parent=5 // pred_check
        _
      $region10: #{tpu_custom_call.1} parent=5 // pred_check_branch
        %176 = sbr.rel (%p173) target = $region12
      $region11: #{tpu_custom_call.1} parent=5 // pred_region
        %s177 = ssub.s32 %s22, 1
        // Predicated region
        $region13: #{tpu_custom_call.1} parent=11 // pred_check
          %p178 = pneg %p67
        $region14: #{tpu_custom_call.1} parent=11 // pred_check_branch
          %180 = sbr.rel (%p178) target = $region16
        $region15: #{tpu_custom_call.1} parent=11 // pred_region
          %s181 = smul.u32 16, %s33
          %s183 = ssub.s32 6144, 6144
          %184 = vsyncadd [#allocation6], %s183
          %s185 = smul.addr %s181, 128
          %s186 = scalar_lea.hbm %s2, %s185
          %s187 = sshll.u32 [#allocation5], 4
          %s188 = int_to_ptr.vmem [resolvable:$true] %s187
          %193 = dma.hbm_to_vmem [thread:$0]  %s186, 6144, %s188, [#allocation6], 2048, 2048, 128
        $region16: #{tpu_custom_call.1} parent=11 // pred_fallthru
          _
      $region12: #{tpu_custom_call.1} parent=5 // pred_fallthru
        _
      %p194 = scmp.lt.s32.totalorder %s22, 2
      // Predicated region
      $region17: #{tpu_custom_call.1} parent=5 // pred_check
        %p195 = pneg %p194
      $region18: #{tpu_custom_call.1} parent=5 // pred_check_branch
        %197 = sbr.rel (%p195) target = $region20
      $region19: #{tpu_custom_call.1} parent=5 // pred_region
        // Predicated region
        $region21: #{tpu_custom_call.1} parent=19 // pred_check
          %p198 = pneg %p95
        $region22: #{tpu_custom_call.1} parent=19 // pred_check_branch
          %200 = sbr.rel (%p198) target = $region24
        $region23: #{tpu_custom_call.1} parent=19 // pred_region
          %s201 = sadd.s32 %s29, %s30
          %s202 = sadd.s32 %s201, %s31
          %s203 = sld [smem:[#allocation3 + %s202]]
          %s204 = smul.u32 8, %s203
          %p205 = scmp.lt.s32.totalorder %s29, 1
          %s206 = scalar_select %p205, %s29, 1
          %p207 = scmp.lt.s32.totalorder %s204, 7
          %s208 = scalar_select %p207, %s204, 7
          %s209 = smul.addr %s206, 8
          %s210 = sadd.s32 %s208, %s209
          %s211 = smul.addr %s210, 8
          %s212 = scalar_lea.vmem %s3, %s211
          %s213 = sadd.s32 %s29, %s30
          %s214 = sadd.s32 %s213, %s31
          %s215 = sld [smem:[#allocation3 + %s214]]
          %s216 = smul.u32 8, %s215
        $region24: #{tpu_custom_call.1} parent=19 // pred_fallthru
          _
        // Predicated region
        $region25: #{tpu_custom_call.1} parent=19 // pred_check
          %p217 = pneg %p129
        $region26: #{tpu_custom_call.1} parent=19 // pred_check_branch
          %219 = sbr.rel (%p217) target = $region28
        $region27: #{tpu_custom_call.1} parent=19 // pred_region
          %s220 = sadd.s32 %s29, %s30
          %s221 = sadd.s32 %s220, %s31
          %s222 = sld [smem:[#allocation3 + %s221]]
          %p223 = scmp.lt.s32.totalorder %s29, 1
          %s224 = scalar_select %p223, %s29, 1
          %p225 = scmp.lt.s32.totalorder %s222, 0
          %s226 = scalar_select %p225, %s222, 0
          %s227 = smul.addr %s224, 2
          %s228 = sadd.s32 %s226, %s227
          %s229 = smul.addr %s228, 4
          %s230 = scalar_lea.vmem %s4, %s229
          %s231 = sadd.s32 %s29, %s30
          %s232 = sadd.s32 %s231, %s31
          %s233 = sld [smem:[#allocation3 + %s232]]
        $region28: #{tpu_custom_call.1} parent=19 // pred_fallthru
          _
      $region20: #{tpu_custom_call.1} parent=5 // pred_fallthru
        _
      %p234 = scmp.le.s32.totalorder 1, %s22
      %p235 = scmp.lt.s32.totalorder %s22, 3
      %p236 = pnand %p234, %p235
      %p237 = pneg %p236
      // Predicated region
      $region29: #{tpu_custom_call.1} parent=5 // pred_check
        _
      $region30: #{tpu_custom_call.1} parent=5 // pred_check_branch
        %239 = sbr.rel (%p236) target = $region32
      $region31: #{tpu_custom_call.1} parent=5 // pred_region
        %s240 = ssub.s32 %s22, 1
        // Predicated region
        $region33: #{tpu_custom_call.1} parent=31 // pred_check
          %p241 = pneg %p67
        $region34: #{tpu_custom_call.1} parent=31 // pred_check_branch
          %243 = sbr.rel (%p241) target = $region36
        $region35: #{tpu_custom_call.1} parent=31 // pred_region
          %244 = dma.done [#allocation6], 6144
        $region36: #{tpu_custom_call.1} parent=31 // pred_fallthru
          _
        %p245 = pneg %p67
        %p246 = pneg %p64
        %s247 = sadd.s32 %s32, %s33
        %s248 = sadd.s32 %s247, %s34
        %s249 = sld [smem:[#allocation3 + %s248]]
        %s250 = smul.u32 8, %s249
        %p251 = scmp.lt.s32.totalorder %s32, 1
        %s252 = scalar_select %p251, %s32, 1
        %p253 = scmp.lt.s32.totalorder %s250, 7
        %s254 = scalar_select %p253, %s250, 7
        %s255 = smul.addr %s252, 8
        %s256 = sadd.s32 %s254, %s255
        %s257 = smul.addr %s256, 8
        %s258 = scalar_lea.vmem %s3, %s257
        %p259 = pneg %p101
        %p260 = pneg %p98
        %s261 = sadd.s32 %s32, %s33
        %s262 = sadd.s32 %s261, %s34
        %s263 = sld [smem:[#allocation3 + %s262]]
        %p264 = scmp.lt.s32.totalorder %s32, 1
        %s265 = scalar_select %p264, %s32, 1
        %p266 = scmp.lt.s32.totalorder %s263, 0
        %s267 = scalar_select %p266, %s263, 0
        %s268 = smul.addr %s265, 2
        %s269 = sadd.s32 %s267, %s268
        %s270 = smul.addr %s269, 4
        %s271 = scalar_lea.vmem %s4, %s270
        %p272 = pneg %p135
        %p273 = pneg %p132
        %p274 = pneg %p163
        %p275 = pneg %p160
        %s276 = smul.u32 16, %s33
        %p277 = scmp.lt.s32.totalorder %s32, 1
        %s278 = scalar_select %p277, %s32, 1
        %p279 = scmp.lt.s32.totalorder %s276, 15
        %s280 = scalar_select %p279, %s276, 15
        %s281 = smul.addr %s278, 32
        %s282 = sadd.s32 %s280, %s281
        %s283 = smul.addr %s282, 8
        %s284 = scalar_lea.vmem %s5, %s283
        %s285 = smul.u32 16, %s33
        %s286 = sadd.s32 %s32, %s33
        %s287 = sadd.s32 %s286, %s34
        %s288 = sld [smem:[#allocation3 + %s287]]
        %s289 = smul.u32 8, %s288
        %p290 = scmp.lt.s32.totalorder %s32, 1
        %s291 = scalar_select %p290, %s32, 1
        %p292 = scmp.lt.s32.totalorder %s289, 7
        %s293 = scalar_select %p292, %s289, 7
        %s294 = smul.addr %s291, 8
        %s295 = sadd.s32 %s293, %s294
        %s296 = smul.addr %s295, 8
        %s297 = scalar_lea.vmem %s3, %s296
        %s298 = sadd.s32 %s32, %s33
        %s299 = sadd.s32 %s298, %s34
        %s300 = sld [smem:[#allocation3 + %s299]]
        %s301 = smul.u32 8, %s300
        %s302 = sadd.s32 %s32, %s33
        %s303 = sadd.s32 %s302, %s34
        %s304 = sld [smem:[#allocation3 + %s303]]
        %p305 = scmp.lt.s32.totalorder %s32, 1
        %s306 = scalar_select %p305, %s32, 1
        %p307 = scmp.lt.s32.totalorder %s304, 0
        %s308 = scalar_select %p307, %s304, 0
        %s309 = smul.addr %s306, 2
        %s310 = sadd.s32 %s308, %s309
        %s311 = smul.addr %s310, 4
        %s312 = scalar_lea.vmem %s4, %s311
        %s313 = sadd.s32 %s32, %s33
        %s314 = sadd.s32 %s313, %s34
        %s315 = sld [smem:[#allocation3 + %s314]]
        %s316 = smul.u32 16, %s33
        %p317 = scmp.lt.s32.totalorder %s32, 1
        %s318 = scalar_select %p317, %s32, 1
        %p319 = scmp.lt.s32.totalorder %s316, 15
        %s320 = scalar_select %p319, %s316, 15
        %s321 = smul.addr %s318, 32
        %s322 = sadd.s32 %s320, %s321
        %s323 = smul.addr %s322, 8
        %s324 = scalar_lea.vmem %s5, %s323
        %s325 = smul.u32 16, %s33
        %p327 = scmp.eq.s32.totalorder %s34, 0
        // Predicated region
        $region37: #{tpu_custom_call.1} parent=31 // pred_check
          %p328 = pneg %p327
        $region38: #{tpu_custom_call.1} parent=31 // pred_check_branch
          %330 = sbr.rel (%p328) target = $region40
        $region39: #{tpu_custom_call.1} parent=31 // pred_region
          %331 = vst [vmem:[%s324] sm:$0xff] 0.0
          %332 = vst [vmem:[%s324 + $0x8] sm:$0xff] 0.0
          %333 = vst [vmem:[%s324 + $0x10] sm:$0xff] 0.0
          %334 = vst [vmem:[%s324 + $0x18] sm:$0xff] 0.0
          %335 = vst [vmem:[%s324 + $0x20] sm:$0xff] 0.0
          %336 = vst [vmem:[%s324 + $0x28] sm:$0xff] 0.0
          %337 = vst [vmem:[%s324 + $0x30] sm:$0xff] 0.0
          %338 = vst [vmem:[%s324 + $0x38] sm:$0xff] 0.0
          %339 = vst [vmem:[%s324 + $0x40] sm:$0xff] 0.0
          %340 = vst [vmem:[%s324 + $0x48] sm:$0xff] 0.0
          %341 = vst [vmem:[%s324 + $0x50] sm:$0xff] 0.0
          %342 = vst [vmem:[%s324 + $0x58] sm:$0xff] 0.0
          %343 = vst [vmem:[%s324 + $0x60] sm:$0xff] 0.0
          %344 = vst [vmem:[%s324 + $0x68] sm:$0xff] 0.0
          %345 = vst [vmem:[%s324 + $0x70] sm:$0xff] 0.0
          %346 = vst [vmem:[%s324 + $0x78] sm:$0xff] 0.0
          %347 = vst [vmem:[%s324 + $0x80] sm:$0x1] 0.0
          %348 = vst [vmem:[%s324 + $0x88] sm:$0x1] 0.0
          %349 = vst [vmem:[%s324 + $0x90] sm:$0x1] 0.0
          %350 = vst [vmem:[%s324 + $0x98] sm:$0x1] 0.0
          %351 = vst [vmem:[%s324 + $0xa0] sm:$0x1] 0.0
          %352 = vst [vmem:[%s324 + $0xa8] sm:$0x1] 0.0
          %353 = vst [vmem:[%s324 + $0xb0] sm:$0x1] 0.0
          %354 = vst [vmem:[%s324 + $0xb8] sm:$0x1] 0.0
          %355 = vst [vmem:[%s324 + $0xc0] sm:$0x1] 0.0
          %356 = vst [vmem:[%s324 + $0xc8] sm:$0x1] 0.0
          %357 = vst [vmem:[%s324 + $0xd0] sm:$0x1] 0.0
          %358 = vst [vmem:[%s324 + $0xd8] sm:$0x1] 0.0
          %359 = vst [vmem:[%s324 + $0xe0] sm:$0x1] 0.0
          %360 = vst [vmem:[%s324 + $0xe8] sm:$0x1] 0.0
          %361 = vst [vmem:[%s324 + $0xf0] sm:$0x1] 0.0
          %362 = vst [vmem:[%s324 + $0xf8] sm:$0x1] 0.0
        $region40: #{tpu_custom_call.1} parent=31 // pred_fallthru
          _
        %s363 = sadd.s32 %s32, %s33
        %s364 = sld [smem:[#allocation4 + %s363]]
        %p365 = scmp.lt.s32.totalorder %s34, %s364
        // Predicated region
        $region41: #{tpu_custom_call.1} parent=31 // pred_check
          %p366 = pneg %p365
        $region42: #{tpu_custom_call.1} parent=31 // pred_check_branch
          %368 = sbr.rel (%p366) target = $region44
        $region43: #{tpu_custom_call.1} parent=31 // pred_region
          %v369 = vld [vmem:[#allocation5] sm:$0xff]
          %v370 = vld [vmem:[#allocation5 + $0x8] sm:$0xff]
          %v371 = vld [vmem:[#allocation5 + $0x10] sm:$0xff]
          %v372 = vld [vmem:[#allocation5 + $0x18] sm:$0xff]
          %v373 = vld [vmem:[#allocation5 + $0x20] sm:$0xff]
          %v374 = vld [vmem:[#allocation5 + $0x28] sm:$0xff]
          %v375 = vld [vmem:[#allocation5 + $0x30] sm:$0xff]
          %v376 = vld [vmem:[#allocation5 + $0x38] sm:$0xff]
          %v377 = vld [vmem:[#allocation5 + $0x40] sm:$0xff]
          %v378 = vld [vmem:[#allocation5 + $0x48] sm:$0xff]
          %v379 = vld [vmem:[#allocation5 + $0x50] sm:$0xff]
          %v380 = vld [vmem:[#allocation5 + $0x58] sm:$0xff]
          %v381 = vld [vmem:[#allocation5 + $0x60] sm:$0xff]
          %v382 = vld [vmem:[#allocation5 + $0x68] sm:$0xff]
          %v383 = vld [vmem:[#allocation5 + $0x70] sm:$0xff]
          %v384 = vld [vmem:[#allocation5 + $0x78] sm:$0xff]
          %v385 = vld [vmem:[#allocation5 + $0x80] sm:$0xff]
          %v386 = vld [vmem:[#allocation5 + $0x88] sm:$0xff]
          %v387 = vld [vmem:[#allocation5 + $0x90] sm:$0xff]
          %v388 = vld [vmem:[#allocation5 + $0x98] sm:$0xff]
          %v389 = vld [vmem:[#allocation5 + $0xa0] sm:$0xff]
          %v390 = vld [vmem:[#allocation5 + $0xa8] sm:$0xff]
          %v391 = vld [vmem:[#allocation5 + $0xb0] sm:$0xff]
          %v392 = vld [vmem:[#allocation5 + $0xb8] sm:$0xff]
          %v393 = vld [vmem:[#allocation5 + $0xc0] sm:$0xff]
          %v394 = vld [vmem:[#allocation5 + $0xc8] sm:$0xff]
          %v395 = vld [vmem:[#allocation5 + $0xd0] sm:$0xff]
          %v396 = vld [vmem:[#allocation5 + $0xd8] sm:$0xff]
          %v397 = vld [vmem:[#allocation5 + $0xe0] sm:$0xff]
          %v398 = vld [vmem:[#allocation5 + $0xe8] sm:$0xff]
          %v399 = vld [vmem:[#allocation5 + $0xf0] sm:$0xff]
          %v400 = vld [vmem:[#allocation5 + $0xf8] sm:$0xff]
          %v401 = vld [vmem:[#allocation5 + $0x100] sm:$0xff]
          %v402 = vld [vmem:[#allocation5 + $0x108] sm:$0xff]
          %v403 = vld [vmem:[#allocation5 + $0x110] sm:$0xff]
          %v404 = vld [vmem:[#allocation5 + $0x118] sm:$0xff]
          %v405 = vld [vmem:[#allocation5 + $0x120] sm:$0xff]
          %v406 = vld [vmem:[#allocation5 + $0x128] sm:$0xff]
          %v407 = vld [vmem:[#allocation5 + $0x130] sm:$0xff]
          %v408 = vld [vmem:[#allocation5 + $0x138] sm:$0xff]
          %v409 = vld [vmem:[#allocation5 + $0x140] sm:$0xff]
          %v410 = vld [vmem:[#allocation5 + $0x148] sm:$0xff]
          %v411 = vld [vmem:[#allocation5 + $0x150] sm:$0xff]
          %v412 = vld [vmem:[#allocation5 + $0x158] sm:$0xff]
          %v413 = vld [vmem:[#allocation5 + $0x160] sm:$0xff]
          %v414 = vld [vmem:[#allocation5 + $0x168] sm:$0xff]
          %v415 = vld [vmem:[#allocation5 + $0x170] sm:$0xff]
          %v416 = vld [vmem:[#allocation5 + $0x178] sm:$0xff]
          %v417 = vld [vmem:[%s297] sm:$0xff]
          %v418 = vld [vmem:[%s297 + $0x8] sm:$0xff]
          %v419 = vld [vmem:[%s297 + $0x10] sm:$0xff]
          %v420 = vld [vmem:[%s297 + $0x18] sm:$0xff]
          %v421 = vld [vmem:[%s297 + $0x20] sm:$0xff]
          %v422 = vld [vmem:[%s297 + $0x28] sm:$0xff]
          %v423 = vld [vmem:[%s297 + $0x30] sm:$0xff]
          %v424 = vld [vmem:[%s297 + $0x38] sm:$0xff]
          %vm425 = vcmask 130048
          %v427 = vsel %vm425, %v417, 0
          %v430 = vsel %vm425, %v418, 0
          %v433 = vsel %vm425, %v419, 0
          %v436 = vsel %vm425, %v420, 0
          %v439 = vsel %vm425, %v421, 0
          %v442 = vsel %vm425, %v422, 0
          %v445 = vsel %vm425, %v423, 0
          %v448 = vsel %vm425, %v424, 0
          %450 = vmatprep.subr.mxu0 %v370
          %451 = vmatpush1.msra.mxu0 %v369
          %452 = vmatprep.subr.mxu0 %v386
          %453 = vmatpush1.msra.mxu0 %v385
          %454 = vmatprep.subr.mxu0 0.0
          %455 = vmatpush1.msra.mxu0 0.0
          %456 = vmatprep.subr.mxu0 0.0
          %457 = vmatpush1.msra.mxu0 0.0
          %458 = vmatprep.subr.mxu0 0.0
          %459 = vmatpush1.msra.mxu0 0.0
          %460 = vmatprep.subr.mxu0 0.0
          %461 = vmatpush1.msra.mxu0 0.0
          %462 = vmatprep.subr.mxu0 0.0
          %463 = vmatpush1.msra.mxu0 0.0
          %464 = vmatprep.subr.mxu0 0.0
          %465 = vmatpush1.msra.mxu0 0.0
          %466 = vmatprep.subr.mxu0 0.0
          %467 = vmatpush1.msra.mxu0 0.0
          %468 = vmatprep.subr.mxu0 0.0
          %469 = vmatpush1.msra.mxu0 0.0
          %470 = vmatprep.subr.mxu0 0.0
          %471 = vmatpush1.msra.mxu0 0.0
          %472 = vmatprep.subr.mxu0 0.0
          %473 = vmatpush1.msra.mxu0 0.0
          %474 = vmatprep.subr.mxu0 0.0
          %475 = vmatpush1.msra.mxu0 0.0
          %476 = vmatprep.subr.mxu0 0.0
          %477 = vmatpush1.msra.mxu0 0.0
          %478 = vmatprep.subr.mxu0 0.0
          %479 = vmatpush1.msra.mxu0 0.0
          %480 = vmatprep.subr.mxu0 0.0
          %481 = vmatpush1.msra.mxu0 0.0
          %482 = vmatprep.subr.mxu0 0.0
          %483 = vmatpush1.msra.mxu0 0.0
          %484 = vmatprep.subr.mxu0 0.0
          %485 = vmatpush1.msra.mxu0 0.0
          %486 = vmatprep.subr.mxu0 0.0
          %487 = vmatpush1.msra.mxu0 0.0
          %488 = vmatprep.subr.mxu0 0.0
          %489 = vmatpush1.msra.mxu0 0.0
          %490 = vmatprep.subr.mxu0 0.0
          %491 = vmatpush1.msra.mxu0 0.0
          %492 = vmatprep.subr.mxu0 0.0
          %493 = vmatpush1.msra.mxu0 0.0
          %494 = vmatprep.subr.mxu0 0.0
          %495 = vmatpush1.msra.mxu0 0.0
          %496 = vmatprep.subr.mxu0 0.0
          %497 = vmatpush1.msra.mxu0 0.0
          %498 = vmatprep.subr.mxu0 0.0
          %499 = vmatpush1.msra.mxu0 0.0
          %500 = vmatprep.subr.mxu0 0.0
          %501 = vmatpush1.msra.mxu0 0.0
          %502 = vmatprep.subr.mxu0 0.0
          %503 = vmatpush1.msra.mxu0 0.0
          %504 = vmatprep.subr.mxu0 0.0
          %505 = vmatpush1.msra.mxu0 0.0
          %506 = vmatprep.subr.mxu0 0.0
          %507 = vmatpush1.msra.mxu0 0.0
          %508 = vmatprep.subr.mxu0 0.0
          %509 = vmatpush1.msra.mxu0 0.0
          %510 = vmatprep.subr.mxu0 0.0
          %511 = vmatpush1.msra.mxu0 0.0
          %512 = vmatprep.subr.mxu0 0.0
          %513 = vmatpush1.msra.mxu0 0.0
          %514 = vmatprep.mubr.f32.mxu0 0.0
          %515 = vmatmul.mubr.f32.gmra.mrb[0].mxu0 %v427
          %v516 = vpop.f32.mrb[0].mxu0
          %v517 = vadd.f32 0.0, %v516
          %v518 = vpop.f32.mrb[0].mxu0
          %v519 = vadd.f32 0.0, %v518
          %520 = vmatprep.mubr.f32.mxu0 0.0
          %521 = vmatmul.mubr.f32.gmra.mrb[0].mxu0 %v430
          %v522 = vpop.f32.mrb[0].mxu0
          %v523 = vadd.f32 0.0, %v522
          %v524 = vpop.f32.mrb[0].mxu0
          %v525 = vadd.f32 0.0, %v524
          %526 = vmatprep.mubr.f32.mxu0 0.0
          %527 = vmatmul.mubr.f32.gmra.mrb[0].mxu0 %v433
          %v528 = vpop.f32.mrb[0].mxu0
          %v529 = vadd.f32 0.0, %v528
          %v530 = vpop.f32.mrb[0].mxu0
          %v531 = vadd.f32 0.0, %v530
          %532 = vmatprep.mubr.f32.mxu0 0.0
          %533 = vmatmul.mubr.f32.gmra.mrb[0].mxu0 %v436
          %v534 = vpop.f32.mrb[0].mxu0
          %v535 = vadd.f32 0.0, %v534
          %v536 = vpop.f32.mrb[0].mxu0
          %v537 = vadd.f32 0.0, %v536
          %538 = vmatprep.mubr.f32.mxu0 0.0
          %539 = vmatmul.mubr.f32.gmra.mrb[0].mxu0 %v439
          %v540 = vpop.f32.mrb[0].mxu0
          %v541 = vadd.f32 0.0, %v540
          %v542 = vpop.f32.mrb[0].mxu0
          %v543 = vadd.f32 0.0, %v542
          %544 = vmatprep.mubr.f32.mxu0 0.0
          %545 = vmatmul.mubr.f32.gmra.mrb[0].mxu0 %v442
          %v546 = vpop.f32.mrb[0].mxu0
          %v547 = vadd.f32 0.0, %v546
          %v548 = vpop.f32.mrb[0].mxu0
          %v549 = vadd.f32 0.0, %v548
          %550 = vmatprep.mubr.f32.mxu0 0.0
          %551 = vmatmul.mubr.f32.gmra.mrb[0].mxu0 %v445
          %v552 = vpop.f32.mrb[0].mxu0
          %v553 = vadd.f32 0.0, %v552
          %v554 = vpop.f32.mrb[0].mxu0
          %v555 = vadd.f32 0.0, %v554
          %556 = vmatprep.mubr.f32.mxu0 0.0
          %557 = vmatmul.mubr.f32.gmra.mrb[0].mxu0 %v448
          %v558 = vpop.f32.mrb[0].mxu0
          %v559 = vadd.f32 0.0, %v558
          %v560 = vpop.f32.mrb[0].mxu0
          %v561 = vadd.f32 0.0, %v560
          %562 = vdwg.mxu0
          %563 = vmatprep.subr.mxu0 %v372
          %564 = vmatpush1.msra.mxu0 %v371
          %565 = vmatprep.subr.mxu0 %v388
          %566 = vmatpush1.msra.mxu0 %v387
          %567 = vmatprep.subr.mxu0 0.0
          %568 = vmatpush1.msra.mxu0 0.0
          %569 = vmatprep.subr.mxu0 0.0
          %570 = vmatpush1.msra.mxu0 0.0
          %571 = vmatprep.subr.mxu0 0.0
          %572 = vmatpush1.msra.mxu0 0.0
          %573 = vmatprep.subr.mxu0 0.0
          %574 = vmatpush1.msra.mxu0 0.0
          %575 = vmatprep.subr.mxu0 0.0
          %576 = vmatpush1.msra.mxu0 0.0
          %577 = vmatprep.subr.mxu0 0.0
          %578 = vmatpush1.msra.mxu0 0.0
          %579 = vmatprep.subr.mxu0 0.0
          %580 = vmatpush1.msra.mxu0 0.0
          %581 = vmatprep.subr.mxu0 0.0
          %582 = vmatpush1.msra.mxu0 0.0
          %583 = vmatprep.subr.mxu0 0.0
          %584 = vmatpush1.msra.mxu0 0.0
          %585 = vmatprep.subr.mxu0 0.0
          %586 = vmatpush1.msra.mxu0 0.0
          %587 = vmatprep.subr.mxu0 0.0
          %588 = vmatpush1.msra.mxu0 0.0
          %589 = vmatprep.subr.mxu0 0.0
          %590 = vmatpush1.msra.mxu0 0.0
          %591 = vmatprep.subr.mxu0 0.0
          %592 = vmatpush1.msra.mxu0 0.0
          %593 = vmatprep.subr.mxu0 0.0
          %594 = vmatpush1.msra.mxu0 0.0
          %595 = vmatprep.subr.mxu0 0.0
          %596 = vmatpush1.msra.mxu0 0.0
          %597 = vmatprep.subr.mxu0 0.0
          %598 = vmatpush1.msra.mxu0 0.0
          %599 = vmatprep.subr.mxu0 0.0
          %600 = vmatpush1.msra.mxu0 0.0
          %601 = vmatprep.subr.mxu0 0.0
          %602 = vmatpush1.msra.mxu0 0.0
          %603 = vmatprep.subr.mxu0 0.0
          %604 = vmatpush1.msra.mxu0 0.0
          %605 = vmatprep.subr.mxu0 0.0
          %606 = vmatpush1.msra.mxu0 0.0
          %607 = vmatprep.subr.mxu0 0.0
          %608 = vmatpush1.msra.mxu0 0.0
          %609 = vmatprep.subr.mxu0 0.0
          %610 = vmatpush1.msra.mxu0 0.0
          %611 = vmatprep.subr.mxu0 0.0
          %612 = vmatpush1.msra.mxu0 0.0
          %613 = vmatprep.subr.mxu0 0.0
          %614 = vmatpush1.msra.mxu0 0.0
          %615 = vmatprep.subr.mxu0 0.0
          %616 = vmatpush1.msra.mxu0 0.0
          %617 = vmatprep.subr.mxu0 0.0
          %618 = vmatpush1.msra.mxu0 0.0
          %619 = vmatprep.subr.mxu0 0.0
          %620 = vmatpush1.msra.mxu0 0.0
          %621 = vmatprep.subr.mxu0 0.0
          %622 = vmatpush1.msra.mxu0 0.0
          %623 = vmatprep.subr.mxu0 0.0
          %624 = vmatpush1.msra.mxu0 0.0
          %625 = vmatprep.subr.mxu0 0.0
          %626 = vmatpush1.msra.mxu0 0.0
          %627 = vmatprep.mubr.f32.mxu0 0.0
          %628 = vmatmul.mubr.f32.gmra.mrb[0].mxu0 %v427
          %v629 = vpop.f32.mrb[0].mxu0
          %v630 = vadd.f32 0.0, %v629
          %v631 = vpop.f32.mrb[0].mxu0
          %v632 = vadd.f32 0.0, %v631
          %633 = vmatprep.mubr.f32.mxu0 0.0
          %634 = vmatmul.mubr.f32.gmra.mrb[0].mxu0 %v430
          %v635 = vpop.f32.mrb[0].mxu0
          %v636 = vadd.f32 0.0, %v635
          %v637 = vpop.f32.mrb[0].mxu0
          %v638 = vadd.f32 0.0, %v637
          %639 = vmatprep.mubr.f32.mxu0 0.0
          %640 = vmatmul.mubr.f32.gmra.mrb[0].mxu0 %v433
          %v641 = vpop.f32.mrb[0].mxu0
          %v642 = vadd.f32 0.0, %v641
          %v643 = vpop.f32.mrb[0].mxu0
          %v644 = vadd.f32 0.0, %v643
          %645 = vmatprep.mubr.f32.mxu0 0.0
          %646 = vmatmul.mubr.f32.gmra.mrb[0].mxu0 %v436
          %v647 = vpop.f32.mrb[0].mxu0
          %v648 = vadd.f32 0.0, %v647
          %v649 = vpop.f32.mrb[0].mxu0
          %v650 = vadd.f32 0.0, %v649
          %651 = vmatprep.mubr.f32.mxu0 0.0
          %652 = vmatmul.mubr.f32.gmra.mrb[0].mxu0 %v439
          %v653 = vpop.f32.mrb[0].mxu0
          %v654 = vadd.f32 0.0, %v653
          %v655 = vpop.f32.mrb[0].mxu0
          %v656 = vadd.f32 0.0, %v655
          %657 = vmatprep.mubr.f32.mxu0 0.0
          %658 = vmatmul.mubr.f32.gmra.mrb[0].mxu0 %v442
          %v659 = vpop.f32.mrb[0].mxu0
          %v660 = vadd.f32 0.0, %v659
          %v661 = vpop.f32.mrb[0].mxu0
          %v662 = vadd.f32 0.0, %v661
          %663 = vmatprep.mubr.f32.mxu0 0.0
          %664 = vmatmul.mubr.f32.gmra.mrb[0].mxu0 %v445
          %v665 = vpop.f32.mrb[0].mxu0
          %v666 = vadd.f32 0.0, %v665
          %v667 = vpop.f32.mrb[0].mxu0
          %v668 = vadd.f32 0.0, %v667
          %669 = vmatprep.mubr.f32.mxu0 0.0
          %670 = vmatmul.mubr.f32.gmra.mrb[0].mxu0 %v448
          %v671 = vpop.f32.mrb[0].mxu0
          %v672 = vadd.f32 0.0, %v671
          %v673 = vpop.f32.mrb[0].mxu0
          %v674 = vadd.f32 0.0, %v673
          %675 = vdwg.mxu0
          %676 = vmatprep.subr.mxu0 %v374
          %677 = vmatpush1.msra.mxu0 %v373
          %678 = vmatprep.subr.mxu0 %v390
          %679 = vmatpush1.msra.mxu0 %v389
          %680 = vmatprep.subr.mxu0 0.0
          %681 = vmatpush1.msra.mxu0 0.0
          %682 = vmatprep.subr.mxu0 0.0
          %683 = vmatpush1.msra.mxu0 0.0
          %684 = vmatprep.subr.mxu0 0.0
          %685 = vmatpush1.msra.mxu0 0.0
          %686 = vmatprep.subr.mxu0 0.0
          %687 = vmatpush1.msra.mxu0 0.0
          %688 = vmatprep.subr.mxu0 0.0
          %689 = vmatpush1.msra.mxu0 0.0
          %690 = vmatprep.subr.mxu0 0.0
          %691 = vmatpush1.msra.mxu0 0.0
          %692 = vmatprep.subr.mxu0 0.0
          %693 = vmatpush1.msra.mxu0 0.0
          %694 = vmatprep.subr.mxu0 0.0
          %695 = vmatpush1.msra.mxu0 0.0
          %696 = vmatprep.subr.mxu0 0.0
          %697 = vmatpush1.msra.mxu0 0.0
          %698 = vmatprep.subr.mxu0 0.0
          %699 = vmatpush1.msra.mxu0 0.0
          %700 = vmatprep.subr.mxu0 0.0
          %701 = vmatpush1.msra.mxu0 0.0
          %702 = vmatprep.subr.mxu0 0.0
          %703 = vmatpush1.msra.mxu0 0.0
          %704 = vmatprep.subr.mxu0 0.0
          %705 = vmatpush1.msra.mxu0 0.0
          %706 = vmatprep.subr.mxu0 0.0
          %707 = vmatpush1.msra.mxu0 0.0
          %708 = vmatprep.subr.mxu0 0.0
          %709 = vmatpush1.msra.mxu0 0.0
          %710 = vmatprep.subr.mxu0 0.0
          %711 = vmatpush1.msra.mxu0 0.0
          %712 = vmatprep.subr.mxu0 0.0
          %713 = vmatpush1.msra.mxu0 0.0
          %714 = vmatprep.subr.mxu0 0.0
          %715 = vmatpush1.msra.mxu0 0.0
          %716 = vmatprep.subr.mxu0 0.0
          %717 = vmatpush1.msra.mxu0 0.0
          %718 = vmatprep.subr.mxu0 0.0
          %719 = vmatpush1.msra.mxu0 0.0
          %720 = vmatprep.subr.mxu0 0.0
          %721 = vmatpush1.msra.mxu0 0.0
          %722 = vmatprep.subr.mxu0 0.0
          %723 = vmatpush1.msra.mxu0 0.0
          %724 = vmatprep.subr.mxu0 0.0
          %725 = vmatpush1.msra.mxu0 0.0
          %726 = vmatprep.subr.mxu0 0.0
          %727 = vmatpush1.msra.mxu0 0.0
          %728 = vmatprep.subr.mxu0 0.0
          %729 = vmatpush1.msra.mxu0 0.0
          %730 = vmatprep.subr.mxu0 0.0
          %731 = vmatpush1.msra.mxu0 0.0
          %732 = vmatprep.subr.mxu0 0.0
          %733 = vmatpush1.msra.mxu0 0.0
          %734 = vmatprep.subr.mxu0 0.0
          %735 = vmatpush1.msra.mxu0 0.0
          %736 = vmatprep.subr.mxu0 0.0
          %737 = vmatpush1.msra.mxu0 0.0
          %738 = vmatprep.subr.mxu0 0.0
          %739 = vmatpush1.msra.mxu0 0.0
          %740 = vmatprep.mubr.f32.mxu0 0.0
          %741 = vmatmul.mubr.f32.gmra.mrb[0].mxu0 %v427
          %v742 = vpop.f32.mrb[0].mxu0
          %v743 = vadd.f32 0.0, %v742
          %v744 = vpop.f32.mrb[0].mxu0
          %v745 = vadd.f32 0.0, %v744
          %746 = vmatprep.mubr.f32.mxu0 0.0
          %747 = vmatmul.mubr.f32.gmra.mrb[0].mxu0 %v430
          %v748 = vpop.f32.mrb[0].mxu0
          %v749 = vadd.f32 0.0, %v748
          %v750 = vpop.f32.mrb[0].mxu0
          %v751 = vadd.f32 0.0, %v750
          %752 = vmatprep.mubr.f32.mxu0 0.0
          %753 = vmatmul.mubr.f32.gmra.mrb[0].mxu0 %v433
          %v754 = vpop.f32.mrb[0].mxu0
          %v755 = vadd.f32 0.0, %v754
          %v756 = vpop.f32.mrb[0].mxu0
          %v757 = vadd.f32 0.0, %v756
          %758 = vmatprep.mubr.f32.mxu0 0.0
          %759 = vmatmul.mubr.f32.gmra.mrb[0].mxu0 %v436
          %v760 = vpop.f32.mrb[0].mxu0
          %v761 = vadd.f32 0.0, %v760
          %v762 = vpop.f32.mrb[0].mxu0
          %v763 = vadd.f32 0.0, %v762
          %764 = vmatprep.mubr.f32.mxu0 0.0
          %765 = vmatmul.mubr.f32.gmra.mrb[0].mxu0 %v439
          %v766 = vpop.f32.mrb[0].mxu0
          %v767 = vadd.f32 0.0, %v766
          %v768 = vpop.f32.mrb[0].mxu0
          %v769 = vadd.f32 0.0, %v768
          %770 = vmatprep.mubr.f32.mxu0 0.0
          %771 = vmatmul.mubr.f32.gmra.mrb[0].mxu0 %v442
          %v772 = vpop.f32.mrb[0].mxu0
          %v773 = vadd.f32 0.0, %v772
          %v774 = vpop.f32.mrb[0].mxu0
          %v775 = vadd.f32 0.0, %v774
          %776 = vmatprep.mubr.f32.mxu0 0.0
          %777 = vmatmul.mubr.f32.gmra.mrb[0].mxu0 %v445
          %v778 = vpop.f32.mrb[0].mxu0
          %v779 = vadd.f32 0.0, %v778
          %v780 = vpop.f32.mrb[0].mxu0
          %v781 = vadd.f32 0.0, %v780
          %782 = vmatprep.mubr.f32.mxu0 0.0
          %783 = vmatmul.mubr.f32.gmra.mrb[0].mxu0 %v448
          %v784 = vpop.f32.mrb[0].mxu0
          %v785 = vadd.f32 0.0, %v784
          %v786 = vpop.f32.mrb[0].mxu0
          %v787 = vadd.f32 0.0, %v786
          %788 = vdwg.mxu0
          %789 = vmatprep.subr.mxu0 %v376
          %790 = vmatpush1.msra.mxu0 %v375
          %791 = vmatprep.subr.mxu0 %v392
          %792 = vmatpush1.msra.mxu0 %v391
          %793 = vmatprep.subr.mxu0 0.0
          %794 = vmatpush1.msra.mxu0 0.0
          %795 = vmatprep.subr.mxu0 0.0
          %796 = vmatpush1.msra.mxu0 0.0
          %797 = vmatprep.subr.mxu0 0.0
          %798 = vmatpush1.msra.mxu0 0.0
          %799 = vmatprep.subr.mxu0 0.0
          %800 = vmatpush1.msra.mxu0 0.0
          %801 = vmatprep.subr.mxu0 0.0
          %802 = vmatpush1.msra.mxu0 0.0
          %803 = vmatprep.subr.mxu0 0.0
          %804 = vmatpush1.msra.mxu0 0.0
          %805 = vmatprep.subr.mxu0 0.0
          %806 = vmatpush1.msra.mxu0 0.0
          %807 = vmatprep.subr.mxu0 0.0
          %808 = vmatpush1.msra.mxu0 0.0
          %809 = vmatprep.subr.mxu0 0.0
          %810 = vmatpush1.msra.mxu0 0.0
          %811 = vmatprep.subr.mxu0 0.0
          %812 = vmatpush1.msra.mxu0 0.0
          %813 = vmatprep.subr.mxu0 0.0
          %814 = vmatpush1.msra.mxu0 0.0
          %815 = vmatprep.subr.mxu0 0.0
          %816 = vmatpush1.msra.mxu0 0.0
          %817 = vmatprep.subr.mxu0 0.0
          %818 = vmatpush1.msra.mxu0 0.0
          %819 = vmatprep.subr.mxu0 0.0
          %820 = vmatpush1.msra.mxu0 0.0
          %821 = vmatprep.subr.mxu0 0.0
          %822 = vmatpush1.msra.mxu0 0.0
          %823 = vmatprep.subr.mxu0 0.0
          %824 = vmatpush1.msra.mxu0 0.0
          %825 = vmatprep.subr.mxu0 0.0
          %826 = vmatpush1.msra.mxu0 0.0
          %827 = vmatprep.subr.mxu0 0.0
          %828 = vmatpush1.msra.mxu0 0.0
          %829 = vmatprep.subr.mxu0 0.0
          %830 = vmatpush1.msra.mxu0 0.0
          %831 = vmatprep.subr.mxu0 0.0
          %832 = vmatpush1.msra.mxu0 0.0
          %833 = vmatprep.subr.mxu0 0.0
          %834 = vmatpush1.msra.mxu0 0.0
          %835 = vmatprep.subr.mxu0 0.0
          %836 = vmatpush1.msra.mxu0 0.0
          %837 = vmatprep.subr.mxu0 0.0
          %838 = vmatpush1.msra.mxu0 0.0
          %839 = vmatprep.subr.mxu0 0.0
          %840 = vmatpush1.msra.mxu0 0.0
          %841 = vmatprep.subr.mxu0 0.0
          %842 = vmatpush1.msra.mxu0 0.0
          %843 = vmatprep.subr.mxu0 0.0
          %844 = vmatpush1.msra.mxu0 0.0
          %845 = vmatprep.subr.mxu0 0.0
          %846 = vmatpush1.msra.mxu0 0.0
          %847 = vmatprep.subr.mxu0 0.0
          %848 = vmatpush1.msra.mxu0 0.0
          %849 = vmatprep.subr.mxu0 0.0
          %850 = vmatpush1.msra.mxu0 0.0
          %851 = vmatprep.subr.mxu0 0.0
          %852 = vmatpush1.msra.mxu0 0.0
          %853 = vmatprep.mubr.f32.mxu0 0.0
          %854 = vmatmul.mubr.f32.gmra.mrb[0].mxu0 %v427
          %v855 = vpop.f32.mrb[0].mxu0
          %v856 = vadd.f32 0.0, %v855
          %v857 = vpop.f32.mrb[0].mxu0
          %v858 = vadd.f32 0.0, %v857
          %859 = vmatprep.mubr.f32.mxu0 0.0
          %860 = vmatmul.mubr.f32.gmra.mrb[0].mxu0 %v430
          %v861 = vpop.f32.mrb[0].mxu0
          %v862 = vadd.f32 0.0, %v861
          %v863 = vpop.f32.mrb[0].mxu0
          %v864 = vadd.f32 0.0, %v863
          %865 = vmatprep.mubr.f32.mxu0 0.0
          %866 = vmatmul.mubr.f32.gmra.mrb[0].mxu0 %v433
          %v867 = vpop.f32.mrb[0].mxu0
          %v868 = vadd.f32 0.0, %v867
          %v869 = vpop.f32.mrb[0].mxu0
          %v870 = vadd.f32 0.0, %v869
          %871 = vmatprep.mubr.f32.mxu0 0.0
          %872 = vmatmul.mubr.f32.gmra.mrb[0].mxu0 %v436
          %v873 = vpop.f32.mrb[0].mxu0
          %v874 = vadd.f32 0.0, %v873
          %v875 = vpop.f32.mrb[0].mxu0
          %v876 = vadd.f32 0.0, %v875
          %877 = vmatprep.mubr.f32.mxu0 0.0
          %878 = vmatmul.mubr.f32.gmra.mrb[0].mxu0 %v439
          %v879 = vpop.f32.mrb[0].mxu0
          %v880 = vadd.f32 0.0, %v879
          %v881 = vpop.f32.mrb[0].mxu0
          %v882 = vadd.f32 0.0, %v881
          %883 = vmatprep.mubr.f32.mxu0 0.0
          %884 = vmatmul.mubr.f32.gmra.mrb[0].mxu0 %v442
          %v885 = vpop.f32.mrb[0].mxu0
          %v886 = vadd.f32 0.0, %v885
          %v887 = vpop.f32.mrb[0].mxu0
          %v888 = vadd.f32 0.0, %v887
          %889 = vmatprep.mubr.f32.mxu0 0.0
          %890 = vmatmul.mubr.f32.gmra.mrb[0].mxu0 %v445
          %v891 = vpop.f32.mrb[0].mxu0
          %v892 = vadd.f32 0.0, %v891
          %v893 = vpop.f32.mrb[0].mxu0
          %v894 = vadd.f32 0.0, %v893
          %895 = vmatprep.mubr.f32.mxu0 0.0
          %896 = vmatmul.mubr.f32.gmra.mrb[0].mxu0 %v448
          %v897 = vpop.f32.mrb[0].mxu0
          %v898 = vadd.f32 0.0, %v897
          %v899 = vpop.f32.mrb[0].mxu0
          %v900 = vadd.f32 0.0, %v899
          %901 = vdwg.mxu0
          %902 = vmatprep.subr.mxu0 %v378
          %903 = vmatpush1.msra.mxu0 %v377
          %904 = vmatprep.subr.mxu0 %v394
          %905 = vmatpush1.msra.mxu0 %v393
          %906 = vmatprep.subr.mxu0 0.0
          %907 = vmatpush1.msra.mxu0 0.0
          %908 = vmatprep.subr.mxu0 0.0
          %909 = vmatpush1.msra.mxu0 0.0
          %910 = vmatprep.subr.mxu0 0.0
          %911 = vmatpush1.msra.mxu0 0.0
          %912 = vmatprep.subr.mxu0 0.0
          %913 = vmatpush1.msra.mxu0 0.0
          %914 = vmatprep.subr.mxu0 0.0
          %915 = vmatpush1.msra.mxu0 0.0
          %916 = vmatprep.subr.mxu0 0.0
          %917 = vmatpush1.msra.mxu0 0.0
          %918 = vmatprep.subr.mxu0 0.0
          %919 = vmatpush1.msra.mxu0 0.0
          %920 = vmatprep.subr.mxu0 0.0
          %921 = vmatpush1.msra.mxu0 0.0
          %922 = vmatprep.subr.mxu0 0.0
          %923 = vmatpush1.msra.mxu0 0.0
          %924 = vmatprep.subr.mxu0 0.0
          %925 = vmatpush1.msra.mxu0 0.0
          %926 = vmatprep.subr.mxu0 0.0
          %927 = vmatpush1.msra.mxu0 0.0
          %928 = vmatprep.subr.mxu0 0.0
          %929 = vmatpush1.msra.mxu0 0.0
          %930 = vmatprep.subr.mxu0 0.0
          %931 = vmatpush1.msra.mxu0 0.0
          %932 = vmatprep.subr.mxu0 0.0
          %933 = vmatpush1.msra.mxu0 0.0
          %934 = vmatprep.subr.mxu0 0.0
          %935 = vmatpush1.msra.mxu0 0.0
          %936 = vmatprep.subr.mxu0 0.0
          %937 = vmatpush1.msra.mxu0 0.0
          %938 = vmatprep.subr.mxu0 0.0
          %939 = vmatpush1.msra.mxu0 0.0
          %940 = vmatprep.subr.mxu0 0.0
          %941 = vmatpush1.msra.mxu0 0.0
          %942 = vmatprep.subr.mxu0 0.0
          %943 = vmatpush1.msra.mxu0 0.0
          %944 = vmatprep.subr.mxu0 0.0
          %945 = vmatpush1.msra.mxu0 0.0
          %946 = vmatprep.subr.mxu0 0.0
          %947 = vmatpush1.msra.mxu0 0.0
          %948 = vmatprep.subr.mxu0 0.0
          %949 = vmatpush1.msra.mxu0 0.0
          %950 = vmatprep.subr.mxu0 0.0
          %951 = vmatpush1.msra.mxu0 0.0
          %952 = vmatprep.subr.mxu0 0.0
          %953 = vmatpush1.msra.mxu0 0.0
          %954 = vmatprep.subr.mxu0 0.0
          %955 = vmatpush1.msra.mxu0 0.0
          %956 = vmatprep.subr.mxu0 0.0
          %957 = vmatpush1.msra.mxu0 0.0
          %958 = vmatprep.subr.mxu0 0.0
          %959 = vmatpush1.msra.mxu0 0.0
          %960 = vmatprep.subr.mxu0 0.0
          %961 = vmatpush1.msra.mxu0 0.0
          %962 = vmatprep.subr.mxu0 0.0
          %963 = vmatpush1.msra.mxu0 0.0
          %964 = vmatprep.subr.mxu0 0.0
          %965 = vmatpush1.msra.mxu0 0.0
          %966 = vmatprep.mubr.f32.mxu0 0.0
          %967 = vmatmul.mubr.f32.gmra.mrb[0].mxu0 %v427
          %v968 = vpop.f32.mrb[0].mxu0
          %v969 = vadd.f32 0.0, %v968
          %v970 = vpop.f32.mrb[0].mxu0
          %v971 = vadd.f32 0.0, %v970
          %972 = vmatprep.mubr.f32.mxu0 0.0
          %973 = vmatmul.mubr.f32.gmra.mrb[0].mxu0 %v430
          %v974 = vpop.f32.mrb[0].mxu0
          %v975 = vadd.f32 0.0, %v974
          %v976 = vpop.f32.mrb[0].mxu0
          %v977 = vadd.f32 0.0, %v976
          %978 = vmatprep.mubr.f32.mxu0 0.0
          %979 = vmatmul.mubr.f32.gmra.mrb[0].mxu0 %v433
          %v980 = vpop.f32.mrb[0].mxu0
          %v981 = vadd.f32 0.0, %v980
          %v982 = vpop.f32.mrb[0].mxu0
          %v983 = vadd.f32 0.0, %v982
          %984 = vmatprep.mubr.f32.mxu0 0.0
          %985 = vmatmul.mubr.f32.gmra.mrb[0].mxu0 %v436
          %v986 = vpop.f32.mrb[0].mxu0
          %v987 = vadd.f32 0.0, %v986
          %v988 = vpop.f32.mrb[0].mxu0
          %v989 = vadd.f32 0.0, %v988
          %990 = vmatprep.mubr.f32.mxu0 0.0
          %991 = vmatmul.mubr.f32.gmra.mrb[0].mxu0 %v439
          %v992 = vpop.f32.mrb[0].mxu0
          %v993 = vadd.f32 0.0, %v992
          %v994 = vpop.f32.mrb[0].mxu0
          %v995 = vadd.f32 0.0, %v994
          %996 = vmatprep.mubr.f32.mxu0 0.0
          %997 = vmatmul.mubr.f32.gmra.mrb[0].mxu0 %v442
          %v998 = vpop.f32.mrb[0].mxu0
          %v999 = vadd.f32 0.0, %v998
          %v1000 = vpop.f32.mrb[0].mxu0
          %v1001 = vadd.f32 0.0, %v1000
          %1002 = vmatprep.mubr.f32.mxu0 0.0
          %1003 = vmatmul.mubr.f32.gmra.mrb[0].mxu0 %v445
          %v1004 = vpop.f32.mrb[0].mxu0
          %v1005 = vadd.f32 0.0, %v1004
          %v1006 = vpop.f32.mrb[0].mxu0
          %v1007 = vadd.f32 0.0, %v1006
          %1008 = vmatprep.mubr.f32.mxu0 0.0
          %1009 = vmatmul.mubr.f32.gmra.mrb[0].mxu0 %v448
          %v1010 = vpop.f32.mrb[0].mxu0
          %v1011 = vadd.f32 0.0, %v1010
          %v1012 = vpop.f32.mrb[0].mxu0
          %v1013 = vadd.f32 0.0, %v1012
          %1014 = vdwg.mxu0
          %1015 = vmatprep.subr.mxu0 %v380
          %1016 = vmatpush1.msra.mxu0 %v379
          %1017 = vmatprep.subr.mxu0 %v396
          %1018 = vmatpush1.msra.mxu0 %v395
          %1019 = vmatprep.subr.mxu0 0.0
          %1020 = vmatpush1.msra.mxu0 0.0
          %1021 = vmatprep.subr.mxu0 0.0
          %1022 = vmatpush1.msra.mxu0 0.0
          %1023 = vmatprep.subr.mxu0 0.0
          %1024 = vmatpush1.msra.mxu0 0.0
          %1025 = vmatprep.subr.mxu0 0.0
          %1026 = vmatpush1.msra.mxu0 0.0
          %1027 = vmatprep.subr.mxu0 0.0
          %1028 = vmatpush1.msra.mxu0 0.0
          %1029 = vmatprep.subr.mxu0 0.0
          %1030 = vmatpush1.msra.mxu0 0.0
          %1031 = vmatprep.subr.mxu0 0.0
          %1032 = vmatpush1.msra.mxu0 0.0
          %1033 = vmatprep.subr.mxu0 0.0
          %1034 = vmatpush1.msra.mxu0 0.0
          %1035 = vmatprep.subr.mxu0 0.0
          %1036 = vmatpush1.msra.mxu0 0.0
          %1037 = vmatprep.subr.mxu0 0.0
          %1038 = vmatpush1.msra.mxu0 0.0
          %1039 = vmatprep.subr.mxu0 0.0
          %1040 = vmatpush1.msra.mxu0 0.0
          %1041 = vmatprep.subr.mxu0 0.0
          %1042 = vmatpush1.msra.mxu0 0.0
          %1043 = vmatprep.subr.mxu0 0.0
          %1044 = vmatpush1.msra.mxu0 0.0
          %1045 = vmatprep.subr.mxu0 0.0
          %1046 = vmatpush1.msra.mxu0 0.0
          %1047 = vmatprep.subr.mxu0 0.0
          %1048 = vmatpush1.msra.mxu0 0.0
          %1049 = vmatprep.subr.mxu0 0.0
          %1050 = vmatpush1.msra.mxu0 0.0
          %1051 = vmatprep.subr.mxu0 0.0
          %1052 = vmatpush1.msra.mxu0 0.0
          %1053 = vmatprep.subr.mxu0 0.0
          %1054 = vmatpush1.msra.mxu0 0.0
          %1055 = vmatprep.subr.mxu0 0.0
          %1056 = vmatpush1.msra.mxu0 0.0
          %1057 = vmatprep.subr.mxu0 0.0
          %1058 = vmatpush1.msra.mxu0 0.0
          %1059 = vmatprep.subr.mxu0 0.0
          %1060 = vmatpush1.msra.mxu0 0.0
          %1061 = vmatprep.subr.mxu0 0.0
          %1062 = vmatpush1.msra.mxu0 0.0
          %1063 = vmatprep.subr.mxu0 0.0
          %1064 = vmatpush1.msra.mxu0 0.0
          %1065 = vmatprep.subr.mxu0 0.0
          %1066 = vmatpush1.msra.mxu0 0.0
          %1067 = vmatprep.subr.mxu0 0.0
          %1068 = vmatpush1.msra.mxu0 0.0
          %1069 = vmatprep.subr.mxu0 0.0
          %1070 = vmatpush1.msra.mxu0 0.0
          %1071 = vmatprep.subr.mxu0 0.0
          %1072 = vmatpush1.msra.mxu0 0.0
          %1073 = vmatprep.subr.mxu0 0.0
          %1074 = vmatpush1.msra.mxu0 0.0
          %1075 = vmatprep.subr.mxu0 0.0
          %1076 = vmatpush1.msra.mxu0 0.0
          %1077 = vmatprep.subr.mxu0 0.0
          %1078 = vmatpush1.msra.mxu0 0.0
          %1079 = vmatprep.mubr.f32.mxu0 0.0
          %1080 = vmatmul.mubr.f32.gmra.mrb[0].mxu0 %v427
          %v1081 = vpop.f32.mrb[0].mxu0
          %v1082 = vadd.f32 0.0, %v1081
          %v1083 = vpop.f32.mrb[0].mxu0
          %v1084 = vadd.f32 0.0, %v1083
          %1085 = vmatprep.mubr.f32.mxu0 0.0
          %1086 = vmatmul.mubr.f32.gmra.mrb[0].mxu0 %v430
          %v1087 = vpop.f32.mrb[0].mxu0
          %v1088 = vadd.f32 0.0, %v1087
          %v1089 = vpop.f32.mrb[0].mxu0
          %v1090 = vadd.f32 0.0, %v1089
          %1091 = vmatprep.mubr.f32.mxu0 0.0
          %1092 = vmatmul.mubr.f32.gmra.mrb[0].mxu0 %v433
          %v1093 = vpop.f32.mrb[0].mxu0
          %v1094 = vadd.f32 0.0, %v1093
          %v1095 = vpop.f32.mrb[0].mxu0
          %v1096 = vadd.f32 0.0, %v1095
          %1097 = vmatprep.mubr.f32.mxu0 0.0
          %1098 = vmatmul.mubr.f32.gmra.mrb[0].mxu0 %v436
          %v1099 = vpop.f32.mrb[0].mxu0
          %v1100 = vadd.f32 0.0, %v1099
          %v1101 = vpop.f32.mrb[0].mxu0
          %v1102 = vadd.f32 0.0, %v1101
          %1103 = vmatprep.mubr.f32.mxu0 0.0
          %1104 = vmatmul.mubr.f32.gmra.mrb[0].mxu0 %v439
          %v1105 = vpop.f32.mrb[0].mxu0
          %v1106 = vadd.f32 0.0, %v1105
          %v1107 = vpop.f32.mrb[0].mxu0
          %v1108 = vadd.f32 0.0, %v1107
          %1109 = vmatprep.mubr.f32.mxu0 0.0
          %1110 = vmatmul.mubr.f32.gmra.mrb[0].mxu0 %v442
          %v1111 = vpop.f32.mrb[0].mxu0
          %v1112 = vadd.f32 0.0, %v1111
          %v1113 = vpop.f32.mrb[0].mxu0
          %v1114 = vadd.f32 0.0, %v1113
          %1115 = vmatprep.mubr.f32.mxu0 0.0
          %1116 = vmatmul.mubr.f32.gmra.mrb[0].mxu0 %v445
          %v1117 = vpop.f32.mrb[0].mxu0
          %v1118 = vadd.f32 0.0, %v1117
          %v1119 = vpop.f32.mrb[0].mxu0
          %v1120 = vadd.f32 0.0, %v1119
          %1121 = vmatprep.mubr.f32.mxu0 0.0
          %1122 = vmatmul.mubr.f32.gmra.mrb[0].mxu0 %v448
          %v1123 = vpop.f32.mrb[0].mxu0
          %v1124 = vadd.f32 0.0, %v1123
          %v1125 = vpop.f32.mrb[0].mxu0
          %v1126 = vadd.f32 0.0, %v1125
          %1127 = vdwg.mxu0
          %1128 = vmatprep.subr.mxu0 %v382
          %1129 = vmatpush1.msra.mxu0 %v381
          %1130 = vmatprep.subr.mxu0 %v398
          %1131 = vmatpush1.msra.mxu0 %v397
          %1132 = vmatprep.subr.mxu0 0.0
          %1133 = vmatpush1.msra.mxu0 0.0
          %1134 = vmatprep.subr.mxu0 0.0
          %1135 = vmatpush1.msra.mxu0 0.0
          %1136 = vmatprep.subr.mxu0 0.0
          %1137 = vmatpush1.msra.mxu0 0.0
          %1138 = vmatprep.subr.mxu0 0.0
          %1139 = vmatpush1.msra.mxu0 0.0
          %1140 = vmatprep.subr.mxu0 0.0
          %1141 = vmatpush1.msra.mxu0 0.0
          %1142 = vmatprep.subr.mxu0 0.0
          %1143 = vmatpush1.msra.mxu0 0.0
          %1144 = vmatprep.subr.mxu0 0.0
          %1145 = vmatpush1.msra.mxu0 0.0
          %1146 = vmatprep.subr.mxu0 0.0
          %1147 = vmatpush1.msra.mxu0 0.0
          %1148 = vmatprep.subr.mxu0 0.0
          %1149 = vmatpush1.msra.mxu0 0.0
          %1150 = vmatprep.subr.mxu0 0.0
          %1151 = vmatpush1.msra.mxu0 0.0
          %1152 = vmatprep.subr.mxu0 0.0
          %1153 = vmatpush1.msra.mxu0 0.0
          %1154 = vmatprep.subr.mxu0 0.0
          %1155 = vmatpush1.msra.mxu0 0.0
          %1156 = vmatprep.subr.mxu0 0.0
          %1157 = vmatpush1.msra.mxu0 0.0
          %1158 = vmatprep.subr.mxu0 0.0
          %1159 = vmatpush1.msra.mxu0 0.0
          %1160 = vmatprep.subr.mxu0 0.0
          %1161 = vmatpush1.msra.mxu0 0.0
          %1162 = vmatprep.subr.mxu0 0.0
          %1163 = vmatpush1.msra.mxu0 0.0
          %1164 = vmatprep.subr.mxu0 0.0
          %1165 = vmatpush1.msra.mxu0 0.0
          %1166 = vmatprep.subr.mxu0 0.0
          %1167 = vmatpush1.msra.mxu0 0.0
          %1168 = vmatprep.subr.mxu0 0.0
          %1169 = vmatpush1.msra.mxu0 0.0
          %1170 = vmatprep.subr.mxu0 0.0
          %1171 = vmatpush1.msra.mxu0 0.0
          %1172 = vmatprep.subr.mxu0 0.0
          %1173 = vmatpush1.msra.mxu0 0.0
          %1174 = vmatprep.subr.mxu0 0.0
          %1175 = vmatpush1.msra.mxu0 0.0
          %1176 = vmatprep.subr.mxu0 0.0
          %1177 = vmatpush1.msra.mxu0 0.0
          %1178 = vmatprep.subr.mxu0 0.0
          %1179 = vmatpush1.msra.mxu0 0.0
          %1180 = vmatprep.subr.mxu0 0.0
          %1181 = vmatpush1.msra.mxu0 0.0
          %1182 = vmatprep.subr.mxu0 0.0
          %1183 = vmatpush1.msra.mxu0 0.0
          %1184 = vmatprep.subr.mxu0 0.0
          %1185 = vmatpush1.msra.mxu0 0.0
          %1186 = vmatprep.subr.mxu0 0.0
          %1187 = vmatpush1.msra.mxu0 0.0
          %1188 = vmatprep.subr.mxu0 0.0
          %1189 = vmatpush1.msra.mxu0 0.0
          %1190 = vmatprep.subr.mxu0 0.0
          %1191 = vmatpush1.msra.mxu0 0.0
          %1192 = vmatprep.mubr.f32.mxu0 0.0
          %1193 = vmatmul.mubr.f32.gmra.mrb[0].mxu0 %v427
          %v1194 = vpop.f32.mrb[0].mxu0
          %v1195 = vadd.f32 0.0, %v1194
          %v1196 = vpop.f32.mrb[0].mxu0
          %v1197 = vadd.f32 0.0, %v1196
          %1198 = vmatprep.mubr.f32.mxu0 0.0
          %1199 = vmatmul.mubr.f32.gmra.mrb[0].mxu0 %v430
          %v1200 = vpop.f32.mrb[0].mxu0
          %v1201 = vadd.f32 0.0, %v1200
          %v1202 = vpop.f32.mrb[0].mxu0
          %v1203 = vadd.f32 0.0, %v1202
          %1204 = vmatprep.mubr.f32.mxu0 0.0
          %1205 = vmatmul.mubr.f32.gmra.mrb[0].mxu0 %v433
          %v1206 = vpop.f32.mrb[0].mxu0
          %v1207 = vadd.f32 0.0, %v1206
          %v1208 = vpop.f32.mrb[0].mxu0
          %v1209 = vadd.f32 0.0, %v1208
          %1210 = vmatprep.mubr.f32.mxu0 0.0
          %1211 = vmatmul.mubr.f32.gmra.mrb[0].mxu0 %v436
          %v1212 = vpop.f32.mrb[0].mxu0
          %v1213 = vadd.f32 0.0, %v1212
          %v1214 = vpop.f32.mrb[0].mxu0
          %v1215 = vadd.f32 0.0, %v1214
          %1216 = vmatprep.mubr.f32.mxu0 0.0
          %1217 = vmatmul.mubr.f32.gmra.mrb[0].mxu0 %v439
          %v1218 = vpop.f32.mrb[0].mxu0
          %v1219 = vadd.f32 0.0, %v1218
          %v1220 = vpop.f32.mrb[0].mxu0
          %v1221 = vadd.f32 0.0, %v1220
          %1222 = vmatprep.mubr.f32.mxu0 0.0
          %1223 = vmatmul.mubr.f32.gmra.mrb[0].mxu0 %v442
          %v1224 = vpop.f32.mrb[0].mxu0
          %v1225 = vadd.f32 0.0, %v1224
          %v1226 = vpop.f32.mrb[0].mxu0
          %v1227 = vadd.f32 0.0, %v1226
          %1228 = vmatprep.mubr.f32.mxu0 0.0
          %1229 = vmatmul.mubr.f32.gmra.mrb[0].mxu0 %v445
          %v1230 = vpop.f32.mrb[0].mxu0
          %v1231 = vadd.f32 0.0, %v1230
          %v1232 = vpop.f32.mrb[0].mxu0
          %v1233 = vadd.f32 0.0, %v1232
          %1234 = vmatprep.mubr.f32.mxu0 0.0
          %1235 = vmatmul.mubr.f32.gmra.mrb[0].mxu0 %v448
          %v1236 = vpop.f32.mrb[0].mxu0
          %v1237 = vadd.f32 0.0, %v1236
          %v1238 = vpop.f32.mrb[0].mxu0
          %v1239 = vadd.f32 0.0, %v1238
          %1240 = vdwg.mxu0
          %1241 = vmatprep.subr.mxu0 %v384
          %1242 = vmatpush1.msra.mxu0 %v383
          %1243 = vmatprep.subr.mxu0 %v400
          %1244 = vmatpush1.msra.mxu0 %v399
          %1245 = vmatprep.subr.mxu0 0.0
          %1246 = vmatpush1.msra.mxu0 0.0
          %1247 = vmatprep.subr.mxu0 0.0
          %1248 = vmatpush1.msra.mxu0 0.0
          %1249 = vmatprep.subr.mxu0 0.0
          %1250 = vmatpush1.msra.mxu0 0.0
          %1251 = vmatprep.subr.mxu0 0.0
          %1252 = vmatpush1.msra.mxu0 0.0
          %1253 = vmatprep.subr.mxu0 0.0
          %1254 = vmatpush1.msra.mxu0 0.0
          %1255 = vmatprep.subr.mxu0 0.0
          %1256 = vmatpush1.msra.mxu0 0.0
          %1257 = vmatprep.subr.mxu0 0.0
          %1258 = vmatpush1.msra.mxu0 0.0
          %1259 = vmatprep.subr.mxu0 0.0
          %1260 = vmatpush1.msra.mxu0 0.0
          %1261 = vmatprep.subr.mxu0 0.0
          %1262 = vmatpush1.msra.mxu0 0.0
          %1263 = vmatprep.subr.mxu0 0.0
          %1264 = vmatpush1.msra.mxu0 0.0
          %1265 = vmatprep.subr.mxu0 0.0
          %1266 = vmatpush1.msra.mxu0 0.0
          %1267 = vmatprep.subr.mxu0 0.0
          %1268 = vmatpush1.msra.mxu0 0.0
          %1269 = vmatprep.subr.mxu0 0.0
          %1270 = vmatpush1.msra.mxu0 0.0
          %1271 = vmatprep.subr.mxu0 0.0
          %1272 = vmatpush1.msra.mxu0 0.0
          %1273 = vmatprep.subr.mxu0 0.0
          %1274 = vmatpush1.msra.mxu0 0.0
          %1275 = vmatprep.subr.mxu0 0.0
          %1276 = vmatpush1.msra.mxu0 0.0
          %1277 = vmatprep.subr.mxu0 0.0
          %1278 = vmatpush1.msra.mxu0 0.0
          %1279 = vmatprep.subr.mxu0 0.0
          %1280 = vmatpush1.msra.mxu0 0.0
          %1281 = vmatprep.subr.mxu0 0.0
          %1282 = vmatpush1.msra.mxu0 0.0
          %1283 = vmatprep.subr.mxu0 0.0
          %1284 = vmatpush1.msra.mxu0 0.0
          %1285 = vmatprep.subr.mxu0 0.0
          %1286 = vmatpush1.msra.mxu0 0.0
          %1287 = vmatprep.subr.mxu0 0.0
          %1288 = vmatpush1.msra.mxu0 0.0
          %1289 = vmatprep.subr.mxu0 0.0
          %1290 = vmatpush1.msra.mxu0 0.0
          %1291 = vmatprep.subr.mxu0 0.0
          %1292 = vmatpush1.msra.mxu0 0.0
          %1293 = vmatprep.subr.mxu0 0.0
          %1294 = vmatpush1.msra.mxu0 0.0
          %1295 = vmatprep.subr.mxu0 0.0
          %1296 = vmatpush1.msra.mxu0 0.0
          %1297 = vmatprep.subr.mxu0 0.0
          %1298 = vmatpush1.msra.mxu0 0.0
          %1299 = vmatprep.subr.mxu0 0.0
          %1300 = vmatpush1.msra.mxu0 0.0
          %1301 = vmatprep.subr.mxu0 0.0
          %1302 = vmatpush1.msra.mxu0 0.0
          %1303 = vmatprep.subr.mxu0 0.0
          %1304 = vmatpush1.msra.mxu0 0.0
          %1305 = vmatprep.mubr.f32.mxu0 0.0
          %1306 = vmatmul.mubr.f32.gmra.mrb[0].mxu0 %v427
          %v1307 = vpop.f32.mrb[0].mxu0
          %v1308 = vadd.f32 0.0, %v1307
          %v1309 = vpop.f32.mrb[0].mxu0
          %v1310 = vadd.f32 0.0, %v1309
          %1311 = vmatprep.mubr.f32.mxu0 0.0
          %1312 = vmatmul.mubr.f32.gmra.mrb[0].mxu0 %v430
          %v1313 = vpop.f32.mrb[0].mxu0
          %v1314 = vadd.f32 0.0, %v1313
          %v1315 = vpop.f32.mrb[0].mxu0
          %v1316 = vadd.f32 0.0, %v1315
          %1317 = vmatprep.mubr.f32.mxu0 0.0
          %1318 = vmatmul.mubr.f32.gmra.mrb[0].mxu0 %v433
          %v1319 = vpop.f32.mrb[0].mxu0
          %v1320 = vadd.f32 0.0, %v1319
          %v1321 = vpop.f32.mrb[0].mxu0
          %v1322 = vadd.f32 0.0, %v1321
          %1323 = vmatprep.mubr.f32.mxu0 0.0
          %1324 = vmatmul.mubr.f32.gmra.mrb[0].mxu0 %v436
          %v1325 = vpop.f32.mrb[0].mxu0
          %v1326 = vadd.f32 0.0, %v1325
          %v1327 = vpop.f32.mrb[0].mxu0
          %v1328 = vadd.f32 0.0, %v1327
          %1329 = vmatprep.mubr.f32.mxu0 0.0
          %1330 = vmatmul.mubr.f32.gmra.mrb[0].mxu0 %v439
          %v1331 = vpop.f32.mrb[0].mxu0
          %v1332 = vadd.f32 0.0, %v1331
          %v1333 = vpop.f32.mrb[0].mxu0
          %v1334 = vadd.f32 0.0, %v1333
          %1335 = vmatprep.mubr.f32.mxu0 0.0
          %1336 = vmatmul.mubr.f32.gmra.mrb[0].mxu0 %v442
          %v1337 = vpop.f32.mrb[0].mxu0
          %v1338 = vadd.f32 0.0, %v1337
          %v1339 = vpop.f32.mrb[0].mxu0
          %v1340 = vadd.f32 0.0, %v1339
          %1341 = vmatprep.mubr.f32.mxu0 0.0
          %1342 = vmatmul.mubr.f32.gmra.mrb[0].mxu0 %v445
          %v1343 = vpop.f32.mrb[0].mxu0
          %v1344 = vadd.f32 0.0, %v1343
          %v1345 = vpop.f32.mrb[0].mxu0
          %v1346 = vadd.f32 0.0, %v1345
          %1347 = vmatprep.mubr.f32.mxu0 0.0
          %1348 = vmatmul.mubr.f32.gmra.mrb[0].mxu0 %v448
          %v1349 = vpop.f32.mrb[0].mxu0
          %v1350 = vadd.f32 0.0, %v1349
          %v1351 = vpop.f32.mrb[0].mxu0
          %v1352 = vadd.f32 0.0, %v1351
          %1353 = vdwg.mxu0
          %v1354 = vpow.pop %v517
          %v1355 = vpow.pop %v519
          %v1356 = vpow.pop %v630
          %v1357 = vpow.pop %v632
          %v1358 = vpow.pop %v743
          %v1359 = vpow.pop %v745
          %v1360 = vpow.pop %v856
          %v1361 = vpow.pop %v858
          %v1362 = vpow.pop %v969
          %v1363 = vpow.pop %v971
          %v1364 = vpow.pop %v1082
          %v1365 = vpow.pop %v1084
          %v1366 = vpow.pop %v1195
          %v1367 = vpow.pop %v1197
          %v1368 = vpow.pop %v1308
          %v1369 = vpow.pop %v1310
          %v1370 = vpow.pop %v523
          %v1371 = vpow.pop %v525
          %v1372 = vpow.pop %v636
          %v1373 = vpow.pop %v638
          %v1374 = vpow.pop %v749
          %v1375 = vpow.pop %v751
          %v1376 = vpow.pop %v862
          %v1377 = vpow.pop %v864
          %v1378 = vpow.pop %v975
          %v1379 = vpow.pop %v977
          %v1380 = vpow.pop %v1088
          %v1381 = vpow.pop %v1090
          %v1382 = vpow.pop %v1201
          %v1383 = vpow.pop %v1203
          %v1384 = vpow.pop %v1314
          %v1385 = vpow.pop %v1316
          %v1386 = vpow.pop %v529
          %v1387 = vpow.pop %v531
          %v1388 = vpow.pop %v642
          %v1389 = vpow.pop %v644
          %v1390 = vpow.pop %v755
          %v1391 = vpow.pop %v757
          %v1392 = vpow.pop %v868
          %v1393 = vpow.pop %v870
          %v1394 = vpow.pop %v981
          %v1395 = vpow.pop %v983
          %v1396 = vpow.pop %v1094
          %v1397 = vpow.pop %v1096
          %v1398 = vpow.pop %v1207
          %v1399 = vpow.pop %v1209
          %v1400 = vpow.pop %v1320
          %v1401 = vpow.pop %v1322
          %v1402 = vpow.pop %v535
          %v1403 = vpow.pop %v537
          %v1404 = vpow.pop %v648
          %v1405 = vpow.pop %v650
          %v1406 = vpow.pop %v761
          %v1407 = vpow.pop %v763
          %v1408 = vpow.pop %v874
          %v1409 = vpow.pop %v876
          %v1410 = vpow.pop %v987
          %v1411 = vpow.pop %v989
          %v1412 = vpow.pop %v1100
          %v1413 = vpow.pop %v1102
          %v1414 = vpow.pop %v1213
          %v1415 = vpow.pop %v1215
          %v1416 = vpow.pop %v1326
          %v1417 = vpow.pop %v1328
          %v1418 = vpow.pop %v541
          %v1419 = vpow.pop %v543
          %v1420 = vpow.pop %v654
          %v1421 = vpow.pop %v656
          %v1422 = vpow.pop %v767
          %v1423 = vpow.pop %v769
          %v1424 = vpow.pop %v880
          %v1425 = vpow.pop %v882
          %v1426 = vpow.pop %v993
          %v1427 = vpow.pop %v995
          %v1428 = vpow.pop %v1106
          %v1429 = vpow.pop %v1108
          %v1430 = vpow.pop %v1219
          %v1431 = vpow.pop %v1221
          %v1432 = vpow.pop %v1332
          %v1433 = vpow.pop %v1334
          %v1434 = vpow.pop %v547
          %v1435 = vpow.pop %v549
          %v1436 = vpow.pop %v660
          %v1437 = vpow.pop %v662
          %v1438 = vpow.pop %v773
          %v1439 = vpow.pop %v775
          %v1440 = vpow.pop %v886
          %v1441 = vpow.pop %v888
          %v1442 = vpow.pop %v999
          %v1443 = vpow.pop %v1001
          %v1444 = vpow.pop %v1112
          %v1445 = vpow.pop %v1114
          %v1446 = vpow.pop %v1225
          %v1447 = vpow.pop %v1227
          %v1448 = vpow.pop %v1338
          %v1449 = vpow.pop %v1340
          %v1450 = vpow.pop %v553
          %v1451 = vpow.pop %v555
          %v1452 = vpow.pop %v666
          %v1453 = vpow.pop %v668
          %v1454 = vpow.pop %v779
          %v1455 = vpow.pop %v781
          %v1456 = vpow.pop %v892
          %v1457 = vpow.pop %v894
          %v1458 = vpow.pop %v1005
          %v1459 = vpow.pop %v1007
          %v1460 = vpow.pop %v1118
          %v1461 = vpow.pop %v1120
          %v1462 = vpow.pop %v1231
          %v1463 = vpow.pop %v1233
          %v1464 = vpow.pop %v1344
          %v1465 = vpow.pop %v1346
          %v1466 = vpow.pop %v559
          %v1467 = vpow.pop %v561
          %v1468 = vpow.pop %v672
          %v1469 = vpow.pop %v674
          %v1470 = vpow.pop %v785
          %v1471 = vpow.pop %v787
          %v1472 = vpow.pop %v898
          %v1473 = vpow.pop %v900
          %v1474 = vpow.pop %v1011
          %v1475 = vpow.pop %v1013
          %v1476 = vpow.pop %v1124
          %v1477 = vpow.pop %v1126
          %v1478 = vpow.pop %v1237
          %v1479 = vpow.pop %v1239
          %v1480 = vpow.pop %v1350
          %v1481 = vpow.pop %v1352
          %v1482 = vlaneseq
          %v1483 = vshrl.u32 %v1482, 7
          %v1484 = vsub.s32 0, %v1483
          %v1485 = vrot.slane %v401, %v1484
          %v1486 = vlaneseq
          %v1487 = vshrl.u32 %v1486, 7
          %v1488 = vsub.s32 0, %v1487
          %v1489 = vrot.slane %v402, %v1488
          %v1490 = vlaneseq
          %v1491 = vshrl.u32 %v1490, 7
          %v1492 = vsub.s32 0, %v1491
          %v1493 = vrot.slane %v403, %v1492
          %v1494 = vlaneseq
          %v1495 = vshrl.u32 %v1494, 7
          %v1496 = vsub.s32 0, %v1495
          %v1497 = vrot.slane %v404, %v1496
          %v1498 = vlaneseq
          %v1499 = vshrl.u32 %v1498, 7
          %v1500 = vsub.s32 0, %v1499
          %v1501 = vrot.slane %v405, %v1500
          %v1502 = vlaneseq
          %v1503 = vshrl.u32 %v1502, 7
          %v1504 = vsub.s32 0, %v1503
          %v1505 = vrot.slane %v406, %v1504
          %v1506 = vlaneseq
          %v1507 = vshrl.u32 %v1506, 7
          %v1508 = vsub.s32 0, %v1507
          %v1509 = vrot.slane %v407, %v1508
          %v1510 = vlaneseq
          %v1511 = vshrl.u32 %v1510, 7
          %v1512 = vsub.s32 0, %v1511
          %v1513 = vrot.slane %v408, %v1512
          %v1514 = vlaneseq
          %v1515 = vshrl.u32 %v1514, 7
          %v1516 = vsub.s32 0, %v1515
          %v1517 = vrot.slane %v409, %v1516
          %v1518 = vlaneseq
          %v1519 = vshrl.u32 %v1518, 7
          %v1520 = vsub.s32 0, %v1519
          %v1521 = vrot.slane %v410, %v1520
          %v1522 = vlaneseq
          %v1523 = vshrl.u32 %v1522, 7
          %v1524 = vsub.s32 0, %v1523
          %v1525 = vrot.slane %v411, %v1524
          %v1526 = vlaneseq
          %v1527 = vshrl.u32 %v1526, 7
          %v1528 = vsub.s32 0, %v1527
          %v1529 = vrot.slane %v412, %v1528
          %v1530 = vlaneseq
          %v1531 = vshrl.u32 %v1530, 7
          %v1532 = vsub.s32 0, %v1531
          %v1533 = vrot.slane %v413, %v1532
          %v1534 = vlaneseq
          %v1535 = vshrl.u32 %v1534, 7
          %v1536 = vsub.s32 0, %v1535
          %v1537 = vrot.slane %v414, %v1536
          %v1538 = vlaneseq
          %v1539 = vshrl.u32 %v1538, 7
          %v1540 = vsub.s32 0, %v1539
          %v1541 = vrot.slane %v415, %v1540
          %v1542 = vlaneseq
          %v1543 = vshrl.u32 %v1542, 7
          %v1544 = vsub.s32 0, %v1543
          %v1545 = vrot.slane %v416, %v1544
          %1546 = vset.pattern.permute.xlu0 10
          %1547 = vperm.xlu0 %1546, %v417
          %v1548 = vpop.permute.xlu0 %1547
          %1550 = vset.pattern.permute.xlu0 10
          %1551 = vperm.xlu0 %1550, %v418
          %v1552 = vpop.permute.xlu0 %1551
          %1554 = vset.pattern.permute.xlu0 10
          %1555 = vperm.xlu0 %1554, %v419
          %v1556 = vpop.permute.xlu0 %1555
          %1558 = vset.pattern.permute.xlu0 10
          %1559 = vperm.xlu0 %1558, %v420
          %v1560 = vpop.permute.xlu0 %1559
          %1562 = vset.pattern.permute.xlu0 10
          %1563 = vperm.xlu0 %1562, %v421
          %v1564 = vpop.permute.xlu0 %1563
          %1566 = vset.pattern.permute.xlu0 10
          %1567 = vperm.xlu0 %1566, %v422
          %v1568 = vpop.permute.xlu0 %1567
          %1570 = vset.pattern.permute.xlu0 10
          %1571 = vperm.xlu0 %1570, %v423
          %v1572 = vpop.permute.xlu0 %1571
          %1574 = vset.pattern.permute.xlu0 10
          %1575 = vperm.xlu0 %1574, %v424
          %v1576 = vpop.permute.xlu0 %1575
          %vm1578 = vcmp.ge.f32.partialorder %v1485, %v1548
          %vm1579 = vcmp.ge.f32.partialorder %v1489, %v1548
          %vm1580 = vcmp.ge.f32.partialorder %v1493, %v1548
          %vm1581 = vcmp.ge.f32.partialorder %v1497, %v1548
          %vm1582 = vcmp.ge.f32.partialorder %v1501, %v1548
          %vm1583 = vcmp.ge.f32.partialorder %v1505, %v1548
          %vm1584 = vcmp.ge.f32.partialorder %v1509, %v1548
          %vm1585 = vcmp.ge.f32.partialorder %v1513, %v1548
          %vm1586 = vcmp.ge.f32.partialorder %v1517, %v1548
          %vm1587 = vcmp.ge.f32.partialorder %v1521, %v1548
          %vm1588 = vcmp.ge.f32.partialorder %v1525, %v1548
          %vm1589 = vcmp.ge.f32.partialorder %v1529, %v1548
          %vm1590 = vcmp.ge.f32.partialorder %v1533, %v1548
          %vm1591 = vcmp.ge.f32.partialorder %v1537, %v1548
          %vm1592 = vcmp.ge.f32.partialorder %v1541, %v1548
          %vm1593 = vcmp.ge.f32.partialorder %v1545, %v1548
          %vm1594 = vcmp.ge.f32.partialorder %v1485, %v1552
          %vm1595 = vcmp.ge.f32.partialorder %v1489, %v1552
          %vm1596 = vcmp.ge.f32.partialorder %v1493, %v1552
          %vm1597 = vcmp.ge.f32.partialorder %v1497, %v1552
          %vm1598 = vcmp.ge.f32.partialorder %v1501, %v1552
          %vm1599 = vcmp.ge.f32.partialorder %v1505, %v1552
          %vm1600 = vcmp.ge.f32.partialorder %v1509, %v1552
          %vm1601 = vcmp.ge.f32.partialorder %v1513, %v1552
          %vm1602 = vcmp.ge.f32.partialorder %v1517, %v1552
          %vm1603 = vcmp.ge.f32.partialorder %v1521, %v1552
          %vm1604 = vcmp.ge.f32.partialorder %v1525, %v1552
          %vm1605 = vcmp.ge.f32.partialorder %v1529, %v1552
          %vm1606 = vcmp.ge.f32.partialorder %v1533, %v1552
          %vm1607 = vcmp.ge.f32.partialorder %v1537, %v1552
          %vm1608 = vcmp.ge.f32.partialorder %v1541, %v1552
          %vm1609 = vcmp.ge.f32.partialorder %v1545, %v1552
          %vm1610 = vcmp.ge.f32.partialorder %v1485, %v1556
          %vm1611 = vcmp.ge.f32.partialorder %v1489, %v1556
          %vm1612 = vcmp.ge.f32.partialorder %v1493, %v1556
          %vm1613 = vcmp.ge.f32.partialorder %v1497, %v1556
          %vm1614 = vcmp.ge.f32.partialorder %v1501, %v1556
          %vm1615 = vcmp.ge.f32.partialorder %v1505, %v1556
          %vm1616 = vcmp.ge.f32.partialorder %v1509, %v1556
          %vm1617 = vcmp.ge.f32.partialorder %v1513, %v1556
          %vm1618 = vcmp.ge.f32.partialorder %v1517, %v1556
          %vm1619 = vcmp.ge.f32.partialorder %v1521, %v1556
          %vm1620 = vcmp.ge.f32.partialorder %v1525, %v1556
          %vm1621 = vcmp.ge.f32.partialorder %v1529, %v1556
          %vm1622 = vcmp.ge.f32.partialorder %v1533, %v1556
          %vm1623 = vcmp.ge.f32.partialorder %v1537, %v1556
          %vm1624 = vcmp.ge.f32.partialorder %v1541, %v1556
          %vm1625 = vcmp.ge.f32.partialorder %v1545, %v1556
          %vm1626 = vcmp.ge.f32.partialorder %v1485, %v1560
          %vm1627 = vcmp.ge.f32.partialorder %v1489, %v1560
          %vm1628 = vcmp.ge.f32.partialorder %v1493, %v1560
          %vm1629 = vcmp.ge.f32.partialorder %v1497, %v1560
          %vm1630 = vcmp.ge.f32.partialorder %v1501, %v1560
          %vm1631 = vcmp.ge.f32.partialorder %v1505, %v1560
          %vm1632 = vcmp.ge.f32.partialorder %v1509, %v1560
          %vm1633 = vcmp.ge.f32.partialorder %v1513, %v1560
          %vm1634 = vcmp.ge.f32.partialorder %v1517, %v1560
          %vm1635 = vcmp.ge.f32.partialorder %v1521, %v1560
          %vm1636 = vcmp.ge.f32.partialorder %v1525, %v1560
          %vm1637 = vcmp.ge.f32.partialorder %v1529, %v1560
          %vm1638 = vcmp.ge.f32.partialorder %v1533, %v1560
          %vm1639 = vcmp.ge.f32.partialorder %v1537, %v1560
          %vm1640 = vcmp.ge.f32.partialorder %v1541, %v1560
          %vm1641 = vcmp.ge.f32.partialorder %v1545, %v1560
          %vm1642 = vcmp.ge.f32.partialorder %v1485, %v1564
          %vm1643 = vcmp.ge.f32.partialorder %v1489, %v1564
          %vm1644 = vcmp.ge.f32.partialorder %v1493, %v1564
          %vm1645 = vcmp.ge.f32.partialorder %v1497, %v1564
          %vm1646 = vcmp.ge.f32.partialorder %v1501, %v1564
          %vm1647 = vcmp.ge.f32.partialorder %v1505, %v1564
          %vm1648 = vcmp.ge.f32.partialorder %v1509, %v1564
          %vm1649 = vcmp.ge.f32.partialorder %v1513, %v1564
          %vm1650 = vcmp.ge.f32.partialorder %v1517, %v1564
          %vm1651 = vcmp.ge.f32.partialorder %v1521, %v1564
          %vm1652 = vcmp.ge.f32.partialorder %v1525, %v1564
          %vm1653 = vcmp.ge.f32.partialorder %v1529, %v1564
          %vm1654 = vcmp.ge.f32.partialorder %v1533, %v1564
          %vm1655 = vcmp.ge.f32.partialorder %v1537, %v1564
          %vm1656 = vcmp.ge.f32.partialorder %v1541, %v1564
          %vm1657 = vcmp.ge.f32.partialorder %v1545, %v1564
          %vm1658 = vcmp.ge.f32.partialorder %v1485, %v1568
          %vm1659 = vcmp.ge.f32.partialorder %v1489, %v1568
          %vm1660 = vcmp.ge.f32.partialorder %v1493, %v1568
          %vm1661 = vcmp.ge.f32.partialorder %v1497, %v1568
          %vm1662 = vcmp.ge.f32.partialorder %v1501, %v1568
          %vm1663 = vcmp.ge.f32.partialorder %v1505, %v1568
          %vm1664 = vcmp.ge.f32.partialorder %v1509, %v1568
          %vm1665 = vcmp.ge.f32.partialorder %v1513, %v1568
          %vm1666 = vcmp.ge.f32.partialorder %v1517, %v1568
          %vm1667 = vcmp.ge.f32.partialorder %v1521, %v1568
          %vm1668 = vcmp.ge.f32.partialorder %v1525, %v1568
          %vm1669 = vcmp.ge.f32.partialorder %v1529, %v1568
          %vm1670 = vcmp.ge.f32.partialorder %v1533, %v1568
          %vm1671 = vcmp.ge.f32.partialorder %v1537, %v1568
          %vm1672 = vcmp.ge.f32.partialorder %v1541, %v1568
          %vm1673 = vcmp.ge.f32.partialorder %v1545, %v1568
          %vm1674 = vcmp.ge.f32.partialorder %v1485, %v1572
          %vm1675 = vcmp.ge.f32.partialorder %v1489, %v1572
          %vm1676 = vcmp.ge.f32.partialorder %v1493, %v1572
          %vm1677 = vcmp.ge.f32.partialorder %v1497, %v1572
          %vm1678 = vcmp.ge.f32.partialorder %v1501, %v1572
          %vm1679 = vcmp.ge.f32.partialorder %v1505, %v1572
          %vm1680 = vcmp.ge.f32.partialorder %v1509, %v1572
          %vm1681 = vcmp.ge.f32.partialorder %v1513, %v1572
          %vm1682 = vcmp.ge.f32.partialorder %v1517, %v1572
          %vm1683 = vcmp.ge.f32.partialorder %v1521, %v1572
          %vm1684 = vcmp.ge.f32.partialorder %v1525, %v1572
          %vm1685 = vcmp.ge.f32.partialorder %v1529, %v1572
          %vm1686 = vcmp.ge.f32.partialorder %v1533, %v1572
          %vm1687 = vcmp.ge.f32.partialorder %v1537, %v1572
          %vm1688 = vcmp.ge.f32.partialorder %v1541, %v1572
          %vm1689 = vcmp.ge.f32.partialorder %v1545, %v1572
          %vm1690 = vcmp.ge.f32.partialorder %v1485, %v1576
          %vm1691 = vcmp.ge.f32.partialorder %v1489, %v1576
          %vm1692 = vcmp.ge.f32.partialorder %v1493, %v1576
          %vm1693 = vcmp.ge.f32.partialorder %v1497, %v1576
          %vm1694 = vcmp.ge.f32.partialorder %v1501, %v1576
          %vm1695 = vcmp.ge.f32.partialorder %v1505, %v1576
          %vm1696 = vcmp.ge.f32.partialorder %v1509, %v1576
          %vm1697 = vcmp.ge.f32.partialorder %v1513, %v1576
          %vm1698 = vcmp.ge.f32.partialorder %v1517, %v1576
          %vm1699 = vcmp.ge.f32.partialorder %v1521, %v1576
          %vm1700 = vcmp.ge.f32.partialorder %v1525, %v1576
          %vm1701 = vcmp.ge.f32.partialorder %v1529, %v1576
          %vm1702 = vcmp.ge.f32.partialorder %v1533, %v1576
          %vm1703 = vcmp.ge.f32.partialorder %v1537, %v1576
          %vm1704 = vcmp.ge.f32.partialorder %v1541, %v1576
          %vm1705 = vcmp.ge.f32.partialorder %v1545, %v1576
          %1706 = vset.pattern.permute.xlu0 13
          %1707 = vperm.xlu0 %1706, %v417
          %v1708 = vpop.permute.xlu0 %1707
          %1710 = vset.pattern.permute.xlu0 13
          %1711 = vperm.xlu0 %1710, %v418
          %v1712 = vpop.permute.xlu0 %1711
          %1714 = vset.pattern.permute.xlu0 13
          %1715 = vperm.xlu0 %1714, %v419
          %v1716 = vpop.permute.xlu0 %1715
          %1718 = vset.pattern.permute.xlu0 13
          %1719 = vperm.xlu0 %1718, %v420
          %v1720 = vpop.permute.xlu0 %1719
          %1722 = vset.pattern.permute.xlu0 13
          %1723 = vperm.xlu0 %1722, %v421
          %v1724 = vpop.permute.xlu0 %1723
          %1726 = vset.pattern.permute.xlu0 13
          %1727 = vperm.xlu0 %1726, %v422
          %v1728 = vpop.permute.xlu0 %1727
          %1730 = vset.pattern.permute.xlu0 13
          %1731 = vperm.xlu0 %1730, %v423
          %v1732 = vpop.permute.xlu0 %1731
          %1734 = vset.pattern.permute.xlu0 13
          %1735 = vperm.xlu0 %1734, %v424
          %v1736 = vpop.permute.xlu0 %1735
          %vm1738 = vcmp.le.f32.partialorder %v1485, %v1708
          %vm1739 = vcmp.le.f32.partialorder %v1489, %v1708
          %vm1740 = vcmp.le.f32.partialorder %v1493, %v1708
          %vm1741 = vcmp.le.f32.partialorder %v1497, %v1708
          %vm1742 = vcmp.le.f32.partialorder %v1501, %v1708
          %vm1743 = vcmp.le.f32.partialorder %v1505, %v1708
          %vm1744 = vcmp.le.f32.partialorder %v1509, %v1708
          %vm1745 = vcmp.le.f32.partialorder %v1513, %v1708
          %vm1746 = vcmp.le.f32.partialorder %v1517, %v1708
          %vm1747 = vcmp.le.f32.partialorder %v1521, %v1708
          %vm1748 = vcmp.le.f32.partialorder %v1525, %v1708
          %vm1749 = vcmp.le.f32.partialorder %v1529, %v1708
          %vm1750 = vcmp.le.f32.partialorder %v1533, %v1708
          %vm1751 = vcmp.le.f32.partialorder %v1537, %v1708
          %vm1752 = vcmp.le.f32.partialorder %v1541, %v1708
          %vm1753 = vcmp.le.f32.partialorder %v1545, %v1708
          %vm1754 = vcmp.le.f32.partialorder %v1485, %v1712
          %vm1755 = vcmp.le.f32.partialorder %v1489, %v1712
          %vm1756 = vcmp.le.f32.partialorder %v1493, %v1712
          %vm1757 = vcmp.le.f32.partialorder %v1497, %v1712
          %vm1758 = vcmp.le.f32.partialorder %v1501, %v1712
          %vm1759 = vcmp.le.f32.partialorder %v1505, %v1712
          %vm1760 = vcmp.le.f32.partialorder %v1509, %v1712
          %vm1761 = vcmp.le.f32.partialorder %v1513, %v1712
          %vm1762 = vcmp.le.f32.partialorder %v1517, %v1712
          %vm1763 = vcmp.le.f32.partialorder %v1521, %v1712
          %vm1764 = vcmp.le.f32.partialorder %v1525, %v1712
          %vm1765 = vcmp.le.f32.partialorder %v1529, %v1712
          %vm1766 = vcmp.le.f32.partialorder %v1533, %v1712
          %vm1767 = vcmp.le.f32.partialorder %v1537, %v1712
          %vm1768 = vcmp.le.f32.partialorder %v1541, %v1712
          %vm1769 = vcmp.le.f32.partialorder %v1545, %v1712
          %vm1770 = vcmp.le.f32.partialorder %v1485, %v1716
          %vm1771 = vcmp.le.f32.partialorder %v1489, %v1716
          %vm1772 = vcmp.le.f32.partialorder %v1493, %v1716
          %vm1773 = vcmp.le.f32.partialorder %v1497, %v1716
          %vm1774 = vcmp.le.f32.partialorder %v1501, %v1716
          %vm1775 = vcmp.le.f32.partialorder %v1505, %v1716
          %vm1776 = vcmp.le.f32.partialorder %v1509, %v1716
          %vm1777 = vcmp.le.f32.partialorder %v1513, %v1716
          %vm1778 = vcmp.le.f32.partialorder %v1517, %v1716
          %vm1779 = vcmp.le.f32.partialorder %v1521, %v1716
          %vm1780 = vcmp.le.f32.partialorder %v1525, %v1716
          %vm1781 = vcmp.le.f32.partialorder %v1529, %v1716
          %vm1782 = vcmp.le.f32.partialorder %v1533, %v1716
          %vm1783 = vcmp.le.f32.partialorder %v1537, %v1716
          %vm1784 = vcmp.le.f32.partialorder %v1541, %v1716
          %vm1785 = vcmp.le.f32.partialorder %v1545, %v1716
          %vm1786 = vcmp.le.f32.partialorder %v1485, %v1720
          %vm1787 = vcmp.le.f32.partialorder %v1489, %v1720
          %vm1788 = vcmp.le.f32.partialorder %v1493, %v1720
          %vm1789 = vcmp.le.f32.partialorder %v1497, %v1720
          %vm1790 = vcmp.le.f32.partialorder %v1501, %v1720
          %vm1791 = vcmp.le.f32.partialorder %v1505, %v1720
          %vm1792 = vcmp.le.f32.partialorder %v1509, %v1720
          %vm1793 = vcmp.le.f32.partialorder %v1513, %v1720
          %vm1794 = vcmp.le.f32.partialorder %v1517, %v1720
          %vm1795 = vcmp.le.f32.partialorder %v1521, %v1720
          %vm1796 = vcmp.le.f32.partialorder %v1525, %v1720
          %vm1797 = vcmp.le.f32.partialorder %v1529, %v1720
          %vm1798 = vcmp.le.f32.partialorder %v1533, %v1720
          %vm1799 = vcmp.le.f32.partialorder %v1537, %v1720
          %vm1800 = vcmp.le.f32.partialorder %v1541, %v1720
          %vm1801 = vcmp.le.f32.partialorder %v1545, %v1720
          %vm1802 = vcmp.le.f32.partialorder %v1485, %v1724
          %vm1803 = vcmp.le.f32.partialorder %v1489, %v1724
          %vm1804 = vcmp.le.f32.partialorder %v1493, %v1724
          %vm1805 = vcmp.le.f32.partialorder %v1497, %v1724
          %vm1806 = vcmp.le.f32.partialorder %v1501, %v1724
          %vm1807 = vcmp.le.f32.partialorder %v1505, %v1724
          %vm1808 = vcmp.le.f32.partialorder %v1509, %v1724
          %vm1809 = vcmp.le.f32.partialorder %v1513, %v1724
          %vm1810 = vcmp.le.f32.partialorder %v1517, %v1724
          %vm1811 = vcmp.le.f32.partialorder %v1521, %v1724
          %vm1812 = vcmp.le.f32.partialorder %v1525, %v1724
          %vm1813 = vcmp.le.f32.partialorder %v1529, %v1724
          %vm1814 = vcmp.le.f32.partialorder %v1533, %v1724
          %vm1815 = vcmp.le.f32.partialorder %v1537, %v1724
          %vm1816 = vcmp.le.f32.partialorder %v1541, %v1724
          %vm1817 = vcmp.le.f32.partialorder %v1545, %v1724
          %vm1818 = vcmp.le.f32.partialorder %v1485, %v1728
          %vm1819 = vcmp.le.f32.partialorder %v1489, %v1728
          %vm1820 = vcmp.le.f32.partialorder %v1493, %v1728
          %vm1821 = vcmp.le.f32.partialorder %v1497, %v1728
          %vm1822 = vcmp.le.f32.partialorder %v1501, %v1728
          %vm1823 = vcmp.le.f32.partialorder %v1505, %v1728
          %vm1824 = vcmp.le.f32.partialorder %v1509, %v1728
          %vm1825 = vcmp.le.f32.partialorder %v1513, %v1728
          %vm1826 = vcmp.le.f32.partialorder %v1517, %v1728
          %vm1827 = vcmp.le.f32.partialorder %v1521, %v1728
          %vm1828 = vcmp.le.f32.partialorder %v1525, %v1728
          %vm1829 = vcmp.le.f32.partialorder %v1529, %v1728
          %vm1830 = vcmp.le.f32.partialorder %v1533, %v1728
          %vm1831 = vcmp.le.f32.partialorder %v1537, %v1728
          %vm1832 = vcmp.le.f32.partialorder %v1541, %v1728
          %vm1833 = vcmp.le.f32.partialorder %v1545, %v1728
          %vm1834 = vcmp.le.f32.partialorder %v1485, %v1732
          %vm1835 = vcmp.le.f32.partialorder %v1489, %v1732
          %vm1836 = vcmp.le.f32.partialorder %v1493, %v1732
          %vm1837 = vcmp.le.f32.partialorder %v1497, %v1732
          %vm1838 = vcmp.le.f32.partialorder %v1501, %v1732
          %vm1839 = vcmp.le.f32.partialorder %v1505, %v1732
          %vm1840 = vcmp.le.f32.partialorder %v1509, %v1732
          %vm1841 = vcmp.le.f32.partialorder %v1513, %v1732
          %vm1842 = vcmp.le.f32.partialorder %v1517, %v1732
          %vm1843 = vcmp.le.f32.partialorder %v1521, %v1732
          %vm1844 = vcmp.le.f32.partialorder %v1525, %v1732
          %vm1845 = vcmp.le.f32.partialorder %v1529, %v1732
          %vm1846 = vcmp.le.f32.partialorder %v1533, %v1732
          %vm1847 = vcmp.le.f32.partialorder %v1537, %v1732
          %vm1848 = vcmp.le.f32.partialorder %v1541, %v1732
          %vm1849 = vcmp.le.f32.partialorder %v1545, %v1732
          %vm1850 = vcmp.le.f32.partialorder %v1485, %v1736
          %vm1851 = vcmp.le.f32.partialorder %v1489, %v1736
          %vm1852 = vcmp.le.f32.partialorder %v1493, %v1736
          %vm1853 = vcmp.le.f32.partialorder %v1497, %v1736
          %vm1854 = vcmp.le.f32.partialorder %v1501, %v1736
          %vm1855 = vcmp.le.f32.partialorder %v1505, %v1736
          %vm1856 = vcmp.le.f32.partialorder %v1509, %v1736
          %vm1857 = vcmp.le.f32.partialorder %v1513, %v1736
          %vm1858 = vcmp.le.f32.partialorder %v1517, %v1736
          %vm1859 = vcmp.le.f32.partialorder %v1521, %v1736
          %vm1860 = vcmp.le.f32.partialorder %v1525, %v1736
          %vm1861 = vcmp.le.f32.partialorder %v1529, %v1736
          %vm1862 = vcmp.le.f32.partialorder %v1533, %v1736
          %vm1863 = vcmp.le.f32.partialorder %v1537, %v1736
          %vm1864 = vcmp.le.f32.partialorder %v1541, %v1736
          %vm1865 = vcmp.le.f32.partialorder %v1545, %v1736
          %vm1866 = vmand %vm1578, %vm1738
          %vm1867 = vmand %vm1579, %vm1739
          %vm1868 = vmand %vm1580, %vm1740
          %vm1869 = vmand %vm1581, %vm1741
          %vm1870 = vmand %vm1582, %vm1742
          %vm1871 = vmand %vm1583, %vm1743
          %vm1872 = vmand %vm1584, %vm1744
          %vm1873 = vmand %vm1585, %vm1745
          %vm1874 = vmand %vm1586, %vm1746
          %vm1875 = vmand %vm1587, %vm1747
          %vm1876 = vmand %vm1588, %vm1748
          %vm1877 = vmand %vm1589, %vm1749
          %vm1878 = vmand %vm1590, %vm1750
          %vm1879 = vmand %vm1591, %vm1751
          %vm1880 = vmand %vm1592, %vm1752
          %vm1881 = vmand %vm1593, %vm1753
          %vm1882 = vmand %vm1594, %vm1754
          %vm1883 = vmand %vm1595, %vm1755
          %vm1884 = vmand %vm1596, %vm1756
          %vm1885 = vmand %vm1597, %vm1757
          %vm1886 = vmand %vm1598, %vm1758
          %vm1887 = vmand %vm1599, %vm1759
          %vm1888 = vmand %vm1600, %vm1760
          %vm1889 = vmand %vm1601, %vm1761
          %vm1890 = vmand %vm1602, %vm1762
          %vm1891 = vmand %vm1603, %vm1763
          %vm1892 = vmand %vm1604, %vm1764
          %vm1893 = vmand %vm1605, %vm1765
          %vm1894 = vmand %vm1606, %vm1766
          %vm1895 = vmand %vm1607, %vm1767
          %vm1896 = vmand %vm1608, %vm1768
          %vm1897 = vmand %vm1609, %vm1769
          %vm1898 = vmand %vm1610, %vm1770
          %vm1899 = vmand %vm1611, %vm1771
          %vm1900 = vmand %vm1612, %vm1772
          %vm1901 = vmand %vm1613, %vm1773
          %vm1902 = vmand %vm1614, %vm1774
          %vm1903 = vmand %vm1615, %vm1775
          %vm1904 = vmand %vm1616, %vm1776
          %vm1905 = vmand %vm1617, %vm1777
          %vm1906 = vmand %vm1618, %vm1778
          %vm1907 = vmand %vm1619, %vm1779
          %vm1908 = vmand %vm1620, %vm1780
          %vm1909 = vmand %vm1621, %vm1781
          %vm1910 = vmand %vm1622, %vm1782
          %vm1911 = vmand %vm1623, %vm1783
          %vm1912 = vmand %vm1624, %vm1784
          %vm1913 = vmand %vm1625, %vm1785
          %vm1914 = vmand %vm1626, %vm1786
          %vm1915 = vmand %vm1627, %vm1787
          %vm1916 = vmand %vm1628, %vm1788
          %vm1917 = vmand %vm1629, %vm1789
          %vm1918 = vmand %vm1630, %vm1790
          %vm1919 = vmand %vm1631, %vm1791
          %vm1920 = vmand %vm1632, %vm1792
          %vm1921 = vmand %vm1633, %vm1793
          %vm1922 = vmand %vm1634, %vm1794
          %vm1923 = vmand %vm1635, %vm1795
          %vm1924 = vmand %vm1636, %vm1796
          %vm1925 = vmand %vm1637, %vm1797
          %vm1926 = vmand %vm1638, %vm1798
          %vm1927 = vmand %vm1639, %vm1799
          %vm1928 = vmand %vm1640, %vm1800
          %vm1929 = vmand %vm1641, %vm1801
          %vm1930 = vmand %vm1642, %vm1802
          %vm1931 = vmand %vm1643, %vm1803
          %vm1932 = vmand %vm1644, %vm1804
          %vm1933 = vmand %vm1645, %vm1805
          %vm1934 = vmand %vm1646, %vm1806
          %vm1935 = vmand %vm1647, %vm1807
          %vm1936 = vmand %vm1648, %vm1808
          %vm1937 = vmand %vm1649, %vm1809
          %vm1938 = vmand %vm1650, %vm1810
          %vm1939 = vmand %vm1651, %vm1811
          %vm1940 = vmand %vm1652, %vm1812
          %vm1941 = vmand %vm1653, %vm1813
          %vm1942 = vmand %vm1654, %vm1814
          %vm1943 = vmand %vm1655, %vm1815
          %vm1944 = vmand %vm1656, %vm1816
          %vm1945 = vmand %vm1657, %vm1817
          %vm1946 = vmand %vm1658, %vm1818
          %vm1947 = vmand %vm1659, %vm1819
          %vm1948 = vmand %vm1660, %vm1820
          %vm1949 = vmand %vm1661, %vm1821
          %vm1950 = vmand %vm1662, %vm1822
          %vm1951 = vmand %vm1663, %vm1823
          %vm1952 = vmand %vm1664, %vm1824
          %vm1953 = vmand %vm1665, %vm1825
          %vm1954 = vmand %vm1666, %vm1826
          %vm1955 = vmand %vm1667, %vm1827
          %vm1956 = vmand %vm1668, %vm1828
          %vm1957 = vmand %vm1669, %vm1829
          %vm1958 = vmand %vm1670, %vm1830
          %vm1959 = vmand %vm1671, %vm1831
          %vm1960 = vmand %vm1672, %vm1832
          %vm1961 = vmand %vm1673, %vm1833
          %vm1962 = vmand %vm1674, %vm1834
          %vm1963 = vmand %vm1675, %vm1835
          %vm1964 = vmand %vm1676, %vm1836
          %vm1965 = vmand %vm1677, %vm1837
          %vm1966 = vmand %vm1678, %vm1838
          %vm1967 = vmand %vm1679, %vm1839
          %vm1968 = vmand %vm1680, %vm1840
          %vm1969 = vmand %vm1681, %vm1841
          %vm1970 = vmand %vm1682, %vm1842
          %vm1971 = vmand %vm1683, %vm1843
          %vm1972 = vmand %vm1684, %vm1844
          %vm1973 = vmand %vm1685, %vm1845
          %vm1974 = vmand %vm1686, %vm1846
          %vm1975 = vmand %vm1687, %vm1847
          %vm1976 = vmand %vm1688, %vm1848
          %vm1977 = vmand %vm1689, %vm1849
          %vm1978 = vmand %vm1690, %vm1850
          %vm1979 = vmand %vm1691, %vm1851
          %vm1980 = vmand %vm1692, %vm1852
          %vm1981 = vmand %vm1693, %vm1853
          %vm1982 = vmand %vm1694, %vm1854
          %vm1983 = vmand %vm1695, %vm1855
          %vm1984 = vmand %vm1696, %vm1856
          %vm1985 = vmand %vm1697, %vm1857
          %vm1986 = vmand %vm1698, %vm1858
          %vm1987 = vmand %vm1699, %vm1859
          %vm1988 = vmand %vm1700, %vm1860
          %vm1989 = vmand %vm1701, %vm1861
          %vm1990 = vmand %vm1702, %vm1862
          %vm1991 = vmand %vm1703, %vm1863
          %vm1992 = vmand %vm1704, %vm1864
          %vm1993 = vmand %vm1705, %vm1865
          %v1994 = vlaneseq
          %v1995 = vshrl.u32 %v1994, 7
          %v1996 = vsub.s32 1, %v1995
          %v1997 = vrot.slane %v401, %v1996
          %v1998 = vlaneseq
          %v1999 = vshrl.u32 %v1998, 7
          %v2000 = vsub.s32 1, %v1999
          %v2001 = vrot.slane %v402, %v2000
          %v2002 = vlaneseq
          %v2003 = vshrl.u32 %v2002, 7
          %v2004 = vsub.s32 1, %v2003
          %v2005 = vrot.slane %v403, %v2004
          %v2006 = vlaneseq
          %v2007 = vshrl.u32 %v2006, 7
          %v2008 = vsub.s32 1, %v2007
          %v2009 = vrot.slane %v404, %v2008
          %v2010 = vlaneseq
          %v2011 = vshrl.u32 %v2010, 7
          %v2012 = vsub.s32 1, %v2011
          %v2013 = vrot.slane %v405, %v2012
          %v2014 = vlaneseq
          %v2015 = vshrl.u32 %v2014, 7
          %v2016 = vsub.s32 1, %v2015
          %v2017 = vrot.slane %v406, %v2016
          %v2018 = vlaneseq
          %v2019 = vshrl.u32 %v2018, 7
          %v2020 = vsub.s32 1, %v2019
          %v2021 = vrot.slane %v407, %v2020
          %v2022 = vlaneseq
          %v2023 = vshrl.u32 %v2022, 7
          %v2024 = vsub.s32 1, %v2023
          %v2025 = vrot.slane %v408, %v2024
          %v2026 = vlaneseq
          %v2027 = vshrl.u32 %v2026, 7
          %v2028 = vsub.s32 1, %v2027
          %v2029 = vrot.slane %v409, %v2028
          %v2030 = vlaneseq
          %v2031 = vshrl.u32 %v2030, 7
          %v2032 = vsub.s32 1, %v2031
          %v2033 = vrot.slane %v410, %v2032
          %v2034 = vlaneseq
          %v2035 = vshrl.u32 %v2034, 7
          %v2036 = vsub.s32 1, %v2035
          %v2037 = vrot.slane %v411, %v2036
          %v2038 = vlaneseq
          %v2039 = vshrl.u32 %v2038, 7
          %v2040 = vsub.s32 1, %v2039
          %v2041 = vrot.slane %v412, %v2040
          %v2042 = vlaneseq
          %v2043 = vshrl.u32 %v2042, 7
          %v2044 = vsub.s32 1, %v2043
          %v2045 = vrot.slane %v413, %v2044
          %v2046 = vlaneseq
          %v2047 = vshrl.u32 %v2046, 7
          %v2048 = vsub.s32 1, %v2047
          %v2049 = vrot.slane %v414, %v2048
          %v2050 = vlaneseq
          %v2051 = vshrl.u32 %v2050, 7
          %v2052 = vsub.s32 1, %v2051
          %v2053 = vrot.slane %v415, %v2052
          %v2054 = vlaneseq
          %v2055 = vshrl.u32 %v2054, 7
          %v2056 = vsub.s32 1, %v2055
          %v2057 = vrot.slane %v416, %v2056
          %2058 = vset.pattern.permute.xlu0 11
          %2059 = vperm.xlu0 %2058, %v417
          %v2060 = vpop.permute.xlu0 %2059
          %2062 = vset.pattern.permute.xlu0 11
          %2063 = vperm.xlu0 %2062, %v418
          %v2064 = vpop.permute.xlu0 %2063
          %2066 = vset.pattern.permute.xlu0 11
          %2067 = vperm.xlu0 %2066, %v419
          %v2068 = vpop.permute.xlu0 %2067
          %2070 = vset.pattern.permute.xlu0 11
          %2071 = vperm.xlu0 %2070, %v420
          %v2072 = vpop.permute.xlu0 %2071
          %2074 = vset.pattern.permute.xlu0 11
          %2075 = vperm.xlu0 %2074, %v421
          %v2076 = vpop.permute.xlu0 %2075
          %2078 = vset.pattern.permute.xlu0 11
          %2079 = vperm.xlu0 %2078, %v422
          %v2080 = vpop.permute.xlu0 %2079
          %2082 = vset.pattern.permute.xlu0 11
          %2083 = vperm.xlu0 %2082, %v423
          %v2084 = vpop.permute.xlu0 %2083
          %2086 = vset.pattern.permute.xlu0 11
          %2087 = vperm.xlu0 %2086, %v424
          %v2088 = vpop.permute.xlu0 %2087
          %vm2090 = vcmp.ge.f32.partialorder %v1997, %v2060
          %vm2091 = vcmp.ge.f32.partialorder %v2001, %v2060
          %vm2092 = vcmp.ge.f32.partialorder %v2005, %v2060
          %vm2093 = vcmp.ge.f32.partialorder %v2009, %v2060
          %vm2094 = vcmp.ge.f32.partialorder %v2013, %v2060
          %vm2095 = vcmp.ge.f32.partialorder %v2017, %v2060
          %vm2096 = vcmp.ge.f32.partialorder %v2021, %v2060
          %vm2097 = vcmp.ge.f32.partialorder %v2025, %v2060
          %vm2098 = vcmp.ge.f32.partialorder %v2029, %v2060
          %vm2099 = vcmp.ge.f32.partialorder %v2033, %v2060
          %vm2100 = vcmp.ge.f32.partialorder %v2037, %v2060
          %vm2101 = vcmp.ge.f32.partialorder %v2041, %v2060
          %vm2102 = vcmp.ge.f32.partialorder %v2045, %v2060
          %vm2103 = vcmp.ge.f32.partialorder %v2049, %v2060
          %vm2104 = vcmp.ge.f32.partialorder %v2053, %v2060
          %vm2105 = vcmp.ge.f32.partialorder %v2057, %v2060
          %vm2106 = vcmp.ge.f32.partialorder %v1997, %v2064
          %vm2107 = vcmp.ge.f32.partialorder %v2001, %v2064
          %vm2108 = vcmp.ge.f32.partialorder %v2005, %v2064
          %vm2109 = vcmp.ge.f32.partialorder %v2009, %v2064
          %vm2110 = vcmp.ge.f32.partialorder %v2013, %v2064
          %vm2111 = vcmp.ge.f32.partialorder %v2017, %v2064
          %vm2112 = vcmp.ge.f32.partialorder %v2021, %v2064
          %vm2113 = vcmp.ge.f32.partialorder %v2025, %v2064
          %vm2114 = vcmp.ge.f32.partialorder %v2029, %v2064
          %vm2115 = vcmp.ge.f32.partialorder %v2033, %v2064
          %vm2116 = vcmp.ge.f32.partialorder %v2037, %v2064
          %vm2117 = vcmp.ge.f32.partialorder %v2041, %v2064
          %vm2118 = vcmp.ge.f32.partialorder %v2045, %v2064
          %vm2119 = vcmp.ge.f32.partialorder %v2049, %v2064
          %vm2120 = vcmp.ge.f32.partialorder %v2053, %v2064
          %vm2121 = vcmp.ge.f32.partialorder %v2057, %v2064
          %vm2122 = vcmp.ge.f32.partialorder %v1997, %v2068
          %vm2123 = vcmp.ge.f32.partialorder %v2001, %v2068
          %vm2124 = vcmp.ge.f32.partialorder %v2005, %v2068
          %vm2125 = vcmp.ge.f32.partialorder %v2009, %v2068
          %vm2126 = vcmp.ge.f32.partialorder %v2013, %v2068
          %vm2127 = vcmp.ge.f32.partialorder %v2017, %v2068
          %vm2128 = vcmp.ge.f32.partialorder %v2021, %v2068
          %vm2129 = vcmp.ge.f32.partialorder %v2025, %v2068
          %vm2130 = vcmp.ge.f32.partialorder %v2029, %v2068
          %vm2131 = vcmp.ge.f32.partialorder %v2033, %v2068
          %vm2132 = vcmp.ge.f32.partialorder %v2037, %v2068
          %vm2133 = vcmp.ge.f32.partialorder %v2041, %v2068
          %vm2134 = vcmp.ge.f32.partialorder %v2045, %v2068
          %vm2135 = vcmp.ge.f32.partialorder %v2049, %v2068
          %vm2136 = vcmp.ge.f32.partialorder %v2053, %v2068
          %vm2137 = vcmp.ge.f32.partialorder %v2057, %v2068
          %vm2138 = vcmp.ge.f32.partialorder %v1997, %v2072
          %vm2139 = vcmp.ge.f32.partialorder %v2001, %v2072
          %vm2140 = vcmp.ge.f32.partialorder %v2005, %v2072
          %vm2141 = vcmp.ge.f32.partialorder %v2009, %v2072
          %vm2142 = vcmp.ge.f32.partialorder %v2013, %v2072
          %vm2143 = vcmp.ge.f32.partialorder %v2017, %v2072
          %vm2144 = vcmp.ge.f32.partialorder %v2021, %v2072
          %vm2145 = vcmp.ge.f32.partialorder %v2025, %v2072
          %vm2146 = vcmp.ge.f32.partialorder %v2029, %v2072
          %vm2147 = vcmp.ge.f32.partialorder %v2033, %v2072
          %vm2148 = vcmp.ge.f32.partialorder %v2037, %v2072
          %vm2149 = vcmp.ge.f32.partialorder %v2041, %v2072
          %vm2150 = vcmp.ge.f32.partialorder %v2045, %v2072
          %vm2151 = vcmp.ge.f32.partialorder %v2049, %v2072
          %vm2152 = vcmp.ge.f32.partialorder %v2053, %v2072
          %vm2153 = vcmp.ge.f32.partialorder %v2057, %v2072
          %vm2154 = vcmp.ge.f32.partialorder %v1997, %v2076
          %vm2155 = vcmp.ge.f32.partialorder %v2001, %v2076
          %vm2156 = vcmp.ge.f32.partialorder %v2005, %v2076
          %vm2157 = vcmp.ge.f32.partialorder %v2009, %v2076
          %vm2158 = vcmp.ge.f32.partialorder %v2013, %v2076
          %vm2159 = vcmp.ge.f32.partialorder %v2017, %v2076
          %vm2160 = vcmp.ge.f32.partialorder %v2021, %v2076
          %vm2161 = vcmp.ge.f32.partialorder %v2025, %v2076
          %vm2162 = vcmp.ge.f32.partialorder %v2029, %v2076
          %vm2163 = vcmp.ge.f32.partialorder %v2033, %v2076
          %vm2164 = vcmp.ge.f32.partialorder %v2037, %v2076
          %vm2165 = vcmp.ge.f32.partialorder %v2041, %v2076
          %vm2166 = vcmp.ge.f32.partialorder %v2045, %v2076
          %vm2167 = vcmp.ge.f32.partialorder %v2049, %v2076
          %vm2168 = vcmp.ge.f32.partialorder %v2053, %v2076
          %vm2169 = vcmp.ge.f32.partialorder %v2057, %v2076
          %vm2170 = vcmp.ge.f32.partialorder %v1997, %v2080
          %vm2171 = vcmp.ge.f32.partialorder %v2001, %v2080
          %vm2172 = vcmp.ge.f32.partialorder %v2005, %v2080
          %vm2173 = vcmp.ge.f32.partialorder %v2009, %v2080
          %vm2174 = vcmp.ge.f32.partialorder %v2013, %v2080
          %vm2175 = vcmp.ge.f32.partialorder %v2017, %v2080
          %vm2176 = vcmp.ge.f32.partialorder %v2021, %v2080
          %vm2177 = vcmp.ge.f32.partialorder %v2025, %v2080
          %vm2178 = vcmp.ge.f32.partialorder %v2029, %v2080
          %vm2179 = vcmp.ge.f32.partialorder %v2033, %v2080
          %vm2180 = vcmp.ge.f32.partialorder %v2037, %v2080
          %vm2181 = vcmp.ge.f32.partialorder %v2041, %v2080
          %vm2182 = vcmp.ge.f32.partialorder %v2045, %v2080
          %vm2183 = vcmp.ge.f32.partialorder %v2049, %v2080
          %vm2184 = vcmp.ge.f32.partialorder %v2053, %v2080
          %vm2185 = vcmp.ge.f32.partialorder %v2057, %v2080
          %vm2186 = vcmp.ge.f32.partialorder %v1997, %v2084
          %vm2187 = vcmp.ge.f32.partialorder %v2001, %v2084
          %vm2188 = vcmp.ge.f32.partialorder %v2005, %v2084
          %vm2189 = vcmp.ge.f32.partialorder %v2009, %v2084
          %vm2190 = vcmp.ge.f32.partialorder %v2013, %v2084
          %vm2191 = vcmp.ge.f32.partialorder %v2017, %v2084
          %vm2192 = vcmp.ge.f32.partialorder %v2021, %v2084
          %vm2193 = vcmp.ge.f32.partialorder %v2025, %v2084
          %vm2194 = vcmp.ge.f32.partialorder %v2029, %v2084
          %vm2195 = vcmp.ge.f32.partialorder %v2033, %v2084
          %vm2196 = vcmp.ge.f32.partialorder %v2037, %v2084
          %vm2197 = vcmp.ge.f32.partialorder %v2041, %v2084
          %vm2198 = vcmp.ge.f32.partialorder %v2045, %v2084
          %vm2199 = vcmp.ge.f32.partialorder %v2049, %v2084
          %vm2200 = vcmp.ge.f32.partialorder %v2053, %v2084
          %vm2201 = vcmp.ge.f32.partialorder %v2057, %v2084
          %vm2202 = vcmp.ge.f32.partialorder %v1997, %v2088
          %vm2203 = vcmp.ge.f32.partialorder %v2001, %v2088
          %vm2204 = vcmp.ge.f32.partialorder %v2005, %v2088
          %vm2205 = vcmp.ge.f32.partialorder %v2009, %v2088
          %vm2206 = vcmp.ge.f32.partialorder %v2013, %v2088
          %vm2207 = vcmp.ge.f32.partialorder %v2017, %v2088
          %vm2208 = vcmp.ge.f32.partialorder %v2021, %v2088
          %vm2209 = vcmp.ge.f32.partialorder %v2025, %v2088
          %vm2210 = vcmp.ge.f32.partialorder %v2029, %v2088
          %vm2211 = vcmp.ge.f32.partialorder %v2033, %v2088
          %vm2212 = vcmp.ge.f32.partialorder %v2037, %v2088
          %vm2213 = vcmp.ge.f32.partialorder %v2041, %v2088
          %vm2214 = vcmp.ge.f32.partialorder %v2045, %v2088
          %vm2215 = vcmp.ge.f32.partialorder %v2049, %v2088
          %vm2216 = vcmp.ge.f32.partialorder %v2053, %v2088
          %vm2217 = vcmp.ge.f32.partialorder %v2057, %v2088
          %vm2218 = vmand %vm1866, %vm2090
          %vm2219 = vmand %vm1867, %vm2091
          %vm2220 = vmand %vm1868, %vm2092
          %vm2221 = vmand %vm1869, %vm2093
          %vm2222 = vmand %vm1870, %vm2094
          %vm2223 = vmand %vm1871, %vm2095
          %vm2224 = vmand %vm1872, %vm2096
          %vm2225 = vmand %vm1873, %vm2097
          %vm2226 = vmand %vm1874, %vm2098
          %vm2227 = vmand %vm1875, %vm2099
          %vm2228 = vmand %vm1876, %vm2100
          %vm2229 = vmand %vm1877, %vm2101
          %vm2230 = vmand %vm1878, %vm2102
          %vm2231 = vmand %vm1879, %vm2103
          %vm2232 = vmand %vm1880, %vm2104
          %vm2233 = vmand %vm1881, %vm2105
          %vm2234 = vmand %vm1882, %vm2106
          %vm2235 = vmand %vm1883, %vm2107
          %vm2236 = vmand %vm1884, %vm2108
          %vm2237 = vmand %vm1885, %vm2109
          %vm2238 = vmand %vm1886, %vm2110
          %vm2239 = vmand %vm1887, %vm2111
          %vm2240 = vmand %vm1888, %vm2112
          %vm2241 = vmand %vm1889, %vm2113
          %vm2242 = vmand %vm1890, %vm2114
          %vm2243 = vmand %vm1891, %vm2115
          %vm2244 = vmand %vm1892, %vm2116
          %vm2245 = vmand %vm1893, %vm2117
          %vm2246 = vmand %vm1894, %vm2118
          %vm2247 = vmand %vm1895, %vm2119
          %vm2248 = vmand %vm1896, %vm2120
          %vm2249 = vmand %vm1897, %vm2121
          %vm2250 = vmand %vm1898, %vm2122
          %vm2251 = vmand %vm1899, %vm2123
          %vm2252 = vmand %vm1900, %vm2124
          %vm2253 = vmand %vm1901, %vm2125
          %vm2254 = vmand %vm1902, %vm2126
          %vm2255 = vmand %vm1903, %vm2127
          %vm2256 = vmand %vm1904, %vm2128
          %vm2257 = vmand %vm1905, %vm2129
          %vm2258 = vmand %vm1906, %vm2130
          %vm2259 = vmand %vm1907, %vm2131
          %vm2260 = vmand %vm1908, %vm2132
          %vm2261 = vmand %vm1909, %vm2133
          %vm2262 = vmand %vm1910, %vm2134
          %vm2263 = vmand %vm1911, %vm2135
          %vm2264 = vmand %vm1912, %vm2136
          %vm2265 = vmand %vm1913, %vm2137
          %vm2266 = vmand %vm1914, %vm2138
          %vm2267 = vmand %vm1915, %vm2139
          %vm2268 = vmand %vm1916, %vm2140
          %vm2269 = vmand %vm1917, %vm2141
          %vm2270 = vmand %vm1918, %vm2142
          %vm2271 = vmand %vm1919, %vm2143
          %vm2272 = vmand %vm1920, %vm2144
          %vm2273 = vmand %vm1921, %vm2145
          %vm2274 = vmand %vm1922, %vm2146
          %vm2275 = vmand %vm1923, %vm2147
          %vm2276 = vmand %vm1924, %vm2148
          %vm2277 = vmand %vm1925, %vm2149
          %vm2278 = vmand %vm1926, %vm2150
          %vm2279 = vmand %vm1927, %vm2151
          %vm2280 = vmand %vm1928, %vm2152
          %vm2281 = vmand %vm1929, %vm2153
          %vm2282 = vmand %vm1930, %vm2154
          %vm2283 = vmand %vm1931, %vm2155
          %vm2284 = vmand %vm1932, %vm2156
          %vm2285 = vmand %vm1933, %vm2157
          %vm2286 = vmand %vm1934, %vm2158
          %vm2287 = vmand %vm1935, %vm2159
          %vm2288 = vmand %vm1936, %vm2160
          %vm2289 = vmand %vm1937, %vm2161
          %vm2290 = vmand %vm1938, %vm2162
          %vm2291 = vmand %vm1939, %vm2163
          %vm2292 = vmand %vm1940, %vm2164
          %vm2293 = vmand %vm1941, %vm2165
          %vm2294 = vmand %vm1942, %vm2166
          %vm2295 = vmand %vm1943, %vm2167
          %vm2296 = vmand %vm1944, %vm2168
          %vm2297 = vmand %vm1945, %vm2169
          %vm2298 = vmand %vm1946, %vm2170
          %vm2299 = vmand %vm1947, %vm2171
          %vm2300 = vmand %vm1948, %vm2172
          %vm2301 = vmand %vm1949, %vm2173
          %vm2302 = vmand %vm1950, %vm2174
          %vm2303 = vmand %vm1951, %vm2175
          %vm2304 = vmand %vm1952, %vm2176
          %vm2305 = vmand %vm1953, %vm2177
          %vm2306 = vmand %vm1954, %vm2178
          %vm2307 = vmand %vm1955, %vm2179
          %vm2308 = vmand %vm1956, %vm2180
          %vm2309 = vmand %vm1957, %vm2181
          %vm2310 = vmand %vm1958, %vm2182
          %vm2311 = vmand %vm1959, %vm2183
          %vm2312 = vmand %vm1960, %vm2184
          %vm2313 = vmand %vm1961, %vm2185
          %vm2314 = vmand %vm1962, %vm2186
          %vm2315 = vmand %vm1963, %vm2187
          %vm2316 = vmand %vm1964, %vm2188
          %vm2317 = vmand %vm1965, %vm2189
          %vm2318 = vmand %vm1966, %vm2190
          %vm2319 = vmand %vm1967, %vm2191
          %vm2320 = vmand %vm1968, %vm2192
          %vm2321 = vmand %vm1969, %vm2193
          %vm2322 = vmand %vm1970, %vm2194
          %vm2323 = vmand %vm1971, %vm2195
          %vm2324 = vmand %vm1972, %vm2196
          %vm2325 = vmand %vm1973, %vm2197
          %vm2326 = vmand %vm1974, %vm2198
          %vm2327 = vmand %vm1975, %vm2199
          %vm2328 = vmand %vm1976, %vm2200
          %vm2329 = vmand %vm1977, %vm2201
          %vm2330 = vmand %vm1978, %vm2202
          %vm2331 = vmand %vm1979, %vm2203
          %vm2332 = vmand %vm1980, %vm2204
          %vm2333 = vmand %vm1981, %vm2205
          %vm2334 = vmand %vm1982, %vm2206
          %vm2335 = vmand %vm1983, %vm2207
          %vm2336 = vmand %vm1984, %vm2208
          %vm2337 = vmand %vm1985, %vm2209
          %vm2338 = vmand %vm1986, %vm2210
          %vm2339 = vmand %vm1987, %vm2211
          %vm2340 = vmand %vm1988, %vm2212
          %vm2341 = vmand %vm1989, %vm2213
          %vm2342 = vmand %vm1990, %vm2214
          %vm2343 = vmand %vm1991, %vm2215
          %vm2344 = vmand %vm1992, %vm2216
          %vm2345 = vmand %vm1993, %vm2217
          %2346 = vset.pattern.permute.xlu0 14
          %2347 = vperm.xlu0 %2346, %v417
          %v2348 = vpop.permute.xlu0 %2347
          %2350 = vset.pattern.permute.xlu0 14
          %2351 = vperm.xlu0 %2350, %v418
          %v2352 = vpop.permute.xlu0 %2351
          %2354 = vset.pattern.permute.xlu0 14
          %2355 = vperm.xlu0 %2354, %v419
          %v2356 = vpop.permute.xlu0 %2355
          %2358 = vset.pattern.permute.xlu0 14
          %2359 = vperm.xlu0 %2358, %v420
          %v2360 = vpop.permute.xlu0 %2359
          %2362 = vset.pattern.permute.xlu0 14
          %2363 = vperm.xlu0 %2362, %v421
          %v2364 = vpop.permute.xlu0 %2363
          %2366 = vset.pattern.permute.xlu0 14
          %2367 = vperm.xlu0 %2366, %v422
          %v2368 = vpop.permute.xlu0 %2367
          %2370 = vset.pattern.permute.xlu0 14
          %2371 = vperm.xlu0 %2370, %v423
          %v2372 = vpop.permute.xlu0 %2371
          %2374 = vset.pattern.permute.xlu0 14
          %2375 = vperm.xlu0 %2374, %v424
          %v2376 = vpop.permute.xlu0 %2375
          %vm2378 = vcmp.le.f32.partialorder %v1997, %v2348
          %vm2379 = vcmp.le.f32.partialorder %v2001, %v2348
          %vm2380 = vcmp.le.f32.partialorder %v2005, %v2348
          %vm2381 = vcmp.le.f32.partialorder %v2009, %v2348
          %vm2382 = vcmp.le.f32.partialorder %v2013, %v2348
          %vm2383 = vcmp.le.f32.partialorder %v2017, %v2348
          %vm2384 = vcmp.le.f32.partialorder %v2021, %v2348
          %vm2385 = vcmp.le.f32.partialorder %v2025, %v2348
          %vm2386 = vcmp.le.f32.partialorder %v2029, %v2348
          %vm2387 = vcmp.le.f32.partialorder %v2033, %v2348
          %vm2388 = vcmp.le.f32.partialorder %v2037, %v2348
          %vm2389 = vcmp.le.f32.partialorder %v2041, %v2348
          %vm2390 = vcmp.le.f32.partialorder %v2045, %v2348
          %vm2391 = vcmp.le.f32.partialorder %v2049, %v2348
          %vm2392 = vcmp.le.f32.partialorder %v2053, %v2348
          %vm2393 = vcmp.le.f32.partialorder %v2057, %v2348
          %vm2394 = vcmp.le.f32.partialorder %v1997, %v2352
          %vm2395 = vcmp.le.f32.partialorder %v2001, %v2352
          %vm2396 = vcmp.le.f32.partialorder %v2005, %v2352
          %vm2397 = vcmp.le.f32.partialorder %v2009, %v2352
          %vm2398 = vcmp.le.f32.partialorder %v2013, %v2352
          %vm2399 = vcmp.le.f32.partialorder %v2017, %v2352
          %vm2400 = vcmp.le.f32.partialorder %v2021, %v2352
          %vm2401 = vcmp.le.f32.partialorder %v2025, %v2352
          %vm2402 = vcmp.le.f32.partialorder %v2029, %v2352
          %vm2403 = vcmp.le.f32.partialorder %v2033, %v2352
          %vm2404 = vcmp.le.f32.partialorder %v2037, %v2352
          %vm2405 = vcmp.le.f32.partialorder %v2041, %v2352
          %vm2406 = vcmp.le.f32.partialorder %v2045, %v2352
          %vm2407 = vcmp.le.f32.partialorder %v2049, %v2352
          %vm2408 = vcmp.le.f32.partialorder %v2053, %v2352
          %vm2409 = vcmp.le.f32.partialorder %v2057, %v2352
          %vm2410 = vcmp.le.f32.partialorder %v1997, %v2356
          %vm2411 = vcmp.le.f32.partialorder %v2001, %v2356
          %vm2412 = vcmp.le.f32.partialorder %v2005, %v2356
          %vm2413 = vcmp.le.f32.partialorder %v2009, %v2356
          %vm2414 = vcmp.le.f32.partialorder %v2013, %v2356
          %vm2415 = vcmp.le.f32.partialorder %v2017, %v2356
          %vm2416 = vcmp.le.f32.partialorder %v2021, %v2356
          %vm2417 = vcmp.le.f32.partialorder %v2025, %v2356
          %vm2418 = vcmp.le.f32.partialorder %v2029, %v2356
          %vm2419 = vcmp.le.f32.partialorder %v2033, %v2356
          %vm2420 = vcmp.le.f32.partialorder %v2037, %v2356
          %vm2421 = vcmp.le.f32.partialorder %v2041, %v2356
          %vm2422 = vcmp.le.f32.partialorder %v2045, %v2356
          %vm2423 = vcmp.le.f32.partialorder %v2049, %v2356
          %vm2424 = vcmp.le.f32.partialorder %v2053, %v2356
          %vm2425 = vcmp.le.f32.partialorder %v2057, %v2356
          %vm2426 = vcmp.le.f32.partialorder %v1997, %v2360
          %vm2427 = vcmp.le.f32.partialorder %v2001, %v2360
          %vm2428 = vcmp.le.f32.partialorder %v2005, %v2360
          %vm2429 = vcmp.le.f32.partialorder %v2009, %v2360
          %vm2430 = vcmp.le.f32.partialorder %v2013, %v2360
          %vm2431 = vcmp.le.f32.partialorder %v2017, %v2360
          %vm2432 = vcmp.le.f32.partialorder %v2021, %v2360
          %vm2433 = vcmp.le.f32.partialorder %v2025, %v2360
          %vm2434 = vcmp.le.f32.partialorder %v2029, %v2360
          %vm2435 = vcmp.le.f32.partialorder %v2033, %v2360
          %vm2436 = vcmp.le.f32.partialorder %v2037, %v2360
          %vm2437 = vcmp.le.f32.partialorder %v2041, %v2360
          %vm2438 = vcmp.le.f32.partialorder %v2045, %v2360
          %vm2439 = vcmp.le.f32.partialorder %v2049, %v2360
          %vm2440 = vcmp.le.f32.partialorder %v2053, %v2360
          %vm2441 = vcmp.le.f32.partialorder %v2057, %v2360
          %vm2442 = vcmp.le.f32.partialorder %v1997, %v2364
          %vm2443 = vcmp.le.f32.partialorder %v2001, %v2364
          %vm2444 = vcmp.le.f32.partialorder %v2005, %v2364
          %vm2445 = vcmp.le.f32.partialorder %v2009, %v2364
          %vm2446 = vcmp.le.f32.partialorder %v2013, %v2364
          %vm2447 = vcmp.le.f32.partialorder %v2017, %v2364
          %vm2448 = vcmp.le.f32.partialorder %v2021, %v2364
          %vm2449 = vcmp.le.f32.partialorder %v2025, %v2364
          %vm2450 = vcmp.le.f32.partialorder %v2029, %v2364
          %vm2451 = vcmp.le.f32.partialorder %v2033, %v2364
          %vm2452 = vcmp.le.f32.partialorder %v2037, %v2364
          %vm2453 = vcmp.le.f32.partialorder %v2041, %v2364
          %vm2454 = vcmp.le.f32.partialorder %v2045, %v2364
          %vm2455 = vcmp.le.f32.partialorder %v2049, %v2364
          %vm2456 = vcmp.le.f32.partialorder %v2053, %v2364
          %vm2457 = vcmp.le.f32.partialorder %v2057, %v2364
          %vm2458 = vcmp.le.f32.partialorder %v1997, %v2368
          %vm2459 = vcmp.le.f32.partialorder %v2001, %v2368
          %vm2460 = vcmp.le.f32.partialorder %v2005, %v2368
          %vm2461 = vcmp.le.f32.partialorder %v2009, %v2368
          %vm2462 = vcmp.le.f32.partialorder %v2013, %v2368
          %vm2463 = vcmp.le.f32.partialorder %v2017, %v2368
          %vm2464 = vcmp.le.f32.partialorder %v2021, %v2368
          %vm2465 = vcmp.le.f32.partialorder %v2025, %v2368
          %vm2466 = vcmp.le.f32.partialorder %v2029, %v2368
          %vm2467 = vcmp.le.f32.partialorder %v2033, %v2368
          %vm2468 = vcmp.le.f32.partialorder %v2037, %v2368
          %vm2469 = vcmp.le.f32.partialorder %v2041, %v2368
          %vm2470 = vcmp.le.f32.partialorder %v2045, %v2368
          %vm2471 = vcmp.le.f32.partialorder %v2049, %v2368
          %vm2472 = vcmp.le.f32.partialorder %v2053, %v2368
          %vm2473 = vcmp.le.f32.partialorder %v2057, %v2368
          %vm2474 = vcmp.le.f32.partialorder %v1997, %v2372
          %vm2475 = vcmp.le.f32.partialorder %v2001, %v2372
          %vm2476 = vcmp.le.f32.partialorder %v2005, %v2372
          %vm2477 = vcmp.le.f32.partialorder %v2009, %v2372
          %vm2478 = vcmp.le.f32.partialorder %v2013, %v2372
          %vm2479 = vcmp.le.f32.partialorder %v2017, %v2372
          %vm2480 = vcmp.le.f32.partialorder %v2021, %v2372
          %vm2481 = vcmp.le.f32.partialorder %v2025, %v2372
          %vm2482 = vcmp.le.f32.partialorder %v2029, %v2372
          %vm2483 = vcmp.le.f32.partialorder %v2033, %v2372
          %vm2484 = vcmp.le.f32.partialorder %v2037, %v2372
          %vm2485 = vcmp.le.f32.partialorder %v2041, %v2372
          %vm2486 = vcmp.le.f32.partialorder %v2045, %v2372
          %vm2487 = vcmp.le.f32.partialorder %v2049, %v2372
          %vm2488 = vcmp.le.f32.partialorder %v2053, %v2372
          %vm2489 = vcmp.le.f32.partialorder %v2057, %v2372
          %vm2490 = vcmp.le.f32.partialorder %v1997, %v2376
          %vm2491 = vcmp.le.f32.partialorder %v2001, %v2376
          %vm2492 = vcmp.le.f32.partialorder %v2005, %v2376
          %vm2493 = vcmp.le.f32.partialorder %v2009, %v2376
          %vm2494 = vcmp.le.f32.partialorder %v2013, %v2376
          %vm2495 = vcmp.le.f32.partialorder %v2017, %v2376
          %vm2496 = vcmp.le.f32.partialorder %v2021, %v2376
          %vm2497 = vcmp.le.f32.partialorder %v2025, %v2376
          %vm2498 = vcmp.le.f32.partialorder %v2029, %v2376
          %vm2499 = vcmp.le.f32.partialorder %v2033, %v2376
          %vm2500 = vcmp.le.f32.partialorder %v2037, %v2376
          %vm2501 = vcmp.le.f32.partialorder %v2041, %v2376
          %vm2502 = vcmp.le.f32.partialorder %v2045, %v2376
          %vm2503 = vcmp.le.f32.partialorder %v2049, %v2376
          %vm2504 = vcmp.le.f32.partialorder %v2053, %v2376
          %vm2505 = vcmp.le.f32.partialorder %v2057, %v2376
          %vm2506 = vmand %vm2218, %vm2378
          %vm2507 = vmand %vm2219, %vm2379
          %vm2508 = vmand %vm2220, %vm2380
          %vm2509 = vmand %vm2221, %vm2381
          %vm2510 = vmand %vm2222, %vm2382
          %vm2511 = vmand %vm2223, %vm2383
          %vm2512 = vmand %vm2224, %vm2384
          %vm2513 = vmand %vm2225, %vm2385
          %vm2514 = vmand %vm2226, %vm2386
          %vm2515 = vmand %vm2227, %vm2387
          %vm2516 = vmand %vm2228, %vm2388
          %vm2517 = vmand %vm2229, %vm2389
          %vm2518 = vmand %vm2230, %vm2390
          %vm2519 = vmand %vm2231, %vm2391
          %vm2520 = vmand %vm2232, %vm2392
          %vm2521 = vmand %vm2233, %vm2393
          %vm2522 = vmand %vm2234, %vm2394
          %vm2523 = vmand %vm2235, %vm2395
          %vm2524 = vmand %vm2236, %vm2396
          %vm2525 = vmand %vm2237, %vm2397
          %vm2526 = vmand %vm2238, %vm2398
          %vm2527 = vmand %vm2239, %vm2399
          %vm2528 = vmand %vm2240, %vm2400
          %vm2529 = vmand %vm2241, %vm2401
          %vm2530 = vmand %vm2242, %vm2402
          %vm2531 = vmand %vm2243, %vm2403
          %vm2532 = vmand %vm2244, %vm2404
          %vm2533 = vmand %vm2245, %vm2405
          %vm2534 = vmand %vm2246, %vm2406
          %vm2535 = vmand %vm2247, %vm2407
          %vm2536 = vmand %vm2248, %vm2408
          %vm2537 = vmand %vm2249, %vm2409
          %vm2538 = vmand %vm2250, %vm2410
          %vm2539 = vmand %vm2251, %vm2411
          %vm2540 = vmand %vm2252, %vm2412
          %vm2541 = vmand %vm2253, %vm2413
          %vm2542 = vmand %vm2254, %vm2414
          %vm2543 = vmand %vm2255, %vm2415
          %vm2544 = vmand %vm2256, %vm2416
          %vm2545 = vmand %vm2257, %vm2417
          %vm2546 = vmand %vm2258, %vm2418
          %vm2547 = vmand %vm2259, %vm2419
          %vm2548 = vmand %vm2260, %vm2420
          %vm2549 = vmand %vm2261, %vm2421
          %vm2550 = vmand %vm2262, %vm2422
          %vm2551 = vmand %vm2263, %vm2423
          %vm2552 = vmand %vm2264, %vm2424
          %vm2553 = vmand %vm2265, %vm2425
          %vm2554 = vmand %vm2266, %vm2426
          %vm2555 = vmand %vm2267, %vm2427
          %vm2556 = vmand %vm2268, %vm2428
          %vm2557 = vmand %vm2269, %vm2429
          %vm2558 = vmand %vm2270, %vm2430
          %vm2559 = vmand %vm2271, %vm2431
          %vm2560 = vmand %vm2272, %vm2432
          %vm2561 = vmand %vm2273, %vm2433
          %vm2562 = vmand %vm2274, %vm2434
          %vm2563 = vmand %vm2275, %vm2435
          %vm2564 = vmand %vm2276, %vm2436
          %vm2565 = vmand %vm2277, %vm2437
          %vm2566 = vmand %vm2278, %vm2438
          %vm2567 = vmand %vm2279, %vm2439
          %vm2568 = vmand %vm2280, %vm2440
          %vm2569 = vmand %vm2281, %vm2441
          %vm2570 = vmand %vm2282, %vm2442
          %vm2571 = vmand %vm2283, %vm2443
          %vm2572 = vmand %vm2284, %vm2444
          %vm2573 = vmand %vm2285, %vm2445
          %vm2574 = vmand %vm2286, %vm2446
          %vm2575 = vmand %vm2287, %vm2447
          %vm2576 = vmand %vm2288, %vm2448
          %vm2577 = vmand %vm2289, %vm2449
          %vm2578 = vmand %vm2290, %vm2450
          %vm2579 = vmand %vm2291, %vm2451
          %vm2580 = vmand %vm2292, %vm2452
          %vm2581 = vmand %vm2293, %vm2453
          %vm2582 = vmand %vm2294, %vm2454
          %vm2583 = vmand %vm2295, %vm2455
          %vm2584 = vmand %vm2296, %vm2456
          %vm2585 = vmand %vm2297, %vm2457
          %vm2586 = vmand %vm2298, %vm2458
          %vm2587 = vmand %vm2299, %vm2459
          %vm2588 = vmand %vm2300, %vm2460
          %vm2589 = vmand %vm2301, %vm2461
          %vm2590 = vmand %vm2302, %vm2462
          %vm2591 = vmand %vm2303, %vm2463
          %vm2592 = vmand %vm2304, %vm2464
          %vm2593 = vmand %vm2305, %vm2465
          %vm2594 = vmand %vm2306, %vm2466
          %vm2595 = vmand %vm2307, %vm2467
          %vm2596 = vmand %vm2308, %vm2468
          %vm2597 = vmand %vm2309, %vm2469
          %vm2598 = vmand %vm2310, %vm2470
          %vm2599 = vmand %vm2311, %vm2471
          %vm2600 = vmand %vm2312, %vm2472
          %vm2601 = vmand %vm2313, %vm2473
          %vm2602 = vmand %vm2314, %vm2474
          %vm2603 = vmand %vm2315, %vm2475
          %vm2604 = vmand %vm2316, %vm2476
          %vm2605 = vmand %vm2317, %vm2477
          %vm2606 = vmand %vm2318, %vm2478
          %vm2607 = vmand %vm2319, %vm2479
          %vm2608 = vmand %vm2320, %vm2480
          %vm2609 = vmand %vm2321, %vm2481
          %vm2610 = vmand %vm2322, %vm2482
          %vm2611 = vmand %vm2323, %vm2483
          %vm2612 = vmand %vm2324, %vm2484
          %vm2613 = vmand %vm2325, %vm2485
          %vm2614 = vmand %vm2326, %vm2486
          %vm2615 = vmand %vm2327, %vm2487
          %vm2616 = vmand %vm2328, %vm2488
          %vm2617 = vmand %vm2329, %vm2489
          %vm2618 = vmand %vm2330, %vm2490
          %vm2619 = vmand %vm2331, %vm2491
          %vm2620 = vmand %vm2332, %vm2492
          %vm2621 = vmand %vm2333, %vm2493
          %vm2622 = vmand %vm2334, %vm2494
          %vm2623 = vmand %vm2335, %vm2495
          %vm2624 = vmand %vm2336, %vm2496
          %vm2625 = vmand %vm2337, %vm2497
          %vm2626 = vmand %vm2338, %vm2498
          %vm2627 = vmand %vm2339, %vm2499
          %vm2628 = vmand %vm2340, %vm2500
          %vm2629 = vmand %vm2341, %vm2501
          %vm2630 = vmand %vm2342, %vm2502
          %vm2631 = vmand %vm2343, %vm2503
          %vm2632 = vmand %vm2344, %vm2504
          %vm2633 = vmand %vm2345, %vm2505
          %v2634 = vlaneseq
          %v2635 = vshrl.u32 %v2634, 7
          %v2636 = vsub.s32 2, %v2635
          %v2637 = vrot.slane %v401, %v2636
          %v2638 = vlaneseq
          %v2639 = vshrl.u32 %v2638, 7
          %v2640 = vsub.s32 2, %v2639
          %v2641 = vrot.slane %v402, %v2640
          %v2642 = vlaneseq
          %v2643 = vshrl.u32 %v2642, 7
          %v2644 = vsub.s32 2, %v2643
          %v2645 = vrot.slane %v403, %v2644
          %v2646 = vlaneseq
          %v2647 = vshrl.u32 %v2646, 7
          %v2648 = vsub.s32 2, %v2647
          %v2649 = vrot.slane %v404, %v2648
          %v2650 = vlaneseq
          %v2651 = vshrl.u32 %v2650, 7
          %v2652 = vsub.s32 2, %v2651
          %v2653 = vrot.slane %v405, %v2652
          %v2654 = vlaneseq
          %v2655 = vshrl.u32 %v2654, 7
          %v2656 = vsub.s32 2, %v2655
          %v2657 = vrot.slane %v406, %v2656
          %v2658 = vlaneseq
          %v2659 = vshrl.u32 %v2658, 7
          %v2660 = vsub.s32 2, %v2659
          %v2661 = vrot.slane %v407, %v2660
          %v2662 = vlaneseq
          %v2663 = vshrl.u32 %v2662, 7
          %v2664 = vsub.s32 2, %v2663
          %v2665 = vrot.slane %v408, %v2664
          %v2666 = vlaneseq
          %v2667 = vshrl.u32 %v2666, 7
          %v2668 = vsub.s32 2, %v2667
          %v2669 = vrot.slane %v409, %v2668
          %v2670 = vlaneseq
          %v2671 = vshrl.u32 %v2670, 7
          %v2672 = vsub.s32 2, %v2671
          %v2673 = vrot.slane %v410, %v2672
          %v2674 = vlaneseq
          %v2675 = vshrl.u32 %v2674, 7
          %v2676 = vsub.s32 2, %v2675
          %v2677 = vrot.slane %v411, %v2676
          %v2678 = vlaneseq
          %v2679 = vshrl.u32 %v2678, 7
          %v2680 = vsub.s32 2, %v2679
          %v2681 = vrot.slane %v412, %v2680
          %v2682 = vlaneseq
          %v2683 = vshrl.u32 %v2682, 7
          %v2684 = vsub.s32 2, %v2683
          %v2685 = vrot.slane %v413, %v2684
          %v2686 = vlaneseq
          %v2687 = vshrl.u32 %v2686, 7
          %v2688 = vsub.s32 2, %v2687
          %v2689 = vrot.slane %v414, %v2688
          %v2690 = vlaneseq
          %v2691 = vshrl.u32 %v2690, 7
          %v2692 = vsub.s32 2, %v2691
          %v2693 = vrot.slane %v415, %v2692
          %v2694 = vlaneseq
          %v2695 = vshrl.u32 %v2694, 7
          %v2696 = vsub.s32 2, %v2695
          %v2697 = vrot.slane %v416, %v2696
          %2698 = vset.pattern.permute.xlu0 12
          %2699 = vperm.xlu0 %2698, %v417
          %v2700 = vpop.permute.xlu0 %2699
          %2702 = vset.pattern.permute.xlu0 12
          %2703 = vperm.xlu0 %2702, %v418
          %v2704 = vpop.permute.xlu0 %2703
          %2706 = vset.pattern.permute.xlu0 12
          %2707 = vperm.xlu0 %2706, %v419
          %v2708 = vpop.permute.xlu0 %2707
          %2710 = vset.pattern.permute.xlu0 12
          %2711 = vperm.xlu0 %2710, %v420
          %v2712 = vpop.permute.xlu0 %2711
          %2714 = vset.pattern.permute.xlu0 12
          %2715 = vperm.xlu0 %2714, %v421
          %v2716 = vpop.permute.xlu0 %2715
          %2718 = vset.pattern.permute.xlu0 12
          %2719 = vperm.xlu0 %2718, %v422
          %v2720 = vpop.permute.xlu0 %2719
          %2722 = vset.pattern.permute.xlu0 12
          %2723 = vperm.xlu0 %2722, %v423
          %v2724 = vpop.permute.xlu0 %2723
          %2726 = vset.pattern.permute.xlu0 12
          %2727 = vperm.xlu0 %2726, %v424
          %v2728 = vpop.permute.xlu0 %2727
          %vm2730 = vcmp.ge.f32.partialorder %v2637, %v2700
          %vm2731 = vcmp.ge.f32.partialorder %v2641, %v2700
          %vm2732 = vcmp.ge.f32.partialorder %v2645, %v2700
          %vm2733 = vcmp.ge.f32.partialorder %v2649, %v2700
          %vm2734 = vcmp.ge.f32.partialorder %v2653, %v2700
          %vm2735 = vcmp.ge.f32.partialorder %v2657, %v2700
          %vm2736 = vcmp.ge.f32.partialorder %v2661, %v2700
          %vm2737 = vcmp.ge.f32.partialorder %v2665, %v2700
          %vm2738 = vcmp.ge.f32.partialorder %v2669, %v2700
          %vm2739 = vcmp.ge.f32.partialorder %v2673, %v2700
          %vm2740 = vcmp.ge.f32.partialorder %v2677, %v2700
          %vm2741 = vcmp.ge.f32.partialorder %v2681, %v2700
          %vm2742 = vcmp.ge.f32.partialorder %v2685, %v2700
          %vm2743 = vcmp.ge.f32.partialorder %v2689, %v2700
          %vm2744 = vcmp.ge.f32.partialorder %v2693, %v2700
          %vm2745 = vcmp.ge.f32.partialorder %v2697, %v2700
          %vm2746 = vcmp.ge.f32.partialorder %v2637, %v2704
          %vm2747 = vcmp.ge.f32.partialorder %v2641, %v2704
          %vm2748 = vcmp.ge.f32.partialorder %v2645, %v2704
          %vm2749 = vcmp.ge.f32.partialorder %v2649, %v2704
          %vm2750 = vcmp.ge.f32.partialorder %v2653, %v2704
          %vm2751 = vcmp.ge.f32.partialorder %v2657, %v2704
          %vm2752 = vcmp.ge.f32.partialorder %v2661, %v2704
          %vm2753 = vcmp.ge.f32.partialorder %v2665, %v2704
          %vm2754 = vcmp.ge.f32.partialorder %v2669, %v2704
          %vm2755 = vcmp.ge.f32.partialorder %v2673, %v2704
          %vm2756 = vcmp.ge.f32.partialorder %v2677, %v2704
          %vm2757 = vcmp.ge.f32.partialorder %v2681, %v2704
          %vm2758 = vcmp.ge.f32.partialorder %v2685, %v2704
          %vm2759 = vcmp.ge.f32.partialorder %v2689, %v2704
          %vm2760 = vcmp.ge.f32.partialorder %v2693, %v2704
          %vm2761 = vcmp.ge.f32.partialorder %v2697, %v2704
          %vm2762 = vcmp.ge.f32.partialorder %v2637, %v2708
          %vm2763 = vcmp.ge.f32.partialorder %v2641, %v2708
          %vm2764 = vcmp.ge.f32.partialorder %v2645, %v2708
          %vm2765 = vcmp.ge.f32.partialorder %v2649, %v2708
          %vm2766 = vcmp.ge.f32.partialorder %v2653, %v2708
          %vm2767 = vcmp.ge.f32.partialorder %v2657, %v2708
          %vm2768 = vcmp.ge.f32.partialorder %v2661, %v2708
          %vm2769 = vcmp.ge.f32.partialorder %v2665, %v2708
          %vm2770 = vcmp.ge.f32.partialorder %v2669, %v2708
          %vm2771 = vcmp.ge.f32.partialorder %v2673, %v2708
          %vm2772 = vcmp.ge.f32.partialorder %v2677, %v2708
          %vm2773 = vcmp.ge.f32.partialorder %v2681, %v2708
          %vm2774 = vcmp.ge.f32.partialorder %v2685, %v2708
          %vm2775 = vcmp.ge.f32.partialorder %v2689, %v2708
          %vm2776 = vcmp.ge.f32.partialorder %v2693, %v2708
          %vm2777 = vcmp.ge.f32.partialorder %v2697, %v2708
          %vm2778 = vcmp.ge.f32.partialorder %v2637, %v2712
          %vm2779 = vcmp.ge.f32.partialorder %v2641, %v2712
          %vm2780 = vcmp.ge.f32.partialorder %v2645, %v2712
          %vm2781 = vcmp.ge.f32.partialorder %v2649, %v2712
          %vm2782 = vcmp.ge.f32.partialorder %v2653, %v2712
          %vm2783 = vcmp.ge.f32.partialorder %v2657, %v2712
          %vm2784 = vcmp.ge.f32.partialorder %v2661, %v2712
          %vm2785 = vcmp.ge.f32.partialorder %v2665, %v2712
          %vm2786 = vcmp.ge.f32.partialorder %v2669, %v2712
          %vm2787 = vcmp.ge.f32.partialorder %v2673, %v2712
          %vm2788 = vcmp.ge.f32.partialorder %v2677, %v2712
          %vm2789 = vcmp.ge.f32.partialorder %v2681, %v2712
          %vm2790 = vcmp.ge.f32.partialorder %v2685, %v2712
          %vm2791 = vcmp.ge.f32.partialorder %v2689, %v2712
          %vm2792 = vcmp.ge.f32.partialorder %v2693, %v2712
          %vm2793 = vcmp.ge.f32.partialorder %v2697, %v2712
          %vm2794 = vcmp.ge.f32.partialorder %v2637, %v2716
          %vm2795 = vcmp.ge.f32.partialorder %v2641, %v2716
          %vm2796 = vcmp.ge.f32.partialorder %v2645, %v2716
          %vm2797 = vcmp.ge.f32.partialorder %v2649, %v2716
          %vm2798 = vcmp.ge.f32.partialorder %v2653, %v2716
          %vm2799 = vcmp.ge.f32.partialorder %v2657, %v2716
          %vm2800 = vcmp.ge.f32.partialorder %v2661, %v2716
          %vm2801 = vcmp.ge.f32.partialorder %v2665, %v2716
          %vm2802 = vcmp.ge.f32.partialorder %v2669, %v2716
          %vm2803 = vcmp.ge.f32.partialorder %v2673, %v2716
          %vm2804 = vcmp.ge.f32.partialorder %v2677, %v2716
          %vm2805 = vcmp.ge.f32.partialorder %v2681, %v2716
          %vm2806 = vcmp.ge.f32.partialorder %v2685, %v2716
          %vm2807 = vcmp.ge.f32.partialorder %v2689, %v2716
          %vm2808 = vcmp.ge.f32.partialorder %v2693, %v2716
          %vm2809 = vcmp.ge.f32.partialorder %v2697, %v2716
          %vm2810 = vcmp.ge.f32.partialorder %v2637, %v2720
          %vm2811 = vcmp.ge.f32.partialorder %v2641, %v2720
          %vm2812 = vcmp.ge.f32.partialorder %v2645, %v2720
          %vm2813 = vcmp.ge.f32.partialorder %v2649, %v2720
          %vm2814 = vcmp.ge.f32.partialorder %v2653, %v2720
          %vm2815 = vcmp.ge.f32.partialorder %v2657, %v2720
          %vm2816 = vcmp.ge.f32.partialorder %v2661, %v2720
          %vm2817 = vcmp.ge.f32.partialorder %v2665, %v2720
          %vm2818 = vcmp.ge.f32.partialorder %v2669, %v2720
          %vm2819 = vcmp.ge.f32.partialorder %v2673, %v2720
          %vm2820 = vcmp.ge.f32.partialorder %v2677, %v2720
          %vm2821 = vcmp.ge.f32.partialorder %v2681, %v2720
          %vm2822 = vcmp.ge.f32.partialorder %v2685, %v2720
          %vm2823 = vcmp.ge.f32.partialorder %v2689, %v2720
          %vm2824 = vcmp.ge.f32.partialorder %v2693, %v2720
          %vm2825 = vcmp.ge.f32.partialorder %v2697, %v2720
          %vm2826 = vcmp.ge.f32.partialorder %v2637, %v2724
          %vm2827 = vcmp.ge.f32.partialorder %v2641, %v2724
          %vm2828 = vcmp.ge.f32.partialorder %v2645, %v2724
          %vm2829 = vcmp.ge.f32.partialorder %v2649, %v2724
          %vm2830 = vcmp.ge.f32.partialorder %v2653, %v2724
          %vm2831 = vcmp.ge.f32.partialorder %v2657, %v2724
          %vm2832 = vcmp.ge.f32.partialorder %v2661, %v2724
          %vm2833 = vcmp.ge.f32.partialorder %v2665, %v2724
          %vm2834 = vcmp.ge.f32.partialorder %v2669, %v2724
          %vm2835 = vcmp.ge.f32.partialorder %v2673, %v2724
          %vm2836 = vcmp.ge.f32.partialorder %v2677, %v2724
          %vm2837 = vcmp.ge.f32.partialorder %v2681, %v2724
          %vm2838 = vcmp.ge.f32.partialorder %v2685, %v2724
          %vm2839 = vcmp.ge.f32.partialorder %v2689, %v2724
          %vm2840 = vcmp.ge.f32.partialorder %v2693, %v2724
          %vm2841 = vcmp.ge.f32.partialorder %v2697, %v2724
          %vm2842 = vcmp.ge.f32.partialorder %v2637, %v2728
          %vm2843 = vcmp.ge.f32.partialorder %v2641, %v2728
          %vm2844 = vcmp.ge.f32.partialorder %v2645, %v2728
          %vm2845 = vcmp.ge.f32.partialorder %v2649, %v2728
          %vm2846 = vcmp.ge.f32.partialorder %v2653, %v2728
          %vm2847 = vcmp.ge.f32.partialorder %v2657, %v2728
          %vm2848 = vcmp.ge.f32.partialorder %v2661, %v2728
          %vm2849 = vcmp.ge.f32.partialorder %v2665, %v2728
          %vm2850 = vcmp.ge.f32.partialorder %v2669, %v2728
          %vm2851 = vcmp.ge.f32.partialorder %v2673, %v2728
          %vm2852 = vcmp.ge.f32.partialorder %v2677, %v2728
          %vm2853 = vcmp.ge.f32.partialorder %v2681, %v2728
          %vm2854 = vcmp.ge.f32.partialorder %v2685, %v2728
          %vm2855 = vcmp.ge.f32.partialorder %v2689, %v2728
          %vm2856 = vcmp.ge.f32.partialorder %v2693, %v2728
          %vm2857 = vcmp.ge.f32.partialorder %v2697, %v2728
          %vm2858 = vmand %vm2506, %vm2730
          %vm2859 = vmand %vm2507, %vm2731
          %vm2860 = vmand %vm2508, %vm2732
          %vm2861 = vmand %vm2509, %vm2733
          %vm2862 = vmand %vm2510, %vm2734
          %vm2863 = vmand %vm2511, %vm2735
          %vm2864 = vmand %vm2512, %vm2736
          %vm2865 = vmand %vm2513, %vm2737
          %vm2866 = vmand %vm2514, %vm2738
          %vm2867 = vmand %vm2515, %vm2739
          %vm2868 = vmand %vm2516, %vm2740
          %vm2869 = vmand %vm2517, %vm2741
          %vm2870 = vmand %vm2518, %vm2742
          %vm2871 = vmand %vm2519, %vm2743
          %vm2872 = vmand %vm2520, %vm2744
          %vm2873 = vmand %vm2521, %vm2745
          %vm2874 = vmand %vm2522, %vm2746
          %vm2875 = vmand %vm2523, %vm2747
          %vm2876 = vmand %vm2524, %vm2748
          %vm2877 = vmand %vm2525, %vm2749
          %vm2878 = vmand %vm2526, %vm2750
          %vm2879 = vmand %vm2527, %vm2751
          %vm2880 = vmand %vm2528, %vm2752
          %vm2881 = vmand %vm2529, %vm2753
          %vm2882 = vmand %vm2530, %vm2754
          %vm2883 = vmand %vm2531, %vm2755
          %vm2884 = vmand %vm2532, %vm2756
          %vm2885 = vmand %vm2533, %vm2757
          %vm2886 = vmand %vm2534, %vm2758
          %vm2887 = vmand %vm2535, %vm2759
          %vm2888 = vmand %vm2536, %vm2760
          %vm2889 = vmand %vm2537, %vm2761
          %vm2890 = vmand %vm2538, %vm2762
          %vm2891 = vmand %vm2539, %vm2763
          %vm2892 = vmand %vm2540, %vm2764
          %vm2893 = vmand %vm2541, %vm2765
          %vm2894 = vmand %vm2542, %vm2766
          %vm2895 = vmand %vm2543, %vm2767
          %vm2896 = vmand %vm2544, %vm2768
          %vm2897 = vmand %vm2545, %vm2769
          %vm2898 = vmand %vm2546, %vm2770
          %vm2899 = vmand %vm2547, %vm2771
          %vm2900 = vmand %vm2548, %vm2772
          %vm2901 = vmand %vm2549, %vm2773
          %vm2902 = vmand %vm2550, %vm2774
          %vm2903 = vmand %vm2551, %vm2775
          %vm2904 = vmand %vm2552, %vm2776
          %vm2905 = vmand %vm2553, %vm2777
          %vm2906 = vmand %vm2554, %vm2778
          %vm2907 = vmand %vm2555, %vm2779
          %vm2908 = vmand %vm2556, %vm2780
          %vm2909 = vmand %vm2557, %vm2781
          %vm2910 = vmand %vm2558, %vm2782
          %vm2911 = vmand %vm2559, %vm2783
          %vm2912 = vmand %vm2560, %vm2784
          %vm2913 = vmand %vm2561, %vm2785
          %vm2914 = vmand %vm2562, %vm2786
          %vm2915 = vmand %vm2563, %vm2787
          %vm2916 = vmand %vm2564, %vm2788
          %vm2917 = vmand %vm2565, %vm2789
          %vm2918 = vmand %vm2566, %vm2790
          %vm2919 = vmand %vm2567, %vm2791
          %vm2920 = vmand %vm2568, %vm2792
          %vm2921 = vmand %vm2569, %vm2793
          %vm2922 = vmand %vm2570, %vm2794
          %vm2923 = vmand %vm2571, %vm2795
          %vm2924 = vmand %vm2572, %vm2796
          %vm2925 = vmand %vm2573, %vm2797
          %vm2926 = vmand %vm2574, %vm2798
          %vm2927 = vmand %vm2575, %vm2799
          %vm2928 = vmand %vm2576, %vm2800
          %vm2929 = vmand %vm2577, %vm2801
          %vm2930 = vmand %vm2578, %vm2802
          %vm2931 = vmand %vm2579, %vm2803
          %vm2932 = vmand %vm2580, %vm2804
          %vm2933 = vmand %vm2581, %vm2805
          %vm2934 = vmand %vm2582, %vm2806
          %vm2935 = vmand %vm2583, %vm2807
          %vm2936 = vmand %vm2584, %vm2808
          %vm2937 = vmand %vm2585, %vm2809
          %vm2938 = vmand %vm2586, %vm2810
          %vm2939 = vmand %vm2587, %vm2811
          %vm2940 = vmand %vm2588, %vm2812
          %vm2941 = vmand %vm2589, %vm2813
          %vm2942 = vmand %vm2590, %vm2814
          %vm2943 = vmand %vm2591, %vm2815
          %vm2944 = vmand %vm2592, %vm2816
          %vm2945 = vmand %vm2593, %vm2817
          %vm2946 = vmand %vm2594, %vm2818
          %vm2947 = vmand %vm2595, %vm2819
          %vm2948 = vmand %vm2596, %vm2820
          %vm2949 = vmand %vm2597, %vm2821
          %vm2950 = vmand %vm2598, %vm2822
          %vm2951 = vmand %vm2599, %vm2823
          %vm2952 = vmand %vm2600, %vm2824
          %vm2953 = vmand %vm2601, %vm2825
          %vm2954 = vmand %vm2602, %vm2826
          %vm2955 = vmand %vm2603, %vm2827
          %vm2956 = vmand %vm2604, %vm2828
          %vm2957 = vmand %vm2605, %vm2829
          %vm2958 = vmand %vm2606, %vm2830
          %vm2959 = vmand %vm2607, %vm2831
          %vm2960 = vmand %vm2608, %vm2832
          %vm2961 = vmand %vm2609, %vm2833
          %vm2962 = vmand %vm2610, %vm2834
          %vm2963 = vmand %vm2611, %vm2835
          %vm2964 = vmand %vm2612, %vm2836
          %vm2965 = vmand %vm2613, %vm2837
          %vm2966 = vmand %vm2614, %vm2838
          %vm2967 = vmand %vm2615, %vm2839
          %vm2968 = vmand %vm2616, %vm2840
          %vm2969 = vmand %vm2617, %vm2841
          %vm2970 = vmand %vm2618, %vm2842
          %vm2971 = vmand %vm2619, %vm2843
          %vm2972 = vmand %vm2620, %vm2844
          %vm2973 = vmand %vm2621, %vm2845
          %vm2974 = vmand %vm2622, %vm2846
          %vm2975 = vmand %vm2623, %vm2847
          %vm2976 = vmand %vm2624, %vm2848
          %vm2977 = vmand %vm2625, %vm2849
          %vm2978 = vmand %vm2626, %vm2850
          %vm2979 = vmand %vm2627, %vm2851
          %vm2980 = vmand %vm2628, %vm2852
          %vm2981 = vmand %vm2629, %vm2853
          %vm2982 = vmand %vm2630, %vm2854
          %vm2983 = vmand %vm2631, %vm2855
          %vm2984 = vmand %vm2632, %vm2856
          %vm2985 = vmand %vm2633, %vm2857
          %2986 = vset.pattern.permute.xlu0 15
          %2987 = vperm.xlu0 %2986, %v417
          %v2988 = vpop.permute.xlu0 %2987
          %2990 = vset.pattern.permute.xlu0 15
          %2991 = vperm.xlu0 %2990, %v418
          %v2992 = vpop.permute.xlu0 %2991
          %2994 = vset.pattern.permute.xlu0 15
          %2995 = vperm.xlu0 %2994, %v419
          %v2996 = vpop.permute.xlu0 %2995
          %2998 = vset.pattern.permute.xlu0 15
          %2999 = vperm.xlu0 %2998, %v420
          %v3000 = vpop.permute.xlu0 %2999
          %3002 = vset.pattern.permute.xlu0 15
          %3003 = vperm.xlu0 %3002, %v421
          %v3004 = vpop.permute.xlu0 %3003
          %3006 = vset.pattern.permute.xlu0 15
          %3007 = vperm.xlu0 %3006, %v422
          %v3008 = vpop.permute.xlu0 %3007
          %3010 = vset.pattern.permute.xlu0 15
          %3011 = vperm.xlu0 %3010, %v423
          %v3012 = vpop.permute.xlu0 %3011
          %3014 = vset.pattern.permute.xlu0 15
          %3015 = vperm.xlu0 %3014, %v424
          %v3016 = vpop.permute.xlu0 %3015
          %vm3018 = vcmp.le.f32.partialorder %v2637, %v2988
          %vm3019 = vcmp.le.f32.partialorder %v2641, %v2988
          %vm3020 = vcmp.le.f32.partialorder %v2645, %v2988
          %vm3021 = vcmp.le.f32.partialorder %v2649, %v2988
          %vm3022 = vcmp.le.f32.partialorder %v2653, %v2988
          %vm3023 = vcmp.le.f32.partialorder %v2657, %v2988
          %vm3024 = vcmp.le.f32.partialorder %v2661, %v2988
          %vm3025 = vcmp.le.f32.partialorder %v2665, %v2988
          %vm3026 = vcmp.le.f32.partialorder %v2669, %v2988
          %vm3027 = vcmp.le.f32.partialorder %v2673, %v2988
          %vm3028 = vcmp.le.f32.partialorder %v2677, %v2988
          %vm3029 = vcmp.le.f32.partialorder %v2681, %v2988
          %vm3030 = vcmp.le.f32.partialorder %v2685, %v2988
          %vm3031 = vcmp.le.f32.partialorder %v2689, %v2988
          %vm3032 = vcmp.le.f32.partialorder %v2693, %v2988
          %vm3033 = vcmp.le.f32.partialorder %v2697, %v2988
          %vm3034 = vcmp.le.f32.partialorder %v2637, %v2992
          %vm3035 = vcmp.le.f32.partialorder %v2641, %v2992
          %vm3036 = vcmp.le.f32.partialorder %v2645, %v2992
          %vm3037 = vcmp.le.f32.partialorder %v2649, %v2992
          %vm3038 = vcmp.le.f32.partialorder %v2653, %v2992
          %vm3039 = vcmp.le.f32.partialorder %v2657, %v2992
          %vm3040 = vcmp.le.f32.partialorder %v2661, %v2992
          %vm3041 = vcmp.le.f32.partialorder %v2665, %v2992
          %vm3042 = vcmp.le.f32.partialorder %v2669, %v2992
          %vm3043 = vcmp.le.f32.partialorder %v2673, %v2992
          %vm3044 = vcmp.le.f32.partialorder %v2677, %v2992
          %vm3045 = vcmp.le.f32.partialorder %v2681, %v2992
          %vm3046 = vcmp.le.f32.partialorder %v2685, %v2992
          %vm3047 = vcmp.le.f32.partialorder %v2689, %v2992
          %vm3048 = vcmp.le.f32.partialorder %v2693, %v2992
          %vm3049 = vcmp.le.f32.partialorder %v2697, %v2992
          %vm3050 = vcmp.le.f32.partialorder %v2637, %v2996
          %vm3051 = vcmp.le.f32.partialorder %v2641, %v2996
          %vm3052 = vcmp.le.f32.partialorder %v2645, %v2996
          %vm3053 = vcmp.le.f32.partialorder %v2649, %v2996
          %vm3054 = vcmp.le.f32.partialorder %v2653, %v2996
          %vm3055 = vcmp.le.f32.partialorder %v2657, %v2996
          %vm3056 = vcmp.le.f32.partialorder %v2661, %v2996
          %vm3057 = vcmp.le.f32.partialorder %v2665, %v2996
          %vm3058 = vcmp.le.f32.partialorder %v2669, %v2996
          %vm3059 = vcmp.le.f32.partialorder %v2673, %v2996
          %vm3060 = vcmp.le.f32.partialorder %v2677, %v2996
          %vm3061 = vcmp.le.f32.partialorder %v2681, %v2996
          %vm3062 = vcmp.le.f32.partialorder %v2685, %v2996
          %vm3063 = vcmp.le.f32.partialorder %v2689, %v2996
          %vm3064 = vcmp.le.f32.partialorder %v2693, %v2996
          %vm3065 = vcmp.le.f32.partialorder %v2697, %v2996
          %vm3066 = vcmp.le.f32.partialorder %v2637, %v3000
          %vm3067 = vcmp.le.f32.partialorder %v2641, %v3000
          %vm3068 = vcmp.le.f32.partialorder %v2645, %v3000
          %vm3069 = vcmp.le.f32.partialorder %v2649, %v3000
          %vm3070 = vcmp.le.f32.partialorder %v2653, %v3000
          %vm3071 = vcmp.le.f32.partialorder %v2657, %v3000
          %vm3072 = vcmp.le.f32.partialorder %v2661, %v3000
          %vm3073 = vcmp.le.f32.partialorder %v2665, %v3000
          %vm3074 = vcmp.le.f32.partialorder %v2669, %v3000
          %vm3075 = vcmp.le.f32.partialorder %v2673, %v3000
          %vm3076 = vcmp.le.f32.partialorder %v2677, %v3000
          %vm3077 = vcmp.le.f32.partialorder %v2681, %v3000
          %vm3078 = vcmp.le.f32.partialorder %v2685, %v3000
          %vm3079 = vcmp.le.f32.partialorder %v2689, %v3000
          %vm3080 = vcmp.le.f32.partialorder %v2693, %v3000
          %vm3081 = vcmp.le.f32.partialorder %v2697, %v3000
          %vm3082 = vcmp.le.f32.partialorder %v2637, %v3004
          %vm3083 = vcmp.le.f32.partialorder %v2641, %v3004
          %vm3084 = vcmp.le.f32.partialorder %v2645, %v3004
          %vm3085 = vcmp.le.f32.partialorder %v2649, %v3004
          %vm3086 = vcmp.le.f32.partialorder %v2653, %v3004
          %vm3087 = vcmp.le.f32.partialorder %v2657, %v3004
          %vm3088 = vcmp.le.f32.partialorder %v2661, %v3004
          %vm3089 = vcmp.le.f32.partialorder %v2665, %v3004
          %vm3090 = vcmp.le.f32.partialorder %v2669, %v3004
          %vm3091 = vcmp.le.f32.partialorder %v2673, %v3004
          %vm3092 = vcmp.le.f32.partialorder %v2677, %v3004
          %vm3093 = vcmp.le.f32.partialorder %v2681, %v3004
          %vm3094 = vcmp.le.f32.partialorder %v2685, %v3004
          %vm3095 = vcmp.le.f32.partialorder %v2689, %v3004
          %vm3096 = vcmp.le.f32.partialorder %v2693, %v3004
          %vm3097 = vcmp.le.f32.partialorder %v2697, %v3004
          %vm3098 = vcmp.le.f32.partialorder %v2637, %v3008
          %vm3099 = vcmp.le.f32.partialorder %v2641, %v3008
          %vm3100 = vcmp.le.f32.partialorder %v2645, %v3008
          %vm3101 = vcmp.le.f32.partialorder %v2649, %v3008
          %vm3102 = vcmp.le.f32.partialorder %v2653, %v3008
          %vm3103 = vcmp.le.f32.partialorder %v2657, %v3008
          %vm3104 = vcmp.le.f32.partialorder %v2661, %v3008
          %vm3105 = vcmp.le.f32.partialorder %v2665, %v3008
          %vm3106 = vcmp.le.f32.partialorder %v2669, %v3008
          %vm3107 = vcmp.le.f32.partialorder %v2673, %v3008
          %vm3108 = vcmp.le.f32.partialorder %v2677, %v3008
          %vm3109 = vcmp.le.f32.partialorder %v2681, %v3008
          %vm3110 = vcmp.le.f32.partialorder %v2685, %v3008
          %vm3111 = vcmp.le.f32.partialorder %v2689, %v3008
          %vm3112 = vcmp.le.f32.partialorder %v2693, %v3008
          %vm3113 = vcmp.le.f32.partialorder %v2697, %v3008
          %vm3114 = vcmp.le.f32.partialorder %v2637, %v3012
          %vm3115 = vcmp.le.f32.partialorder %v2641, %v3012
          %vm3116 = vcmp.le.f32.partialorder %v2645, %v3012
          %vm3117 = vcmp.le.f32.partialorder %v2649, %v3012
          %vm3118 = vcmp.le.f32.partialorder %v2653, %v3012
          %vm3119 = vcmp.le.f32.partialorder %v2657, %v3012
          %vm3120 = vcmp.le.f32.partialorder %v2661, %v3012
          %vm3121 = vcmp.le.f32.partialorder %v2665, %v3012
          %vm3122 = vcmp.le.f32.partialorder %v2669, %v3012
          %vm3123 = vcmp.le.f32.partialorder %v2673, %v3012
          %vm3124 = vcmp.le.f32.partialorder %v2677, %v3012
          %vm3125 = vcmp.le.f32.partialorder %v2681, %v3012
          %vm3126 = vcmp.le.f32.partialorder %v2685, %v3012
          %vm3127 = vcmp.le.f32.partialorder %v2689, %v3012
          %vm3128 = vcmp.le.f32.partialorder %v2693, %v3012
          %vm3129 = vcmp.le.f32.partialorder %v2697, %v3012
          %vm3130 = vcmp.le.f32.partialorder %v2637, %v3016
          %vm3131 = vcmp.le.f32.partialorder %v2641, %v3016
          %vm3132 = vcmp.le.f32.partialorder %v2645, %v3016
          %vm3133 = vcmp.le.f32.partialorder %v2649, %v3016
          %vm3134 = vcmp.le.f32.partialorder %v2653, %v3016
          %vm3135 = vcmp.le.f32.partialorder %v2657, %v3016
          %vm3136 = vcmp.le.f32.partialorder %v2661, %v3016
          %vm3137 = vcmp.le.f32.partialorder %v2665, %v3016
          %vm3138 = vcmp.le.f32.partialorder %v2669, %v3016
          %vm3139 = vcmp.le.f32.partialorder %v2673, %v3016
          %vm3140 = vcmp.le.f32.partialorder %v2677, %v3016
          %vm3141 = vcmp.le.f32.partialorder %v2681, %v3016
          %vm3142 = vcmp.le.f32.partialorder %v2685, %v3016
          %vm3143 = vcmp.le.f32.partialorder %v2689, %v3016
          %vm3144 = vcmp.le.f32.partialorder %v2693, %v3016
          %vm3145 = vcmp.le.f32.partialorder %v2697, %v3016
          %vm3146 = vmand %vm2858, %vm3018
          %vm3147 = vmand %vm2859, %vm3019
          %vm3148 = vmand %vm2860, %vm3020
          %vm3149 = vmand %vm2861, %vm3021
          %vm3150 = vmand %vm2862, %vm3022
          %vm3151 = vmand %vm2863, %vm3023
          %vm3152 = vmand %vm2864, %vm3024
          %vm3153 = vmand %vm2865, %vm3025
          %vm3154 = vmand %vm2866, %vm3026
          %vm3155 = vmand %vm2867, %vm3027
          %vm3156 = vmand %vm2868, %vm3028
          %vm3157 = vmand %vm2869, %vm3029
          %vm3158 = vmand %vm2870, %vm3030
          %vm3159 = vmand %vm2871, %vm3031
          %vm3160 = vmand %vm2872, %vm3032
          %vm3161 = vmand %vm2873, %vm3033
          %vm3162 = vmand %vm2874, %vm3034
          %vm3163 = vmand %vm2875, %vm3035
          %vm3164 = vmand %vm2876, %vm3036
          %vm3165 = vmand %vm2877, %vm3037
          %vm3166 = vmand %vm2878, %vm3038
          %vm3167 = vmand %vm2879, %vm3039
          %vm3168 = vmand %vm2880, %vm3040
          %vm3169 = vmand %vm2881, %vm3041
          %vm3170 = vmand %vm2882, %vm3042
          %vm3171 = vmand %vm2883, %vm3043
          %vm3172 = vmand %vm2884, %vm3044
          %vm3173 = vmand %vm2885, %vm3045
          %vm3174 = vmand %vm2886, %vm3046
          %vm3175 = vmand %vm2887, %vm3047
          %vm3176 = vmand %vm2888, %vm3048
          %vm3177 = vmand %vm2889, %vm3049
          %vm3178 = vmand %vm2890, %vm3050
          %vm3179 = vmand %vm2891, %vm3051
          %vm3180 = vmand %vm2892, %vm3052
          %vm3181 = vmand %vm2893, %vm3053
          %vm3182 = vmand %vm2894, %vm3054
          %vm3183 = vmand %vm2895, %vm3055
          %vm3184 = vmand %vm2896, %vm3056
          %vm3185 = vmand %vm2897, %vm3057
          %vm3186 = vmand %vm2898, %vm3058
          %vm3187 = vmand %vm2899, %vm3059
          %vm3188 = vmand %vm2900, %vm3060
          %vm3189 = vmand %vm2901, %vm3061
          %vm3190 = vmand %vm2902, %vm3062
          %vm3191 = vmand %vm2903, %vm3063
          %vm3192 = vmand %vm2904, %vm3064
          %vm3193 = vmand %vm2905, %vm3065
          %vm3194 = vmand %vm2906, %vm3066
          %vm3195 = vmand %vm2907, %vm3067
          %vm3196 = vmand %vm2908, %vm3068
          %vm3197 = vmand %vm2909, %vm3069
          %vm3198 = vmand %vm2910, %vm3070
          %vm3199 = vmand %vm2911, %vm3071
          %vm3200 = vmand %vm2912, %vm3072
          %vm3201 = vmand %vm2913, %vm3073
          %vm3202 = vmand %vm2914, %vm3074
          %vm3203 = vmand %vm2915, %vm3075
          %vm3204 = vmand %vm2916, %vm3076
          %vm3205 = vmand %vm2917, %vm3077
          %vm3206 = vmand %vm2918, %vm3078
          %vm3207 = vmand %vm2919, %vm3079
          %vm3208 = vmand %vm2920, %vm3080
          %vm3209 = vmand %vm2921, %vm3081
          %vm3210 = vmand %vm2922, %vm3082
          %vm3211 = vmand %vm2923, %vm3083
          %vm3212 = vmand %vm2924, %vm3084
          %vm3213 = vmand %vm2925, %vm3085
          %vm3214 = vmand %vm2926, %vm3086
          %vm3215 = vmand %vm2927, %vm3087
          %vm3216 = vmand %vm2928, %vm3088
          %vm3217 = vmand %vm2929, %vm3089
          %vm3218 = vmand %vm2930, %vm3090
          %vm3219 = vmand %vm2931, %vm3091
          %vm3220 = vmand %vm2932, %vm3092
          %vm3221 = vmand %vm2933, %vm3093
          %vm3222 = vmand %vm2934, %vm3094
          %vm3223 = vmand %vm2935, %vm3095
          %vm3224 = vmand %vm2936, %vm3096
          %vm3225 = vmand %vm2937, %vm3097
          %vm3226 = vmand %vm2938, %vm3098
          %vm3227 = vmand %vm2939, %vm3099
          %vm3228 = vmand %vm2940, %vm3100
          %vm3229 = vmand %vm2941, %vm3101
          %vm3230 = vmand %vm2942, %vm3102
          %vm3231 = vmand %vm2943, %vm3103
          %vm3232 = vmand %vm2944, %vm3104
          %vm3233 = vmand %vm2945, %vm3105
          %vm3234 = vmand %vm2946, %vm3106
          %vm3235 = vmand %vm2947, %vm3107
          %vm3236 = vmand %vm2948, %vm3108
          %vm3237 = vmand %vm2949, %vm3109
          %vm3238 = vmand %vm2950, %vm3110
          %vm3239 = vmand %vm2951, %vm3111
          %vm3240 = vmand %vm2952, %vm3112
          %vm3241 = vmand %vm2953, %vm3113
          %vm3242 = vmand %vm2954, %vm3114
          %vm3243 = vmand %vm2955, %vm3115
          %vm3244 = vmand %vm2956, %vm3116
          %vm3245 = vmand %vm2957, %vm3117
          %vm3246 = vmand %vm2958, %vm3118
          %vm3247 = vmand %vm2959, %vm3119
          %vm3248 = vmand %vm2960, %vm3120
          %vm3249 = vmand %vm2961, %vm3121
          %vm3250 = vmand %vm2962, %vm3122
          %vm3251 = vmand %vm2963, %vm3123
          %vm3252 = vmand %vm2964, %vm3124
          %vm3253 = vmand %vm2965, %vm3125
          %vm3254 = vmand %vm2966, %vm3126
          %vm3255 = vmand %vm2967, %vm3127
          %vm3256 = vmand %vm2968, %vm3128
          %vm3257 = vmand %vm2969, %vm3129
          %vm3258 = vmand %vm2970, %vm3130
          %vm3259 = vmand %vm2971, %vm3131
          %vm3260 = vmand %vm2972, %vm3132
          %vm3261 = vmand %vm2973, %vm3133
          %vm3262 = vmand %vm2974, %vm3134
          %vm3263 = vmand %vm2975, %vm3135
          %vm3264 = vmand %vm2976, %vm3136
          %vm3265 = vmand %vm2977, %vm3137
          %vm3266 = vmand %vm2978, %vm3138
          %vm3267 = vmand %vm2979, %vm3139
          %vm3268 = vmand %vm2980, %vm3140
          %vm3269 = vmand %vm2981, %vm3141
          %vm3270 = vmand %vm2982, %vm3142
          %vm3271 = vmand %vm2983, %vm3143
          %vm3272 = vmand %vm2984, %vm3144
          %vm3273 = vmand %vm2985, %vm3145
          %v3274 = vsel %vm3146, %v1354, 0.0
          %v3275 = vsel %vm3147, %v1355, 0.0
          %v3276 = vsel %vm3148, %v1356, 0.0
          %v3277 = vsel %vm3149, %v1357, 0.0
          %v3278 = vsel %vm3150, %v1358, 0.0
          %v3279 = vsel %vm3151, %v1359, 0.0
          %v3280 = vsel %vm3152, %v1360, 0.0
          %v3281 = vsel %vm3153, %v1361, 0.0
          %v3282 = vsel %vm3154, %v1362, 0.0
          %v3283 = vsel %vm3155, %v1363, 0.0
          %v3284 = vsel %vm3156, %v1364, 0.0
          %v3285 = vsel %vm3157, %v1365, 0.0
          %v3286 = vsel %vm3158, %v1366, 0.0
          %v3287 = vsel %vm3159, %v1367, 0.0
          %v3288 = vsel %vm3160, %v1368, 0.0
          %v3289 = vsel %vm3161, %v1369, 0.0
          %v3290 = vsel %vm3162, %v1370, 0.0
          %v3291 = vsel %vm3163, %v1371, 0.0
          %v3292 = vsel %vm3164, %v1372, 0.0
          %v3293 = vsel %vm3165, %v1373, 0.0
          %v3294 = vsel %vm3166, %v1374, 0.0
          %v3295 = vsel %vm3167, %v1375, 0.0
          %v3296 = vsel %vm3168, %v1376, 0.0
          %v3297 = vsel %vm3169, %v1377, 0.0
          %v3298 = vsel %vm3170, %v1378, 0.0
          %v3299 = vsel %vm3171, %v1379, 0.0
          %v3300 = vsel %vm3172, %v1380, 0.0
          %v3301 = vsel %vm3173, %v1381, 0.0
          %v3302 = vsel %vm3174, %v1382, 0.0
          %v3303 = vsel %vm3175, %v1383, 0.0
          %v3304 = vsel %vm3176, %v1384, 0.0
          %v3305 = vsel %vm3177, %v1385, 0.0
          %v3306 = vsel %vm3178, %v1386, 0.0
          %v3307 = vsel %vm3179, %v1387, 0.0
          %v3308 = vsel %vm3180, %v1388, 0.0
          %v3309 = vsel %vm3181, %v1389, 0.0
          %v3310 = vsel %vm3182, %v1390, 0.0
          %v3311 = vsel %vm3183, %v1391, 0.0
          %v3312 = vsel %vm3184, %v1392, 0.0
          %v3313 = vsel %vm3185, %v1393, 0.0
          %v3314 = vsel %vm3186, %v1394, 0.0
          %v3315 = vsel %vm3187, %v1395, 0.0
          %v3316 = vsel %vm3188, %v1396, 0.0
          %v3317 = vsel %vm3189, %v1397, 0.0
          %v3318 = vsel %vm3190, %v1398, 0.0
          %v3319 = vsel %vm3191, %v1399, 0.0
          %v3320 = vsel %vm3192, %v1400, 0.0
          %v3321 = vsel %vm3193, %v1401, 0.0
          %v3322 = vsel %vm3194, %v1402, 0.0
          %v3323 = vsel %vm3195, %v1403, 0.0
          %v3324 = vsel %vm3196, %v1404, 0.0
          %v3325 = vsel %vm3197, %v1405, 0.0
          %v3326 = vsel %vm3198, %v1406, 0.0
          %v3327 = vsel %vm3199, %v1407, 0.0
          %v3328 = vsel %vm3200, %v1408, 0.0
          %v3329 = vsel %vm3201, %v1409, 0.0
          %v3330 = vsel %vm3202, %v1410, 0.0
          %v3331 = vsel %vm3203, %v1411, 0.0
          %v3332 = vsel %vm3204, %v1412, 0.0
          %v3333 = vsel %vm3205, %v1413, 0.0
          %v3334 = vsel %vm3206, %v1414, 0.0
          %v3335 = vsel %vm3207, %v1415, 0.0
          %v3336 = vsel %vm3208, %v1416, 0.0
          %v3337 = vsel %vm3209, %v1417, 0.0
          %v3338 = vsel %vm3210, %v1418, 0.0
          %v3339 = vsel %vm3211, %v1419, 0.0
          %v3340 = vsel %vm3212, %v1420, 0.0
          %v3341 = vsel %vm3213, %v1421, 0.0
          %v3342 = vsel %vm3214, %v1422, 0.0
          %v3343 = vsel %vm3215, %v1423, 0.0
          %v3344 = vsel %vm3216, %v1424, 0.0
          %v3345 = vsel %vm3217, %v1425, 0.0
          %v3346 = vsel %vm3218, %v1426, 0.0
          %v3347 = vsel %vm3219, %v1427, 0.0
          %v3348 = vsel %vm3220, %v1428, 0.0
          %v3349 = vsel %vm3221, %v1429, 0.0
          %v3350 = vsel %vm3222, %v1430, 0.0
          %v3351 = vsel %vm3223, %v1431, 0.0
          %v3352 = vsel %vm3224, %v1432, 0.0
          %v3353 = vsel %vm3225, %v1433, 0.0
          %v3354 = vsel %vm3226, %v1434, 0.0
          %v3355 = vsel %vm3227, %v1435, 0.0
          %v3356 = vsel %vm3228, %v1436, 0.0
          %v3357 = vsel %vm3229, %v1437, 0.0
          %v3358 = vsel %vm3230, %v1438, 0.0
          %v3359 = vsel %vm3231, %v1439, 0.0
          %v3360 = vsel %vm3232, %v1440, 0.0
          %v3361 = vsel %vm3233, %v1441, 0.0
          %v3362 = vsel %vm3234, %v1442, 0.0
          %v3363 = vsel %vm3235, %v1443, 0.0
          %v3364 = vsel %vm3236, %v1444, 0.0
          %v3365 = vsel %vm3237, %v1445, 0.0
          %v3366 = vsel %vm3238, %v1446, 0.0
          %v3367 = vsel %vm3239, %v1447, 0.0
          %v3368 = vsel %vm3240, %v1448, 0.0
          %v3369 = vsel %vm3241, %v1449, 0.0
          %v3370 = vsel %vm3242, %v1450, 0.0
          %v3371 = vsel %vm3243, %v1451, 0.0
          %v3372 = vsel %vm3244, %v1452, 0.0
          %v3373 = vsel %vm3245, %v1453, 0.0
          %v3374 = vsel %vm3246, %v1454, 0.0
          %v3375 = vsel %vm3247, %v1455, 0.0
          %v3376 = vsel %vm3248, %v1456, 0.0
          %v3377 = vsel %vm3249, %v1457, 0.0
          %v3378 = vsel %vm3250, %v1458, 0.0
          %v3379 = vsel %vm3251, %v1459, 0.0
          %v3380 = vsel %vm3252, %v1460, 0.0
          %v3381 = vsel %vm3253, %v1461, 0.0
          %v3382 = vsel %vm3254, %v1462, 0.0
          %v3383 = vsel %vm3255, %v1463, 0.0
          %v3384 = vsel %vm3256, %v1464, 0.0
          %v3385 = vsel %vm3257, %v1465, 0.0
          %v3386 = vsel %vm3258, %v1466, 0.0
          %v3387 = vsel %vm3259, %v1467, 0.0
          %v3388 = vsel %vm3260, %v1468, 0.0
          %v3389 = vsel %vm3261, %v1469, 0.0
          %v3390 = vsel %vm3262, %v1470, 0.0
          %v3391 = vsel %vm3263, %v1471, 0.0
          %v3392 = vsel %vm3264, %v1472, 0.0
          %v3393 = vsel %vm3265, %v1473, 0.0
          %v3394 = vsel %vm3266, %v1474, 0.0
          %v3395 = vsel %vm3267, %v1475, 0.0
          %v3396 = vsel %vm3268, %v1476, 0.0
          %v3397 = vsel %vm3269, %v1477, 0.0
          %v3398 = vsel %vm3270, %v1478, 0.0
          %v3399 = vsel %vm3271, %v1479, 0.0
          %v3400 = vsel %vm3272, %v1480, 0.0
          %v3401 = vsel %vm3273, %v1481, 0.0
          %v3402 = vpack.c.bf16 %v3290, %v3274
          %v3403 = vpack.c.bf16 %v3291, %v3275
          %v3404 = vpack.c.bf16 %v3292, %v3276
          %v3405 = vpack.c.bf16 %v3293, %v3277
          %v3406 = vpack.c.bf16 %v3294, %v3278
          %v3407 = vpack.c.bf16 %v3295, %v3279
          %v3408 = vpack.c.bf16 %v3296, %v3280
          %v3409 = vpack.c.bf16 %v3297, %v3281
          %v3410 = vpack.c.bf16 %v3298, %v3282
          %v3411 = vpack.c.bf16 %v3299, %v3283
          %v3412 = vpack.c.bf16 %v3300, %v3284
          %v3413 = vpack.c.bf16 %v3301, %v3285
          %v3414 = vpack.c.bf16 %v3302, %v3286
          %v3415 = vpack.c.bf16 %v3303, %v3287
          %v3416 = vpack.c.bf16 %v3304, %v3288
          %v3417 = vpack.c.bf16 %v3305, %v3289
          %v3418 = vpack.c.bf16 %v3322, %v3306
          %v3419 = vpack.c.bf16 %v3323, %v3307
          %v3420 = vpack.c.bf16 %v3324, %v3308
          %v3421 = vpack.c.bf16 %v3325, %v3309
          %v3422 = vpack.c.bf16 %v3326, %v3310
          %v3423 = vpack.c.bf16 %v3327, %v3311
          %v3424 = vpack.c.bf16 %v3328, %v3312
          %v3425 = vpack.c.bf16 %v3329, %v3313
          %v3426 = vpack.c.bf16 %v3330, %v3314
          %v3427 = vpack.c.bf16 %v3331, %v3315
          %v3428 = vpack.c.bf16 %v3332, %v3316
          %v3429 = vpack.c.bf16 %v3333, %v3317
          %v3430 = vpack.c.bf16 %v3334, %v3318
          %v3431 = vpack.c.bf16 %v3335, %v3319
          %v3432 = vpack.c.bf16 %v3336, %v3320
          %v3433 = vpack.c.bf16 %v3337, %v3321
          %v3434 = vpack.c.bf16 %v3354, %v3338
          %v3435 = vpack.c.bf16 %v3355, %v3339
          %v3436 = vpack.c.bf16 %v3356, %v3340
          %v3437 = vpack.c.bf16 %v3357, %v3341
          %v3438 = vpack.c.bf16 %v3358, %v3342
          %v3439 = vpack.c.bf16 %v3359, %v3343
          %v3440 = vpack.c.bf16 %v3360, %v3344
          %v3441 = vpack.c.bf16 %v3361, %v3345
          %v3442 = vpack.c.bf16 %v3362, %v3346
          %v3443 = vpack.c.bf16 %v3363, %v3347
          %v3444 = vpack.c.bf16 %v3364, %v3348
          %v3445 = vpack.c.bf16 %v3365, %v3349
          %v3446 = vpack.c.bf16 %v3366, %v3350
          %v3447 = vpack.c.bf16 %v3367, %v3351
          %v3448 = vpack.c.bf16 %v3368, %v3352
          %v3449 = vpack.c.bf16 %v3369, %v3353
          %v3450 = vpack.c.bf16 %v3386, %v3370
          %v3451 = vpack.c.bf16 %v3387, %v3371
          %v3452 = vpack.c.bf16 %v3388, %v3372
          %v3453 = vpack.c.bf16 %v3389, %v3373
          %v3454 = vpack.c.bf16 %v3390, %v3374
          %v3455 = vpack.c.bf16 %v3391, %v3375
          %v3456 = vpack.c.bf16 %v3392, %v3376
          %v3457 = vpack.c.bf16 %v3393, %v3377
          %v3458 = vpack.c.bf16 %v3394, %v3378
          %v3459 = vpack.c.bf16 %v3395, %v3379
          %v3460 = vpack.c.bf16 %v3396, %v3380
          %v3461 = vpack.c.bf16 %v3397, %v3381
          %v3462 = vpack.c.bf16 %v3398, %v3382
          %v3463 = vpack.c.bf16 %v3399, %v3383
          %v3464 = vpack.c.bf16 %v3400, %v3384
          %v3465 = vpack.c.bf16 %v3401, %v3385
          %v3466 = vld [vmem:[%s324] sm:$0xff]
          %v3467 = vld [vmem:[%s324 + $0x8] sm:$0xff]
          %v3468 = vld [vmem:[%s324 + $0x10] sm:$0xff]
          %v3469 = vld [vmem:[%s324 + $0x18] sm:$0xff]
          %v3470 = vld [vmem:[%s324 + $0x20] sm:$0xff]
          %v3471 = vld [vmem:[%s324 + $0x28] sm:$0xff]
          %v3472 = vld [vmem:[%s324 + $0x30] sm:$0xff]
          %v3473 = vld [vmem:[%s324 + $0x38] sm:$0xff]
          %v3474 = vld [vmem:[%s324 + $0x40] sm:$0xff]
          %v3475 = vld [vmem:[%s324 + $0x48] sm:$0xff]
          %v3476 = vld [vmem:[%s324 + $0x50] sm:$0xff]
          %v3477 = vld [vmem:[%s324 + $0x58] sm:$0xff]
          %v3478 = vld [vmem:[%s324 + $0x60] sm:$0xff]
          %v3479 = vld [vmem:[%s324 + $0x68] sm:$0xff]
          %v3480 = vld [vmem:[%s324 + $0x70] sm:$0xff]
          %v3481 = vld [vmem:[%s324 + $0x78] sm:$0xff]
          %v3482 = vld [vmem:[%s324 + $0x80] sm:$0x1]
          %v3483 = vld [vmem:[%s324 + $0x88] sm:$0x1]
          %v3484 = vld [vmem:[%s324 + $0x90] sm:$0x1]
          %v3485 = vld [vmem:[%s324 + $0x98] sm:$0x1]
          %v3486 = vld [vmem:[%s324 + $0xa0] sm:$0x1]
          %v3487 = vld [vmem:[%s324 + $0xa8] sm:$0x1]
          %v3488 = vld [vmem:[%s324 + $0xb0] sm:$0x1]
          %v3489 = vld [vmem:[%s324 + $0xb8] sm:$0x1]
          %v3490 = vld [vmem:[%s324 + $0xc0] sm:$0x1]
          %v3491 = vld [vmem:[%s324 + $0xc8] sm:$0x1]
          %v3492 = vld [vmem:[%s324 + $0xd0] sm:$0x1]
          %v3493 = vld [vmem:[%s324 + $0xd8] sm:$0x1]
          %v3494 = vld [vmem:[%s324 + $0xe0] sm:$0x1]
          %v3495 = vld [vmem:[%s324 + $0xe8] sm:$0x1]
          %v3496 = vld [vmem:[%s324 + $0xf0] sm:$0x1]
          %v3497 = vld [vmem:[%s324 + $0xf8] sm:$0x1]
          %v3498 = vld [vmem:[%s312] sm:$0xf]
          %v3499 = vld [vmem:[%s312 + $0x4] sm:$0x1]
          %v3502 = vunpack.c.l.b16 %v3498
          %v3503 = vunpack.c.l.b16 %v3499
          %v3504 = vpack.c.b16 %v3503, %v3502
          %vm3505 = vcmask 523264
          %v3507 = vsel %vm3505, %v3504, 0
          %3509 = vmatprep.subr.bf16.mxu0 %v3403
          %3510 = vmatpush1.bf16.msra.mxu0 %v3402
          %3511 = vmatprep.subr.bf16.mxu0 %v3419
          %3512 = vmatpush1.bf16.msra.mxu0 %v3418
          %3513 = vmatprep.subr.bf16.mxu0 %v3435
          %3514 = vmatpush1.bf16.msra.mxu0 %v3434
          %3515 = vmatprep.subr.bf16.mxu0 %v3451
          %3516 = vmatpush1.bf16.msra.mxu0 %v3450
          %3517 = vmatprep.subr.bf16.mxu0 0
          %3518 = vmatpush1.bf16.msra.mxu0 0
          %3519 = vmatprep.subr.bf16.mxu0 0
          %3520 = vmatpush1.bf16.msra.mxu0 0
          %3521 = vmatprep.subr.bf16.mxu0 0
          %3522 = vmatpush1.bf16.msra.mxu0 0
          %3523 = vmatprep.subr.bf16.mxu0 0
          %3524 = vmatpush1.bf16.msra.mxu0 0
          %3525 = vmatprep.subr.bf16.mxu0 0
          %3526 = vmatpush1.bf16.msra.mxu0 0
          %3527 = vmatprep.subr.bf16.mxu0 0
          %3528 = vmatpush1.bf16.msra.mxu0 0
          %3529 = vmatprep.subr.bf16.mxu0 0
          %3530 = vmatpush1.bf16.msra.mxu0 0
          %3531 = vmatprep.subr.bf16.mxu0 0
          %3532 = vmatpush1.bf16.msra.mxu0 0
          %3533 = vmatprep.subr.bf16.mxu0 0
          %3534 = vmatpush1.bf16.msra.mxu0 0
          %3535 = vmatprep.subr.bf16.mxu0 0
          %3536 = vmatpush1.bf16.msra.mxu0 0
          %3537 = vmatprep.subr.bf16.mxu0 0
          %3538 = vmatpush1.bf16.msra.mxu0 0
          %3539 = vmatprep.subr.bf16.mxu0 0
          %3540 = vmatpush1.bf16.msra.mxu0 0
          %3541 = vmatprep.mubr.bf16.mxu0 0
          %3542 = vmatmul.mubr.bf16.gmra.mrb[0].mxu0 %v3507
          %v3543 = vpop.f32.mrb[0].mxu0
          %v3544 = vadd.f32 0.0, %v3543
          %v3545 = vpop.f32.mrb[0].mxu0
          %v3546 = vadd.f32 0.0, %v3545
          %v3547 = vpop.f32.mrb[0].mxu0
          %v3548 = vadd.f32 0.0, %v3547
          %v3549 = vpop.f32.mrb[0].mxu0
          %v3550 = vadd.f32 0.0, %v3549
          %3551 = vdwg.mxu0
          %3552 = vmatprep.subr.bf16.mxu0 %v3405
          %3553 = vmatpush1.bf16.msra.mxu0 %v3404
          %3554 = vmatprep.subr.bf16.mxu0 %v3421
          %3555 = vmatpush1.bf16.msra.mxu0 %v3420
          %3556 = vmatprep.subr.bf16.mxu0 %v3437
          %3557 = vmatpush1.bf16.msra.mxu0 %v3436
          %3558 = vmatprep.subr.bf16.mxu0 %v3453
          %3559 = vmatpush1.bf16.msra.mxu0 %v3452
          %3560 = vmatprep.subr.bf16.mxu0 0
          %3561 = vmatpush1.bf16.msra.mxu0 0
          %3562 = vmatprep.subr.bf16.mxu0 0
          %3563 = vmatpush1.bf16.msra.mxu0 0
          %3564 = vmatprep.subr.bf16.mxu0 0
          %3565 = vmatpush1.bf16.msra.mxu0 0
          %3566 = vmatprep.subr.bf16.mxu0 0
          %3567 = vmatpush1.bf16.msra.mxu0 0
          %3568 = vmatprep.subr.bf16.mxu0 0
          %3569 = vmatpush1.bf16.msra.mxu0 0
          %3570 = vmatprep.subr.bf16.mxu0 0
          %3571 = vmatpush1.bf16.msra.mxu0 0
          %3572 = vmatprep.subr.bf16.mxu0 0
          %3573 = vmatpush1.bf16.msra.mxu0 0
          %3574 = vmatprep.subr.bf16.mxu0 0
          %3575 = vmatpush1.bf16.msra.mxu0 0
          %3576 = vmatprep.subr.bf16.mxu0 0
          %3577 = vmatpush1.bf16.msra.mxu0 0
          %3578 = vmatprep.subr.bf16.mxu0 0
          %3579 = vmatpush1.bf16.msra.mxu0 0
          %3580 = vmatprep.subr.bf16.mxu0 0
          %3581 = vmatpush1.bf16.msra.mxu0 0
          %3582 = vmatprep.subr.bf16.mxu0 0
          %3583 = vmatpush1.bf16.msra.mxu0 0
          %3584 = vmatprep.mubr.bf16.mxu0 0
          %3585 = vmatmul.mubr.bf16.gmra.mrb[0].mxu0 %v3507
          %v3586 = vpop.f32.mrb[0].mxu0
          %v3587 = vadd.f32 0.0, %v3586
          %v3588 = vpop.f32.mrb[0].mxu0
          %v3589 = vadd.f32 0.0, %v3588
          %v3590 = vpop.f32.mrb[0].mxu0
          %v3591 = vadd.f32 0.0, %v3590
          %v3592 = vpop.f32.mrb[0].mxu0
          %v3593 = vadd.f32 0.0, %v3592
          %3594 = vdwg.mxu0
          %3595 = vmatprep.subr.bf16.mxu0 %v3407
          %3596 = vmatpush1.bf16.msra.mxu0 %v3406
          %3597 = vmatprep.subr.bf16.mxu0 %v3423
          %3598 = vmatpush1.bf16.msra.mxu0 %v3422
          %3599 = vmatprep.subr.bf16.mxu0 %v3439
          %3600 = vmatpush1.bf16.msra.mxu0 %v3438
          %3601 = vmatprep.subr.bf16.mxu0 %v3455
          %3602 = vmatpush1.bf16.msra.mxu0 %v3454
          %3603 = vmatprep.subr.bf16.mxu0 0
          %3604 = vmatpush1.bf16.msra.mxu0 0
          %3605 = vmatprep.subr.bf16.mxu0 0
          %3606 = vmatpush1.bf16.msra.mxu0 0
          %3607 = vmatprep.subr.bf16.mxu0 0
          %3608 = vmatpush1.bf16.msra.mxu0 0
          %3609 = vmatprep.subr.bf16.mxu0 0
          %3610 = vmatpush1.bf16.msra.mxu0 0
          %3611 = vmatprep.subr.bf16.mxu0 0
          %3612 = vmatpush1.bf16.msra.mxu0 0
          %3613 = vmatprep.subr.bf16.mxu0 0
          %3614 = vmatpush1.bf16.msra.mxu0 0
          %3615 = vmatprep.subr.bf16.mxu0 0
          %3616 = vmatpush1.bf16.msra.mxu0 0
          %3617 = vmatprep.subr.bf16.mxu0 0
          %3618 = vmatpush1.bf16.msra.mxu0 0
          %3619 = vmatprep.subr.bf16.mxu0 0
          %3620 = vmatpush1.bf16.msra.mxu0 0
          %3621 = vmatprep.subr.bf16.mxu0 0
          %3622 = vmatpush1.bf16.msra.mxu0 0
          %3623 = vmatprep.subr.bf16.mxu0 0
          %3624 = vmatpush1.bf16.msra.mxu0 0
          %3625 = vmatprep.subr.bf16.mxu0 0
          %3626 = vmatpush1.bf16.msra.mxu0 0
          %3627 = vmatprep.mubr.bf16.mxu0 0
          %3628 = vmatmul.mubr.bf16.gmra.mrb[0].mxu0 %v3507
          %v3629 = vpop.f32.mrb[0].mxu0
          %v3630 = vadd.f32 0.0, %v3629
          %v3631 = vpop.f32.mrb[0].mxu0
          %v3632 = vadd.f32 0.0, %v3631
          %v3633 = vpop.f32.mrb[0].mxu0
          %v3634 = vadd.f32 0.0, %v3633
          %v3635 = vpop.f32.mrb[0].mxu0
          %v3636 = vadd.f32 0.0, %v3635
          %3637 = vdwg.mxu0
          %3638 = vmatprep.subr.bf16.mxu0 %v3409
          %3639 = vmatpush1.bf16.msra.mxu0 %v3408
          %3640 = vmatprep.subr.bf16.mxu0 %v3425
          %3641 = vmatpush1.bf16.msra.mxu0 %v3424
          %3642 = vmatprep.subr.bf16.mxu0 %v3441
          %3643 = vmatpush1.bf16.msra.mxu0 %v3440
          %3644 = vmatprep.subr.bf16.mxu0 %v3457
          %3645 = vmatpush1.bf16.msra.mxu0 %v3456
          %3646 = vmatprep.subr.bf16.mxu0 0
          %3647 = vmatpush1.bf16.msra.mxu0 0
          %3648 = vmatprep.subr.bf16.mxu0 0
          %3649 = vmatpush1.bf16.msra.mxu0 0
          %3650 = vmatprep.subr.bf16.mxu0 0
          %3651 = vmatpush1.bf16.msra.mxu0 0
          %3652 = vmatprep.subr.bf16.mxu0 0
          %3653 = vmatpush1.bf16.msra.mxu0 0
          %3654 = vmatprep.subr.bf16.mxu0 0
          %3655 = vmatpush1.bf16.msra.mxu0 0
          %3656 = vmatprep.subr.bf16.mxu0 0
          %3657 = vmatpush1.bf16.msra.mxu0 0
          %3658 = vmatprep.subr.bf16.mxu0 0
          %3659 = vmatpush1.bf16.msra.mxu0 0
          %3660 = vmatprep.subr.bf16.mxu0 0
          %3661 = vmatpush1.bf16.msra.mxu0 0
          %3662 = vmatprep.subr.bf16.mxu0 0
          %3663 = vmatpush1.bf16.msra.mxu0 0
          %3664 = vmatprep.subr.bf16.mxu0 0
          %3665 = vmatpush1.bf16.msra.mxu0 0
          %3666 = vmatprep.subr.bf16.mxu0 0
          %3667 = vmatpush1.bf16.msra.mxu0 0
          %3668 = vmatprep.subr.bf16.mxu0 0
          %3669 = vmatpush1.bf16.msra.mxu0 0
          %3670 = vmatprep.mubr.bf16.mxu0 0
          %3671 = vmatmul.mubr.bf16.gmra.mrb[0].mxu0 %v3507
          %v3672 = vpop.f32.mrb[0].mxu0
          %v3673 = vadd.f32 0.0, %v3672
          %v3674 = vpop.f32.mrb[0].mxu0
          %v3675 = vadd.f32 0.0, %v3674
          %v3676 = vpop.f32.mrb[0].mxu0
          %v3677 = vadd.f32 0.0, %v3676
          %v3678 = vpop.f32.mrb[0].mxu0
          %v3679 = vadd.f32 0.0, %v3678
          %3680 = vdwg.mxu0
          %3681 = vmatprep.subr.bf16.mxu0 %v3411
          %3682 = vmatpush1.bf16.msra.mxu0 %v3410
          %3683 = vmatprep.subr.bf16.mxu0 %v3427
          %3684 = vmatpush1.bf16.msra.mxu0 %v3426
          %3685 = vmatprep.subr.bf16.mxu0 %v3443
          %3686 = vmatpush1.bf16.msra.mxu0 %v3442
          %3687 = vmatprep.subr.bf16.mxu0 %v3459
          %3688 = vmatpush1.bf16.msra.mxu0 %v3458
          %3689 = vmatprep.subr.bf16.mxu0 0
          %3690 = vmatpush1.bf16.msra.mxu0 0
          %3691 = vmatprep.subr.bf16.mxu0 0
          %3692 = vmatpush1.bf16.msra.mxu0 0
          %3693 = vmatprep.subr.bf16.mxu0 0
          %3694 = vmatpush1.bf16.msra.mxu0 0
          %3695 = vmatprep.subr.bf16.mxu0 0
          %3696 = vmatpush1.bf16.msra.mxu0 0
          %3697 = vmatprep.subr.bf16.mxu0 0
          %3698 = vmatpush1.bf16.msra.mxu0 0
          %3699 = vmatprep.subr.bf16.mxu0 0
          %3700 = vmatpush1.bf16.msra.mxu0 0
          %3701 = vmatprep.subr.bf16.mxu0 0
          %3702 = vmatpush1.bf16.msra.mxu0 0
          %3703 = vmatprep.subr.bf16.mxu0 0
          %3704 = vmatpush1.bf16.msra.mxu0 0
          %3705 = vmatprep.subr.bf16.mxu0 0
          %3706 = vmatpush1.bf16.msra.mxu0 0
          %3707 = vmatprep.subr.bf16.mxu0 0
          %3708 = vmatpush1.bf16.msra.mxu0 0
          %3709 = vmatprep.subr.bf16.mxu0 0
          %3710 = vmatpush1.bf16.msra.mxu0 0
          %3711 = vmatprep.subr.bf16.mxu0 0
          %3712 = vmatpush1.bf16.msra.mxu0 0
          %3713 = vmatprep.mubr.bf16.mxu0 0
          %3714 = vmatmul.mubr.bf16.gmra.mrb[0].mxu0 %v3507
          %v3715 = vpop.f32.mrb[0].mxu0
          %v3716 = vadd.f32 0.0, %v3715
          %v3717 = vpop.f32.mrb[0].mxu0
          %v3718 = vadd.f32 0.0, %v3717
          %v3719 = vpop.f32.mrb[0].mxu0
          %v3720 = vadd.f32 0.0, %v3719
          %v3721 = vpop.f32.mrb[0].mxu0
          %v3722 = vadd.f32 0.0, %v3721
          %3723 = vdwg.mxu0
          %3724 = vmatprep.subr.bf16.mxu0 %v3413
          %3725 = vmatpush1.bf16.msra.mxu0 %v3412
          %3726 = vmatprep.subr.bf16.mxu0 %v3429
          %3727 = vmatpush1.bf16.msra.mxu0 %v3428
          %3728 = vmatprep.subr.bf16.mxu0 %v3445
          %3729 = vmatpush1.bf16.msra.mxu0 %v3444
          %3730 = vmatprep.subr.bf16.mxu0 %v3461
          %3731 = vmatpush1.bf16.msra.mxu0 %v3460
          %3732 = vmatprep.subr.bf16.mxu0 0
          %3733 = vmatpush1.bf16.msra.mxu0 0
          %3734 = vmatprep.subr.bf16.mxu0 0
          %3735 = vmatpush1.bf16.msra.mxu0 0
          %3736 = vmatprep.subr.bf16.mxu0 0
          %3737 = vmatpush1.bf16.msra.mxu0 0
          %3738 = vmatprep.subr.bf16.mxu0 0
          %3739 = vmatpush1.bf16.msra.mxu0 0
          %3740 = vmatprep.subr.bf16.mxu0 0
          %3741 = vmatpush1.bf16.msra.mxu0 0
          %3742 = vmatprep.subr.bf16.mxu0 0
          %3743 = vmatpush1.bf16.msra.mxu0 0
          %3744 = vmatprep.subr.bf16.mxu0 0
          %3745 = vmatpush1.bf16.msra.mxu0 0
          %3746 = vmatprep.subr.bf16.mxu0 0
          %3747 = vmatpush1.bf16.msra.mxu0 0
          %3748 = vmatprep.subr.bf16.mxu0 0
          %3749 = vmatpush1.bf16.msra.mxu0 0
          %3750 = vmatprep.subr.bf16.mxu0 0
          %3751 = vmatpush1.bf16.msra.mxu0 0
          %3752 = vmatprep.subr.bf16.mxu0 0
          %3753 = vmatpush1.bf16.msra.mxu0 0
          %3754 = vmatprep.subr.bf16.mxu0 0
          %3755 = vmatpush1.bf16.msra.mxu0 0
          %3756 = vmatprep.mubr.bf16.mxu0 0
          %3757 = vmatmul.mubr.bf16.gmra.mrb[0].mxu0 %v3507
          %v3758 = vpop.f32.mrb[0].mxu0
          %v3759 = vadd.f32 0.0, %v3758
          %v3760 = vpop.f32.mrb[0].mxu0
          %v3761 = vadd.f32 0.0, %v3760
          %v3762 = vpop.f32.mrb[0].mxu0
          %v3763 = vadd.f32 0.0, %v3762
          %v3764 = vpop.f32.mrb[0].mxu0
          %v3765 = vadd.f32 0.0, %v3764
          %3766 = vdwg.mxu0
          %3767 = vmatprep.subr.bf16.mxu0 %v3415
          %3768 = vmatpush1.bf16.msra.mxu0 %v3414
          %3769 = vmatprep.subr.bf16.mxu0 %v3431
          %3770 = vmatpush1.bf16.msra.mxu0 %v3430
          %3771 = vmatprep.subr.bf16.mxu0 %v3447
          %3772 = vmatpush1.bf16.msra.mxu0 %v3446
          %3773 = vmatprep.subr.bf16.mxu0 %v3463
          %3774 = vmatpush1.bf16.msra.mxu0 %v3462
          %3775 = vmatprep.subr.bf16.mxu0 0
          %3776 = vmatpush1.bf16.msra.mxu0 0
          %3777 = vmatprep.subr.bf16.mxu0 0
          %3778 = vmatpush1.bf16.msra.mxu0 0
          %3779 = vmatprep.subr.bf16.mxu0 0
          %3780 = vmatpush1.bf16.msra.mxu0 0
          %3781 = vmatprep.subr.bf16.mxu0 0
          %3782 = vmatpush1.bf16.msra.mxu0 0
          %3783 = vmatprep.subr.bf16.mxu0 0
          %3784 = vmatpush1.bf16.msra.mxu0 0
          %3785 = vmatprep.subr.bf16.mxu0 0
          %3786 = vmatpush1.bf16.msra.mxu0 0
          %3787 = vmatprep.subr.bf16.mxu0 0
          %3788 = vmatpush1.bf16.msra.mxu0 0
          %3789 = vmatprep.subr.bf16.mxu0 0
          %3790 = vmatpush1.bf16.msra.mxu0 0
          %3791 = vmatprep.subr.bf16.mxu0 0
          %3792 = vmatpush1.bf16.msra.mxu0 0
          %3793 = vmatprep.subr.bf16.mxu0 0
          %3794 = vmatpush1.bf16.msra.mxu0 0
          %3795 = vmatprep.subr.bf16.mxu0 0
          %3796 = vmatpush1.bf16.msra.mxu0 0
          %3797 = vmatprep.subr.bf16.mxu0 0
          %3798 = vmatpush1.bf16.msra.mxu0 0
          %3799 = vmatprep.mubr.bf16.mxu0 0
          %3800 = vmatmul.mubr.bf16.gmra.mrb[0].mxu0 %v3507
          %v3801 = vpop.f32.mrb[0].mxu0
          %v3802 = vadd.f32 0.0, %v3801
          %v3803 = vpop.f32.mrb[0].mxu0
          %v3804 = vadd.f32 0.0, %v3803
          %v3805 = vpop.f32.mrb[0].mxu0
          %v3806 = vadd.f32 0.0, %v3805
          %v3807 = vpop.f32.mrb[0].mxu0
          %v3808 = vadd.f32 0.0, %v3807
          %3809 = vdwg.mxu0
          %3810 = vmatprep.subr.bf16.mxu0 %v3417
          %3811 = vmatpush1.bf16.msra.mxu0 %v3416
          %3812 = vmatprep.subr.bf16.mxu0 %v3433
          %3813 = vmatpush1.bf16.msra.mxu0 %v3432
          %3814 = vmatprep.subr.bf16.mxu0 %v3449
          %3815 = vmatpush1.bf16.msra.mxu0 %v3448
          %3816 = vmatprep.subr.bf16.mxu0 %v3465
          %3817 = vmatpush1.bf16.msra.mxu0 %v3464
          %3818 = vmatprep.subr.bf16.mxu0 0
          %3819 = vmatpush1.bf16.msra.mxu0 0
          %3820 = vmatprep.subr.bf16.mxu0 0
          %3821 = vmatpush1.bf16.msra.mxu0 0
          %3822 = vmatprep.subr.bf16.mxu0 0
          %3823 = vmatpush1.bf16.msra.mxu0 0
          %3824 = vmatprep.subr.bf16.mxu0 0
          %3825 = vmatpush1.bf16.msra.mxu0 0
          %3826 = vmatprep.subr.bf16.mxu0 0
          %3827 = vmatpush1.bf16.msra.mxu0 0
          %3828 = vmatprep.subr.bf16.mxu0 0
          %3829 = vmatpush1.bf16.msra.mxu0 0
          %3830 = vmatprep.subr.bf16.mxu0 0
          %3831 = vmatpush1.bf16.msra.mxu0 0
          %3832 = vmatprep.subr.bf16.mxu0 0
          %3833 = vmatpush1.bf16.msra.mxu0 0
          %3834 = vmatprep.subr.bf16.mxu0 0
          %3835 = vmatpush1.bf16.msra.mxu0 0
          %3836 = vmatprep.subr.bf16.mxu0 0
          %3837 = vmatpush1.bf16.msra.mxu0 0
          %3838 = vmatprep.subr.bf16.mxu0 0
          %3839 = vmatpush1.bf16.msra.mxu0 0
          %3840 = vmatprep.subr.bf16.mxu0 0
          %3841 = vmatpush1.bf16.msra.mxu0 0
          %3842 = vmatprep.mubr.bf16.mxu0 0
          %3843 = vmatmul.mubr.bf16.gmra.mrb[0].mxu0 %v3507
          %v3844 = vpop.f32.mrb[0].mxu0
          %v3845 = vadd.f32 0.0, %v3844
          %v3846 = vpop.f32.mrb[0].mxu0
          %v3847 = vadd.f32 0.0, %v3846
          %v3848 = vpop.f32.mrb[0].mxu0
          %v3849 = vadd.f32 0.0, %v3848
          %v3850 = vpop.f32.mrb[0].mxu0
          %v3851 = vadd.f32 0.0, %v3850
          %3852 = vdwg.mxu0
          %v3853 = vadd.f32 %v3466, %v3544
          %v3854 = vadd.f32 %v3467, %v3546
          %v3855 = vadd.f32 %v3468, %v3587
          %v3856 = vadd.f32 %v3469, %v3589
          %v3857 = vadd.f32 %v3470, %v3630
          %v3858 = vadd.f32 %v3471, %v3632
          %v3859 = vadd.f32 %v3472, %v3673
          %v3860 = vadd.f32 %v3473, %v3675
          %v3861 = vadd.f32 %v3474, %v3716
          %v3862 = vadd.f32 %v3475, %v3718
          %v3863 = vadd.f32 %v3476, %v3759
          %v3864 = vadd.f32 %v3477, %v3761
          %v3865 = vadd.f32 %v3478, %v3802
          %v3866 = vadd.f32 %v3479, %v3804
          %v3867 = vadd.f32 %v3480, %v3845
          %v3868 = vadd.f32 %v3481, %v3847
          %v3869 = vadd.f32 %v3482, %v3548
          %v3870 = vadd.f32 %v3483, %v3550
          %v3871 = vadd.f32 %v3484, %v3591
          %v3872 = vadd.f32 %v3485, %v3593
          %v3873 = vadd.f32 %v3486, %v3634
          %v3874 = vadd.f32 %v3487, %v3636
          %v3875 = vadd.f32 %v3488, %v3677
          %v3876 = vadd.f32 %v3489, %v3679
          %v3877 = vadd.f32 %v3490, %v3720
          %v3878 = vadd.f32 %v3491, %v3722
          %v3879 = vadd.f32 %v3492, %v3763
          %v3880 = vadd.f32 %v3493, %v3765
          %v3881 = vadd.f32 %v3494, %v3806
          %v3882 = vadd.f32 %v3495, %v3808
          %v3883 = vadd.f32 %v3496, %v3849
          %v3884 = vadd.f32 %v3497, %v3851
          %3885 = vst [vmem:[%s324] sm:$0xff] %v3853
          %3886 = vst [vmem:[%s324 + $0x8] sm:$0xff] %v3854
          %3887 = vst [vmem:[%s324 + $0x10] sm:$0xff] %v3855
          %3888 = vst [vmem:[%s324 + $0x18] sm:$0xff] %v3856
          %3889 = vst [vmem:[%s324 + $0x20] sm:$0xff] %v3857
          %3890 = vst [vmem:[%s324 + $0x28] sm:$0xff] %v3858
          %3891 = vst [vmem:[%s324 + $0x30] sm:$0xff] %v3859
          %3892 = vst [vmem:[%s324 + $0x38] sm:$0xff] %v3860
          %3893 = vst [vmem:[%s324 + $0x40] sm:$0xff] %v3861
          %3894 = vst [vmem:[%s324 + $0x48] sm:$0xff] %v3862
          %3895 = vst [vmem:[%s324 + $0x50] sm:$0xff] %v3863
          %3896 = vst [vmem:[%s324 + $0x58] sm:$0xff] %v3864
          %3897 = vst [vmem:[%s324 + $0x60] sm:$0xff] %v3865
          %3898 = vst [vmem:[%s324 + $0x68] sm:$0xff] %v3866
          %3899 = vst [vmem:[%s324 + $0x70] sm:$0xff] %v3867
          %3900 = vst [vmem:[%s324 + $0x78] sm:$0xff] %v3868
          %3901 = vst [vmem:[%s324 + $0x80] sm:$0x1] %v3869
          %3902 = vst [vmem:[%s324 + $0x88] sm:$0x1] %v3870
          %3903 = vst [vmem:[%s324 + $0x90] sm:$0x1] %v3871
          %3904 = vst [vmem:[%s324 + $0x98] sm:$0x1] %v3872
          %3905 = vst [vmem:[%s324 + $0xa0] sm:$0x1] %v3873
          %3906 = vst [vmem:[%s324 + $0xa8] sm:$0x1] %v3874
          %3907 = vst [vmem:[%s324 + $0xb0] sm:$0x1] %v3875
          %3908 = vst [vmem:[%s324 + $0xb8] sm:$0x1] %v3876
          %3909 = vst [vmem:[%s324 + $0xc0] sm:$0x1] %v3877
          %3910 = vst [vmem:[%s324 + $0xc8] sm:$0x1] %v3878
          %3911 = vst [vmem:[%s324 + $0xd0] sm:$0x1] %v3879
          %3912 = vst [vmem:[%s324 + $0xd8] sm:$0x1] %v3880
          %3913 = vst [vmem:[%s324 + $0xe0] sm:$0x1] %v3881
          %3914 = vst [vmem:[%s324 + $0xe8] sm:$0x1] %v3882
          %3915 = vst [vmem:[%s324 + $0xf0] sm:$0x1] %v3883
          %3916 = vst [vmem:[%s324 + $0xf8] sm:$0x1] %v3884
        $region44: #{tpu_custom_call.1} parent=31 // pred_fallthru
          _
        // Predicated region
        $region45: #{tpu_custom_call.1} parent=31 // pred_check
          %p3917 = pneg %p327
        $region46: #{tpu_custom_call.1} parent=31 // pred_check_branch
          %3919 = sbr.rel (%p3917) target = $region48
        $region47: #{tpu_custom_call.1} parent=31 // pred_region
          %s3920 = scalar_lea.vmem %s324, 128
          %v3921 = vld [vmem:[%s3920] ss:$8 sm:$0xf]
          %v3922 = vld [vmem:[%s3920] ss:$8 sm:$0xf0]
          %v3923 = vor.u32 %v3921, %v3922
          %s3924 = scalar_lea.vmem %s324, 192
          %v3925 = vld [vmem:[%s3924] ss:$8 sm:$0xf]
          %v3926 = vld [vmem:[%s3924] ss:$8 sm:$0xf0]
          %v3927 = vor.u32 %v3925, %v3926
          %v3928 = vmax.f32 %v3923, 1e-06
          %v3929 = vmax.f32 %v3927, 1e-06
          %v3930 = vrcp.pop %v3928
          %v3931 = vrcp.pop %v3929
          %v3932 = vmul.f32 %v3928, %v3930
          %v3933 = vmul.f32 %v3929, %v3931
          %v3934 = vsub.f32 2.0, %v3932
          %v3935 = vsub.f32 2.0, %v3933
          %v3936 = vmul.f32 %v3930, %v3934
          %v3937 = vmul.f32 %v3931, %v3935
          %v3938 = vld [vmem:[%s324] sm:$0xff]
          %v3939 = vld [vmem:[%s324 + $0x8] sm:$0xff]
          %v3940 = vld [vmem:[%s324 + $0x10] sm:$0xff]
          %v3941 = vld [vmem:[%s324 + $0x18] sm:$0xff]
          %v3942 = vld [vmem:[%s324 + $0x20] sm:$0xff]
          %v3943 = vld [vmem:[%s324 + $0x28] sm:$0xff]
          %v3944 = vld [vmem:[%s324 + $0x30] sm:$0xff]
          %v3945 = vld [vmem:[%s324 + $0x38] sm:$0xff]
          %v3946 = vld [vmem:[%s324 + $0x40] sm:$0xff]
          %v3947 = vld [vmem:[%s324 + $0x48] sm:$0xff]
          %v3948 = vld [vmem:[%s324 + $0x50] sm:$0xff]
          %v3949 = vld [vmem:[%s324 + $0x58] sm:$0xff]
          %v3950 = vld [vmem:[%s324 + $0x60] sm:$0xff]
          %v3951 = vld [vmem:[%s324 + $0x68] sm:$0xff]
          %v3952 = vld [vmem:[%s324 + $0x70] sm:$0xff]
          %v3953 = vld [vmem:[%s324 + $0x78] sm:$0xff]
          %v3956 = vlaneseq
          %v3957 = vshrl.u32 %v3956, 7
          %v3958 = vsub.s32 0, %v3957
          %v3959 = vrot.slane %v3936, %v3958
          %v3960 = vlaneseq
          %v3961 = vshrl.u32 %v3960, 7
          %v3962 = vsub.s32 1, %v3961
          %v3963 = vrot.slane %v3936, %v3962
          %v3964 = vlaneseq
          %v3965 = vshrl.u32 %v3964, 7
          %v3966 = vsub.s32 2, %v3965
          %v3967 = vrot.slane %v3936, %v3966
          %v3968 = vlaneseq
          %v3969 = vshrl.u32 %v3968, 7
          %v3970 = vsub.s32 3, %v3969
          %v3971 = vrot.slane %v3936, %v3970
          %v3972 = vlaneseq
          %v3973 = vshrl.u32 %v3972, 7
          %v3974 = vsub.s32 4, %v3973
          %v3975 = vrot.slane %v3936, %v3974
          %v3976 = vlaneseq
          %v3977 = vshrl.u32 %v3976, 7
          %v3978 = vsub.s32 5, %v3977
          %v3979 = vrot.slane %v3936, %v3978
          %v3980 = vlaneseq
          %v3981 = vshrl.u32 %v3980, 7
          %v3982 = vsub.s32 6, %v3981
          %v3983 = vrot.slane %v3936, %v3982
          %v3984 = vlaneseq
          %v3985 = vshrl.u32 %v3984, 7
          %v3986 = vsub.s32 7, %v3985
          %v3987 = vrot.slane %v3936, %v3986
          %v3988 = vlaneseq
          %v3989 = vshrl.u32 %v3988, 7
          %v3990 = vsub.s32 0, %v3989
          %v3991 = vrot.slane %v3937, %v3990
          %v3992 = vlaneseq
          %v3993 = vshrl.u32 %v3992, 7
          %v3994 = vsub.s32 1, %v3993
          %v3995 = vrot.slane %v3937, %v3994
          %v3996 = vlaneseq
          %v3997 = vshrl.u32 %v3996, 7
          %v3998 = vsub.s32 2, %v3997
          %v3999 = vrot.slane %v3937, %v3998
          %v4000 = vlaneseq
          %v4001 = vshrl.u32 %v4000, 7
          %v4002 = vsub.s32 3, %v4001
          %v4003 = vrot.slane %v3937, %v4002
          %v4004 = vlaneseq
          %v4005 = vshrl.u32 %v4004, 7
          %v4006 = vsub.s32 4, %v4005
          %v4007 = vrot.slane %v3937, %v4006
          %v4008 = vlaneseq
          %v4009 = vshrl.u32 %v4008, 7
          %v4010 = vsub.s32 5, %v4009
          %v4011 = vrot.slane %v3937, %v4010
          %v4012 = vlaneseq
          %v4013 = vshrl.u32 %v4012, 7
          %v4014 = vsub.s32 6, %v4013
          %v4015 = vrot.slane %v3937, %v4014
          %v4016 = vlaneseq
          %v4017 = vshrl.u32 %v4016, 7
          %v4018 = vsub.s32 7, %v4017
          %v4019 = vrot.slane %v3937, %v4018
          %v4036 = vmul.f32 %v3938, %v3959
          %v4037 = vmul.f32 %v3939, %v3963
          %v4038 = vmul.f32 %v3940, %v3967
          %v4039 = vmul.f32 %v3941, %v3971
          %v4040 = vmul.f32 %v3942, %v3975
          %v4041 = vmul.f32 %v3943, %v3979
          %v4042 = vmul.f32 %v3944, %v3983
          %v4043 = vmul.f32 %v3945, %v3987
          %v4044 = vmul.f32 %v3946, %v3991
          %v4045 = vmul.f32 %v3947, %v3995
          %v4046 = vmul.f32 %v3948, %v3999
          %v4047 = vmul.f32 %v3949, %v4003
          %v4048 = vmul.f32 %v3950, %v4007
          %v4049 = vmul.f32 %v3951, %v4011
          %v4050 = vmul.f32 %v3952, %v4015
          %v4051 = vmul.f32 %v3953, %v4019
          %4052 = vst [vmem:[%s324] sm:$0xff] %v4036
          %4053 = vst [vmem:[%s324 + $0x8] sm:$0xff] %v4037
          %4054 = vst [vmem:[%s324 + $0x10] sm:$0xff] %v4038
          %4055 = vst [vmem:[%s324 + $0x18] sm:$0xff] %v4039
          %4056 = vst [vmem:[%s324 + $0x20] sm:$0xff] %v4040
          %4057 = vst [vmem:[%s324 + $0x28] sm:$0xff] %v4041
          %4058 = vst [vmem:[%s324 + $0x30] sm:$0xff] %v4042
          %4059 = vst [vmem:[%s324 + $0x38] sm:$0xff] %v4043
          %4060 = vst [vmem:[%s324 + $0x40] sm:$0xff] %v4044
          %4061 = vst [vmem:[%s324 + $0x48] sm:$0xff] %v4045
          %4062 = vst [vmem:[%s324 + $0x50] sm:$0xff] %v4046
          %4063 = vst [vmem:[%s324 + $0x58] sm:$0xff] %v4047
          %4064 = vst [vmem:[%s324 + $0x60] sm:$0xff] %v4048
          %4065 = vst [vmem:[%s324 + $0x68] sm:$0xff] %v4049
          %4066 = vst [vmem:[%s324 + $0x70] sm:$0xff] %v4050
          %4067 = vst [vmem:[%s324 + $0x78] sm:$0xff] %v4051
        $region48: #{tpu_custom_call.1} parent=31 // pred_fallthru
          _
        %s4068 = smul.u32 16, %s33
        %p4069 = scmp.lt.s32.totalorder %s32, 1
        %s4070 = scalar_select %p4069, %s32, 1
        %p4071 = scmp.lt.s32.totalorder %s4068, 15
        %s4072 = scalar_select %p4071, %s4068, 15
        %s4073 = smul.addr %s4070, 32
        %s4074 = sadd.s32 %s4072, %s4073
        %s4075 = smul.addr %s4074, 8
        %s4076 = scalar_lea.vmem %s5, %s4075
        // Predicated region
        $region49: #{tpu_custom_call.1} parent=31 // pred_check
          %p4077 = pneg %p160
        $region50: #{tpu_custom_call.1} parent=31 // pred_check_branch
          %4079 = sbr.rel (%p4077) target = $region52
        $region51: #{tpu_custom_call.1} parent=31 // pred_region
          %s4080 = smul.u32 16, %s33
        $region52: #{tpu_custom_call.1} parent=31 // pred_fallthru
          _
      $region32: #{tpu_custom_call.1} parent=5 // pred_fallthru
        _
      %p4081 = scmp.le.s32.totalorder 2, %s22
      // Predicated region
      $region53: #{tpu_custom_call.1} parent=5 // pred_check
        %p4082 = pneg %p4081
      $region54: #{tpu_custom_call.1} parent=5 // pred_check_branch
        %4084 = sbr.rel (%p4082) target = $region56
      $region55: #{tpu_custom_call.1} parent=5 // pred_region
        %s4085 = ssub.s32 %s22, 2
        // Predicated region
        $region57: #{tpu_custom_call.1} parent=55 // pred_check
          %p4086 = pneg %p166
        $region58: #{tpu_custom_call.1} parent=55 // pred_check_branch
          %4088 = sbr.rel (%p4086) target = $region60
        $region59: #{tpu_custom_call.1} parent=55 // pred_region
          %s4089 = smul.u32 16, %s36
          %p4090 = scmp.lt.s32.totalorder %s35, 1
          %s4091 = scalar_select %p4090, %s35, 1
          %p4092 = scmp.lt.s32.totalorder %s4089, 15
          %s4093 = scalar_select %p4092, %s4089, 15
          %s4094 = smul.addr %s4091, 32
          %s4095 = sadd.s32 %s4093, %s4094
          %s4096 = smul.addr %s4095, 8
          %s4097 = scalar_lea.vmem %s5, %s4096
        $region60: #{tpu_custom_call.1} parent=55 // pred_fallthru
          _
      $region56: #{tpu_custom_call.1} parent=5 // pred_fallthru
        _
    $region6: #{tpu_custom_call.1} parent=1 // loop_footer
      %s26 = sadd.s32 1, %s22
    $region7: #{tpu_custom_call.1} parent=1 // loop_footer_branch
      %21 = sbr.rel target = $region3
    $region8: #{tpu_custom_call.1} parent=1 // loop_exit
      _
    %4098 = vsyncpa [#allocation6], 1
    %s4099 = scalar_lea.sflag [#allocation6], 1
    %4100 = vsyncpa %s4099, 1

</llo_original>
